<compile_context>
chip_gen: v7x
topology: tpu7x:2x2x1
jax: 0.10.0
libtpu: 0.0.40
codegen_flags: <defaults>
</compile_context>

<pallas_src>
import jax
import jax.numpy as jnp
from jax.experimental import pallas as pl
from jax.experimental.pallas import tpu as pltpu

NEG_INF = -1e30
_HAS_RECIP = hasattr(pl, "reciprocal")


def _vmem_cap_bytes():
    try:
        return int(pltpu.get_tpu_info().vmem_capacity_bytes)
    except Exception:
        return 128 << 20


_VMEM_CAP = _vmem_cap_bytes()
_VMEM_LIMIT = max(32 << 20, min(_VMEM_CAP - (16 << 20), 100 << 20))
# Bigger row tiles on chips with 128 MiB VMEM (v5e/v6e); conservative 256 on v7x.
_TM_DEFAULT = 512 if _VMEM_CAP >= (100 << 20) else 256


def _cparams(dims):
    return pltpu.CompilerParams(dimension_semantics=dims,
                                vmem_limit_bytes=_VMEM_LIMIT)


def _recip(x):
    if _HAS_RECIP:
        return pl.reciprocal(x, approx=True)
    return 1.0 / x


# ---------------------------------------------------------------------------
# Pallas kernels
# ---------------------------------------------------------------------------

def _linear_bias_kernel(x_ref, w_ref, b_ref, o_ref):
    # o = x @ w + b   (bf16 operands, f32 accumulation, bias in f32)
    acc = jnp.dot(x_ref[...], w_ref[...], preferred_element_type=jnp.float32)
    o_ref[...] = (acc + b_ref[...]).astype(o_ref.dtype)


def _matmul_res_ln_kernel(a_ref, w_ref, b_ref, res_ref, g_ref, bet_ref,
                          o_ref, acc_ref):
    # o = LayerNorm(a @ w + b + res); K reduction tiled over grid axis 1.
    kk = pl.program_id(1)

    @pl.when(kk == 0)
    def _():
        acc_ref[...] = jnp.zeros_like(acc_ref)

    acc_ref[...] += jnp.dot(a_ref[...], w_ref[...],
                            preferred_element_type=jnp.float32)

    @pl.when(kk == pl.num_programs(1) - 1)
    def _():
        y = acc_ref[...] + b_ref[...] + res_ref[...].astype(jnp.float32)
        mu = jnp.mean(y, axis=-1, keepdims=True)
        var = jnp.mean(jnp.square(y - mu), axis=-1, keepdims=True)
        o_ref[...] = ((y - mu) * jax.lax.rsqrt(var + 1e-5)
                      * g_ref[...] + bet_ref[...]).astype(o_ref.dtype)


def _ffn_res_ln_kernel(x_ref, w1_ref, b1_ref, w2_ref, b2_ref,
                       g_ref, bet_ref, o_ref, acc_ref):
    # Fused FFN + residual + LN, reduction over the dff axis (grid axis 1).
    kk = pl.program_id(1)

    @pl.when(kk == 0)
    def _():
        acc_ref[...] = jnp.zeros_like(acc_ref)

    h = jnp.dot(x_ref[...], w1_ref[...],
                preferred_element_type=jnp.float32) + b1_ref[...]
    h = jnp.maximum(h, 0.0).astype(w2_ref.dtype)
    acc_ref[...] += jnp.dot(h, w2_ref[...], preferred_element_type=jnp.float32)

    @pl.when(kk == pl.num_programs(1) - 1)
    def _():
        y = acc_ref[...] + b2_ref[...] + x_ref[...].astype(jnp.float32)
        mu = jnp.mean(y, axis=-1, keepdims=True)
        var = jnp.mean(jnp.square(y - mu), axis=-1, keepdims=True)
        o_ref[...] = ((y - mu) * jax.lax.rsqrt(var + 1e-5)
                      * g_ref[...] + bet_ref[...]).astype(o_ref.dtype)


def _ln_kernel(x_ref, g_ref, b_ref, o_ref):
    y = x_ref[...].astype(jnp.float32)
    mu = jnp.mean(y, axis=-1, keepdims=True)
    var = jnp.mean(jnp.square(y - mu), axis=-1, keepdims=True)
    o_ref[...] = ((y - mu) * jax.lax.rsqrt(var + 1e-5)
                  * g_ref[...] + b_ref[...]).astype(o_ref.dtype)


def _attn_kernel(q_ref, k_ref, v_ref, mask_ref, kpm_ref, o_ref):
    # One (batch, head, q-tile) step.  q:(tq,Dh), k/v:(Sk,Dh).
    # Softmax scale is already folded into the Q projection weights.
    q = q_ref[0, 0]
    k = k_ref[0, 0]
    v = v_ref[0, 0]
    # scores: contract LAST dim of both operands (no materialized K transpose).
    s = jax.lax.dot_general(q, k, (((1,), (1,)), ((), ())),
                            preferred_element_type=jnp.float32)      # (tq, Sk)
    s = s + mask_ref[...] + kpm_ref[0]
    s = s - jnp.max(s, axis=-1, keepdims=True)
    p = jnp.exp(s)
    p = p * _recip(jnp.sum(p, axis=-1, keepdims=True))
    o_ref[0, 0] = jnp.dot(p.astype(v.dtype), v,
                          preferred_element_type=jnp.float32).astype(o_ref.dtype)
    # TODO(synk): for very long Sk, tile keys with an online-softmax accumulator
    # (flash-style) instead of full (tq, Sk) scores per step.


# ---------------------------------------------------------------------------
# Pallas wrappers
# ---------------------------------------------------------------------------

def matmul_bias(x2d, w_t, b_row, out_dtype=jnp.bfloat16, *, tm=None, tn=None):
    """x2d:(N,K) bf16, w_t:(K,M) bf16 (pre-transposed), b_row:(1,M) f32 -> (N,M)."""
    N, K = x2d.shape
    M = w_t.shape[1]
    tm = min(N, _TM_DEFAULT) if tm is None else tm
    tn = min(M, 512) if tn is None else tn
    # TODO(synk): for very large K (E >> 8192) also tile the K reduction.
    return pl.pallas_call(
        _linear_bias_kernel,
        grid=(pl.cdiv(N, tm), pl.cdiv(M, tn)),
        out_shape=jax.ShapeDtypeStruct((N, M), out_dtype),
        in_specs=[
            pl.BlockSpec((tm, K), lambda i, j: (i, 0)),
            pl.BlockSpec((K, tn), lambda i, j: (0, j)),
            pl.BlockSpec((1, tn), lambda i, j: (0, j)),
        ],
        out_specs=pl.BlockSpec((tm, tn), lambda i, j: (i, j)),
        compiler_params=_cparams(("parallel", "parallel")),
    )(x2d, w_t, b_row)


def matmul_res_ln(a2d, w_t, b_row, res2d, gamma, beta, *, tm=None, tk=None):
    """LayerNorm(a2d @ w_t + b + res2d); fused out-proj + residual + LN.
    K reduction tiled so the (K,E) weight is never fully VMEM-resident."""
    N, K = a2d.shape
    E = w_t.shape[1]
    tm = min(N, _TM_DEFAULT) if tm is None else tm
    tk = min(K, 512) if tk is None else tk
    return pl.pallas_call(
        _matmul_res_ln_kernel,
        grid=(pl.cdiv(N, tm), pl.cdiv(K, tk)),
        out_shape=jax.ShapeDtypeStruct((N, E), res2d.dtype),
        in_specs=[
            pl.BlockSpec((tm, tk), lambda i, k: (i, k)),
            pl.BlockSpec((tk, E), lambda i, k: (k, 0)),
            pl.BlockSpec((1, E), lambda i, k: (0, 0)),
            pl.BlockSpec((tm, E), lambda i, k: (i, 0)),
            pl.BlockSpec((1, E), lambda i, k: (0, 0)),
            pl.BlockSpec((1, E), lambda i, k: (0, 0)),
        ],
        out_specs=pl.BlockSpec((tm, E), lambda i, k: (i, 0)),
        scratch_shapes=[pltpu.VMEM((tm, E), jnp.float32)],
        compiler_params=_cparams(("parallel", "arbitrary")),
    )(a2d, w_t, b_row, res2d, gamma, beta)


def ffn_res_ln(x2d, w1_t, b1, w2_t, b2, gamma, beta, *, tm=None, tk=None):
    """LayerNorm(relu(x @ w1 + b1) @ w2 + b2 + x); dff reduction tiled."""
    N, E = x2d.shape
    dff = w1_t.shape[1]
    tm = min(N, _TM_DEFAULT) if tm is None else tm
    tk = min(dff, 512) if tk is None else tk
    # TODO(synk): on v5e, sweep pipeline_mode=pl.Buffered(3) on the w1/w2 specs
    # if the streamed weight DMAs show up exposed in the profile.
    return pl.pallas_call(
        _ffn_res_ln_kernel,
        grid=(pl.cdiv(N, tm), pl.cdiv(dff, tk)),
        out_shape=jax.ShapeDtypeStruct((N, E), x2d.dtype),
        in_specs=[
            pl.BlockSpec((tm, E), lambda i, k: (i, 0)),
            pl.BlockSpec((E, tk), lambda i, k: (0, k)),
            pl.BlockSpec((1, tk), lambda i, k: (0, k)),
            pl.BlockSpec((tk, E), lambda i, k: (k, 0)),
            pl.BlockSpec((1, E), lambda i, k: (0, 0)),
            pl.BlockSpec((1, E), lambda i, k: (0, 0)),
            pl.BlockSpec((1, E), lambda i, k: (0, 0)),
        ],
        out_specs=pl.BlockSpec((tm, E), lambda i, k: (i, 0)),
        scratch_shapes=[pltpu.VMEM((tm, E), jnp.float32)],
        compiler_params=_cparams(("parallel", "arbitrary")),
    )(x2d, w1_t, b1, w2_t, b2, gamma, beta)


def layer_norm(x2d, gamma, beta, out_dtype, *, tm=None):
    N, E = x2d.shape
    tm = min(N, _TM_DEFAULT) if tm is None else tm
    return pl.pallas_call(
        _ln_kernel,
        grid=(pl.cdiv(N, tm),),
        out_shape=jax.ShapeDtypeStruct((N, E), out_dtype),
        in_specs=[
            pl.BlockSpec((tm, E), lambda i: (i, 0)),
            pl.BlockSpec((1, E), lambda i: (0, 0)),
            pl.BlockSpec((1, E), lambda i: (0, 0)),
        ],
        out_specs=pl.BlockSpec((tm, E), lambda i: (i, 0)),
        compiler_params=_cparams(("parallel",)),
    )(x2d, gamma, beta)


def _pick_q_tile(sq):
    if sq <= 512:
        return sq
    for t in (512, 256, 128, 64, 32, 16, 8):
        if sq % t == 0:
            return t
    return sq


def multihead_attention(qh, kvh, mask, kpm, *, H, kv_offset_k, kv_offset_v):
    """qh:(B, >=H, Sq, Dh); kvh:(B, C*H, Sk, Dh) bf16 (Q heads at index 0..H-1 of qh,
    K heads at kv_offset_k.., V heads at kv_offset_v.. of kvh);
    mask:(Sq,Sk) additive f32; kpm:(B,1,Sk) additive f32 -> (B,H,Sq,Dh) bf16."""
    B = qh.shape[0]
    Sq, Dh = qh.shape[2], qh.shape[3]
    Sk = kvh.shape[2]
    tq = _pick_q_tile(Sq)
    # TODO(synk): for purely-causal masks, generate the additive mask in-kernel
    # with broadcasted_iota instead of streaming an (Sq,Sk) f32 array.
    return pl.pallas_call(
        _attn_kernel,
        grid=(B, H, pl.cdiv(Sq, tq)),
        out_shape=jax.ShapeDtypeStruct((B, H, Sq, Dh), jnp.bfloat16),
        in_specs=[
            pl.BlockSpec((1, 1, tq, Dh), lambda b, h, i: (b, h, i, 0)),
            pl.BlockSpec((1, 1, Sk, Dh),
                         lambda b, h, i: (b, kv_offset_k + h, 0, 0)),
            pl.BlockSpec((1, 1, Sk, Dh),
                         lambda b, h, i: (b, kv_offset_v + h, 0, 0)),
            pl.BlockSpec((tq, Sk), lambda b, h, i: (i, 0)),   # broadcast 2-D mask
            pl.BlockSpec((1, 1, Sk), lambda b, h, i: (b, 0, 0)),
        ],
        out_specs=pl.BlockSpec((1, 1, tq, Dh), lambda b, h, i: (b, h, i, 0)),
        compiler_params=_cparams(("parallel", "parallel", "parallel")),
    )(qh, kvh, kvh, mask, kpm)


# ---------------------------------------------------------------------------
# Layout helpers (head-major <-> row-major), done once per attention call in XLA
# ---------------------------------------------------------------------------

def _rows_to_heads(x2d, B, S, nH, Dh):
    # (B*S, nH*Dh) -> (B, nH, S, Dh)   (columns are head-major, PyTorch layout)
    return x2d.reshape(B, S, nH, Dh).transpose(0, 2, 1, 3)


def _heads_to_rows(x4d, B, S, E):
    # (B, H, S, Dh) -> (B*S, E)
    return x4d.transpose(0, 2, 1, 3).reshape(B * S, E)


# ---------------------------------------------------------------------------
# Mask handling (bool masks -> additive -inf)
# ---------------------------------------------------------------------------

def _additive_mask_2d(mask, Sq, Sk):
    if mask is None:
        return jnp.zeros((Sq, Sk), jnp.float32)
    mask = jnp.asarray(mask)
    if mask.dtype == jnp.bool_:
        return jnp.where(mask, NEG_INF, 0.0).astype(jnp.float32)
    return mask.astype(jnp.float32)


def _additive_kpm(kpm, B, Sk):
    if kpm is None:
        return jnp.zeros((B, 1, Sk), jnp.float32)
    kpm = jnp.asarray(kpm)
    if kpm.dtype == jnp.bool_:
        kpm = jnp.where(kpm, NEG_INF, 0.0)
    return kpm.astype(jnp.float32).reshape(B, 1, Sk)


# ---------------------------------------------------------------------------
# Decoder layer / stack (matches TransformerDecoderShorter.forward)
# ---------------------------------------------------------------------------

def decoder_layer_forward(x2d, mem2d, B, Sq, Sk, E, nhead, p,
                          tgt_mask_add, mem_mask_add, tgt_kpm_add, mem_kpm_add):
    Dh = E // nhead

    # --- self-attention: fused QKV proj -> per-head attention -> out+res+LN1 ---
    qkv = matmul_bias(x2d, p["sa_wqkv_t"], p["sa_bqkv"])            # (B*Sq, 3E)
    qkvh = _rows_to_heads(qkv, B, Sq, 3 * nhead, Dh)                # (B, 3H, Sq, Dh)
    sa = multihead_attention(qkvh, qkvh, tgt_mask_add, tgt_kpm_add,
                             H=nhead, kv_offset_k=nhead, kv_offset_v=2 * nhead)
    sa2d = _heads_to_rows(sa, B, Sq, E)
    x2d = matmul_res_ln(sa2d, p["sa_wo_t"], p["sa_bo"], x2d, p["ln1_g"], p["ln1_b"])

    # --- cross-attention: Q proj + fused KV proj -> attention -> out+res+LN2 ---
    q = matmul_bias(x2d, p["ca_wq_t"], p["ca_bq"])                  # (B*Sq, E)
    kv = matmul_bias(mem2d, p["ca_wkv_t"], p["ca_bkv"])             # (B*Sk, 2E)
    qh = _rows_to_heads(q, B, Sq, nhead, Dh)
    kvh = _rows_to_heads(kv, B, Sk, 2 * nhead, Dh)
    ca = multihead_attention(qh, kvh, mem_mask_add, mem_kpm_add,
                             H=nhead, kv_offset_k=0, kv_offset_v=nhead)
    ca2d = _heads_to_rows(ca, B, Sq, E)
    x2d = matmul_res_ln(ca2d, p["ca_wo_t"], p["ca_bo"], x2d, p["ln2_g"], p["ln2_b"])

    # --- FFN fused with residual + LN3 ---
    x2d = ffn_res_ln(x2d, p["w1_t"], p["b1"], p["w2_t"], p["b2"],
                     p["ln3_g"], p["ln3_b"])
    return x2d


def transformer_decoder_shorter_forward(tgt, memory, layer_params, norm_params, nhead,
                                        tgt_mask=None, memory_mask=None,
                                        tgt_key_padding_mask=None,
                                        memory_key_padding_mask=None):
    Sq, B, E = tgt.shape
    Sk = memory.shape[0]

    # batch-major (B*S, E) layout for the whole stack: one transpose in / out
    x = jnp.transpose(tgt, (1, 0, 2)).reshape(B * Sq, E).astype(jnp.bfloat16)
    mem = jnp.transpose(memory, (1, 0, 2)).reshape(B * Sk, E).astype(jnp.bfloat16)

    tmask = _additive_mask_2d(tgt_mask, Sq, Sq)
    mmask = _additive_mask_2d(memory_mask, Sq, Sk)
    tkpm = _additive_kpm(tgt_key_padding_mask, B, Sq)
    mkpm = _additive_kpm(memory_key_padding_mask, B, Sk)

    for p in layer_params:
        x = decoder_layer_forward(x, mem, B, Sq, Sk, E, nhead, p,
                                  tmask, mmask, tkpm, mkpm)

    # TODO(synk): fold the final stack LayerNorm into the last layer's ffn_res_ln
    # epilogue to save one HBM round trip.
    if norm_params is not None:
        x = layer_norm(x, norm_params["g"], norm_params["b"], jnp.float32)
    else:
        x = x.astype(jnp.float32)

    return x.reshape(B, Sq, E).transpose(1, 0, 2)


# ---------------------------------------------------------------------------
# Parameter init (PyTorch nn.TransformerDecoderLayer layout) and one-time prep
# ---------------------------------------------------------------------------

def _xavier_uniform(key, shape):
    fan_out, fan_in = shape
    limit = (6.0 / (fan_in + fan_out)) ** 0.5
    return jax.random.uniform(key, shape, jnp.float32, -limit, limit)


def init_params(key, num_layers, E, dff):
    layers = []
    for l in range(num_layers):
        ks = jax.random.split(jax.random.fold_in(key, l), 6)
        layers.append(dict(
            sa_in_w=_xavier_uniform(ks[0], (3 * E, E)), sa_in_b=jnp.zeros((3 * E,), jnp.float32),
            sa_out_w=_xavier_uniform(ks[1], (E, E)),    sa_out_b=jnp.zeros((E,), jnp.float32),
            ca_in_w=_xavier_uniform(ks[2], (3 * E, E)), ca_in_b=jnp.zeros((3 * E,), jnp.float32),
            ca_out_w=_xavier_uniform(ks[3], (E, E)),    ca_out_b=jnp.zeros((E,), jnp.float32),
            w1=_xavier_uniform(ks[4], (dff, E)), b1=jnp.zeros((dff,), jnp.float32),
            w2=_xavier_uniform(ks[5], (E, dff)), b2=jnp.zeros((E,), jnp.float32),
            ln1_g=jnp.ones((E,), jnp.float32), ln1_b=jnp.zeros((E,), jnp.float32),
            ln2_g=jnp.ones((E,), jnp.float32), ln2_b=jnp.zeros((E,), jnp.float32),
            ln3_g=jnp.ones((E,), jnp.float32), ln3_b=jnp.zeros((E,), jnp.float32),
        ))
    norm = dict(g=jnp.ones((E,), jnp.float32), b=jnp.zeros((E,), jnp.float32))
    return layers, norm


def prepare_layer_params(raw, E, nhead):
    """One-time transpose / cast / scale-folding of torch-layout weights."""
    Dh = E // nhead
    scale = 1.0 / float(Dh) ** 0.5

    def bf16(x): return x.astype(jnp.bfloat16)
    def frow(x): return x.reshape(1, -1).astype(jnp.float32)

    # self-attention: fused QKV weight, softmax scale folded into the Q slice
    qscale = jnp.concatenate([jnp.full((E,), scale, jnp.float32),
                              jnp.ones((2 * E,), jnp.float32)])
    sa_wqkv_t = bf16(raw["sa_in_w"].T * qscale[None, :])           # (E, 3E)
    sa_bqkv = frow(raw["sa_in_b"] * qscale)                        # (1, 3E)

    # cross-attention: scaled Q proj + fused KV proj
    wq, wk, wv = jnp.split(raw["ca_in_w"], 3, axis=0)
    bq, bk, bv = jnp.split(raw["ca_in_b"], 3, axis=0)
    ca_wq_t = bf16(wq.T * scale)                                   # (E, E)
    ca_bq = frow(bq * scale)
    ca_wkv_t = bf16(jnp.concatenate([wk, wv], axis=0).T)           # (E, 2E)
    ca_bkv = frow(jnp.concatenate([bk, bv]))

    return dict(
        sa_wqkv_t=sa_wqkv_t, sa_bqkv=sa_bqkv,
        sa_wo_t=bf16(raw["sa_out_w"].T), sa_bo=frow(raw["sa_out_b"]),
        ca_wq_t=ca_wq_t, ca_bq=ca_bq, ca_wkv_t=ca_wkv_t, ca_bkv=ca_bkv,
        ca_wo_t=bf16(raw["ca_out_w"].T), ca_bo=frow(raw["ca_out_b"]),
        w1_t=bf16(raw["w1"].T), b1=frow(raw["b1"]),
        w2_t=bf16(raw["w2"].T), b2=frow(raw["b2"]),
        ln1_g=frow(raw["ln1_g"]), ln1_b=frow(raw["ln1_b"]),
        ln2_g=frow(raw["ln2_g"]), ln2_b=frow(raw["ln2_b"]),
        ln3_g=frow(raw["ln3_g"]), ln3_b=frow(raw["ln3_b"]),
    )


def prepare_norm_params(raw):
    if raw is None:
        return None
    return dict(g=raw["g"].reshape(1, -1).astype(jnp.float32),
                b=raw["b"].reshape(1, -1).astype(jnp.float32))


# ---------------------------------------------------------------------------
# Demo
# ---------------------------------------------------------------------------

if __name__ == "__main__":
    S, SM, B, E, NHEAD, DFF, NLAYERS = 8, 16, 2, 128, 4, 256, 2

    key = jax.random.PRNGKey(0)
    k_tgt, k_mem, k_par = jax.random.split(key, 3)

    tgt = jax.random.normal(k_tgt, (S, B, E), jnp.float32)      # (seq, batch, embed)
    memory = jax.random.normal(k_mem, (SM, B, E), jnp.float32)

    raw_layers, raw_norm = init_params(k_par, NLAYERS, E, DFF)
    layer_params = [prepare_layer_params(p, E, NHEAD) for p in raw_layers]
    norm_params = prepare_norm_params(raw_norm)

    # causal target mask (additive float), like generate_square_subsequent_mask
    tgt_mask = jnp.where(jnp.triu(jnp.ones((S, S), bool), k=1),
                         NEG_INF, 0.0).astype(jnp.float32)

    fwd = jax.jit(lambda t, m: transformer_decoder_shorter_forward(
        t, m, layer_params, norm_params, NHEAD, tgt_mask=tgt_mask))

    out = jax.block_until_ready(fwd(tgt, memory))

    assert out.shape == (S, B, E), out.shape
    assert bool(jnp.all(jnp.isfinite(out)))
    print("KERNEL_OK")
</pallas_src>

<mosaic_0001>
module attributes {stable_mosaic.version = 11 : i64} {
  func.func @_linear_bias_kernel(%arg0: i32, %arg1: i32, %arg2: memref<16x128xbf16, #tpu.memory_space<vmem>>, %arg3: memref<128x384xbf16, #tpu.memory_space<vmem>>, %arg4: memref<1x384xf32, #tpu.memory_space<vmem>>, %arg5: memref<16x384xbf16, #tpu.memory_space<vmem>>) attributes {dimension_semantics = [#tpu.dimension_semantics<parallel>, #tpu.dimension_semantics<parallel>], iteration_bounds = array<i64: 1, 1>, scalar_prefetch = 0 : i64, scratch_operands = 0 : i64, tpu.core_type = #tpu.core_type<tc>, window_params = [{transform_indices = @transform_0, window_bounds = array<i64: 16, 128>}, {transform_indices = @transform_1, window_bounds = array<i64: 128, 384>}, {transform_indices = @transform_2, window_bounds = array<i64: 1, 384>}, {transform_indices = @transform_3, window_bounds = array<i64: 16, 384>}]} {
    %c0 = arith.constant 0 : index
    %c0_0 = arith.constant 0 : index
    %0 = vector.load %arg2[%c0, %c0_0] : memref<16x128xbf16, #tpu.memory_space<vmem>>, vector<16x128xbf16>
    %c0_1 = arith.constant 0 : index
    %c0_2 = arith.constant 0 : index
    %1 = vector.load %arg3[%c0_1, %c0_2] : memref<128x384xbf16, #tpu.memory_space<vmem>>, vector<128x384xbf16>
    %cst = arith.constant dense<0.000000e+00> : vector<16x384xf32>
    %2 = tpu.matmul %0, %1, %cst {dimension_numbers = #tpu.dot_dimension_numbers<[1], [0], [0], [1], [0, 0, 1, 1], [], []>} : vector<16x128xbf16>, vector<128x384xbf16>, vector<16x384xf32> -> vector<16x384xf32>
    %c0_3 = arith.constant 0 : index
    %c0_4 = arith.constant 0 : index
    %3 = vector.load %arg4[%c0_3, %c0_4] : memref<1x384xf32, #tpu.memory_space<vmem>>, vector<1x384xf32>
    %4 = vector.broadcast %3 : vector<1x384xf32> to vector<16x384xf32>
    %5 = arith.addf %2, %4 : vector<16x384xf32>
    %6 = arith.truncf %5 : vector<16x384xf32> to vector<16x384xbf16>
    %c0_5 = arith.constant 0 : index
    %c0_6 = arith.constant 0 : index
    %7 = vector.load %arg5[%c0_5, %c0_6] : memref<16x384xbf16, #tpu.memory_space<vmem>>, vector<16x384xbf16>
    tpu.vector_store %arg5[%c0_5, %c0_6], %6 {strides = array<i32>} : memref<16x384xbf16, #tpu.memory_space<vmem>>, vector<16x384xbf16>,
    return
  }
  func.func @transform_0(%arg0: i32, %arg1: i32) -> (i32, i32) {
    %c0_i32 = arith.constant 0 : i32
    %c0_i32_0 = arith.constant 0 : i32
    return %arg0, %c0_i32 : i32, i32
  }
  func.func @transform_1(%arg0: i32, %arg1: i32) -> (i32, i32) {
    %c0_i32 = arith.constant 0 : i32
    %c0_i32_0 = arith.constant 0 : i32
    return %c0_i32, %arg1 : i32, i32
  }
  func.func @transform_2(%arg0: i32, %arg1: i32) -> (i32, i32) {
    %c0_i32 = arith.constant 0 : i32
    %c0_i32_0 = arith.constant 0 : i32
    return %c0_i32, %arg1 : i32, i32
  }
  func.func @transform_3(%arg0: i32, %arg1: i32) -> (i32, i32) {
    %c0_i32 = arith.constant 0 : i32
    return %arg0, %arg1 : i32, i32
  }
}

module attributes {stable_mosaic.version = 11 : i64} {
  func.func @_attn_kernel(%arg0: i32, %arg1: i32, %arg2: i32, %arg3: memref<1x1x8x32xbf16, #tpu.memory_space<vmem>>, %arg4: memref<1x1x8x32xbf16, #tpu.memory_space<vmem>>, %arg5: memref<1x1x8x32xbf16, #tpu.memory_space<vmem>>, %arg6: memref<8x8xf32, #tpu.memory_space<vmem>>, %arg7: memref<1x1x8xf32, #tpu.memory_space<vmem>>, %arg8: memref<1x1x8x32xbf16, #tpu.memory_space<vmem>>) attributes {dimension_semantics = [#tpu.dimension_semantics<parallel>, #tpu.dimension_semantics<parallel>, #tpu.dimension_semantics<parallel>], iteration_bounds = array<i64: 2, 4, 1>, scalar_prefetch = 0 : i64, scratch_operands = 0 : i64, tpu.core_type = #tpu.core_type<tc>, window_params = [{transform_indices = @transform_0, window_bounds = array<i64: 1, 1, 8, 32>}, {transform_indices = @transform_1, window_bounds = array<i64: 1, 1, 8, 32>}, {transform_indices = @transform_2, window_bounds = array<i64: 1, 1, 8, 32>}, {transform_indices = @transform_3, window_bounds = array<i64: 8, 8>}, {transform_indices = @transform_4, window_bounds = array<i64: 1, 1, 8>}, {transform_indices = @transform_5, window_bounds = array<i64: 1, 1, 8, 32>}]} {
    %c0 = arith.constant 0 : index
    %c0_0 = arith.constant 0 : index
    %c0_1 = arith.constant 0 : index
    %c0_2 = arith.constant 0 : index
    %0 = vector.load %arg3[%c0, %c0_0, %c0_1, %c0_2] : memref<1x1x8x32xbf16, #tpu.memory_space<vmem>>, vector<1x1x8x32xbf16>
    %1 = vector.shape_cast %0 : vector<1x1x8x32xbf16> to vector<8x32xbf16>
    %c0_3 = arith.constant 0 : index
    %c0_4 = arith.constant 0 : index
    %c0_5 = arith.constant 0 : index
    %c0_6 = arith.constant 0 : index
    %2 = vector.load %arg4[%c0_3, %c0_4, %c0_5, %c0_6] : memref<1x1x8x32xbf16, #tpu.memory_space<vmem>>, vector<1x1x8x32xbf16>
    %3 = vector.shape_cast %2 : vector<1x1x8x32xbf16> to vector<8x32xbf16>
    %c0_7 = arith.constant 0 : index
    %c0_8 = arith.constant 0 : index
    %c0_9 = arith.constant 0 : index
    %c0_10 = arith.constant 0 : index
    %4 = vector.load %arg5[%c0_7, %c0_8, %c0_9, %c0_10] : memref<1x1x8x32xbf16, #tpu.memory_space<vmem>>, vector<1x1x8x32xbf16>
    %5 = vector.shape_cast %4 : vector<1x1x8x32xbf16> to vector<8x32xbf16>
    %cst = arith.constant dense<0.000000e+00> : vector<8x8xf32>
    %6 = tpu.matmul %1, %3, %cst {dimension_numbers = #tpu.dot_dimension_numbers<[1], [1], [0], [0], [0, 0, 1, 0], [], []>} : vector<8x32xbf16>, vector<8x32xbf16>, vector<8x8xf32> -> vector<8x8xf32>
    %c0_11 = arith.constant 0 : index
    %c0_12 = arith.constant 0 : index
    %7 = vector.load %arg6[%c0_11, %c0_12] : memref<8x8xf32, #tpu.memory_space<vmem>>, vector<8x8xf32>
    %8 = arith.addf %6, %7 : vector<8x8xf32>
    %c0_13 = arith.constant 0 : index
    %c0_14 = arith.constant 0 : index
    %c0_15 = arith.constant 0 : index
    %9 = vector.load %arg7[%c0_13, %c0_14, %c0_15] : memref<1x1x8xf32, #tpu.memory_space<vmem>>, vector<1x1x8xf32>
    %10 = vector.shape_cast %9 : vector<1x1x8xf32> to vector<1x8xf32>
    %11 = vector.broadcast %10 : vector<1x8xf32> to vector<8x8xf32>
    %12 = arith.addf %8, %11 : vector<8x8xf32>
    %cst_16 = arith.constant dense<0xFF800000> : vector<8xf32>
    %13 = vector.multi_reduction <maximumf>, %12, %cst_16 [1] : vector<8x8xf32> to vector<8xf32>
    %14 = vector.shape_cast %13 : vector<8xf32> to vector<8x1xf32>
    %15 = vector.broadcast %14 : vector<8x1xf32> to vector<8x8xf32>
    %16 = arith.subf %12, %15 : vector<8x8xf32>
    %17 = math.exp %16 : vector<8x8xf32>
    %cst_17 = arith.constant dense<0.000000e+00> : vector<8xf32>
    %18 = vector.multi_reduction <add>, %17, %cst_17 [1] : vector<8x8xf32> to vector<8xf32>
    %19 = vector.shape_cast %18 : vector<8xf32> to vector<8x1xf32>
    %20 = tpu.reciprocal %19 {approx = true} : vector<8x1xf32> -> vector<8x1xf32>
    %21 = vector.broadcast %20 : vector<8x1xf32> to vector<8x8xf32>
    %22 = arith.mulf %17, %21 : vector<8x8xf32>
    %23 = arith.truncf %22 : vector<8x8xf32> to vector<8x8xbf16>
    %cst_18 = arith.constant dense<0.000000e+00> : vector<8x32xf32>
    %24 = tpu.matmul %23, %5, %cst_18 {dimension_numbers = #tpu.dot_dimension_numbers<[1], [0], [0], [1], [0, 0, 1, 1], [], []>} : vector<8x8xbf16>, vector<8x32xbf16>, vector<8x32xf32> -> vector<8x32xf32>
    %25 = arith.truncf %24 : vector<8x32xf32> to vector<8x32xbf16>
    %c0_19 = arith.constant 0 : index
    %c0_20 = arith.constant 0 : index
    %c0_21 = arith.constant 0 : index
    %c0_22 = arith.constant 0 : index
    %26 = vector.load %arg8[%c0_19, %c0_20, %c0_21, %c0_22] : memref<1x1x8x32xbf16, #tpu.memory_space<vmem>>, vector<1x1x8x32xbf16>
    %27 = vector.shape_cast %26 : vector<1x1x8x32xbf16> to vector<8x32xbf16>
    %28 = vector.shape_cast %25 : vector<8x32xbf16> to vector<1x1x8x32xbf16>
    tpu.vector_store %arg8[%c0_19, %c0_20, %c0_21, %c0_22], %28 {strides = array<i32>} : memref<1x1x8x32xbf16, #tpu.memory_space<vmem>>, vector<1x1x8x32xbf16>,
    return
  }
  func.func @transform_0(%arg0: i32, %arg1: i32, %arg2: i32) -> (i32, i32, i32, i32) {
    %c0_i32 = arith.constant 0 : i32
    %c0_i32_0 = arith.constant 0 : i32
    return %arg0, %arg1, %arg2, %c0_i32 : i32, i32, i32, i32
  }
  func.func @transform_1(%arg0: i32, %arg1: i32, %arg2: i32) -> (i32, i32, i32, i32) {
    %c4_i32 = arith.constant 4 : i32
    %0 = arith.addi %c4_i32, %arg1 : i32
    %c0_i32 = arith.constant 0 : i32
    %c0_i32_0 = arith.constant 0 : i32
    %c0_i32_1 = arith.constant 0 : i32
    return %arg0, %0, %c0_i32, %c0_i32_0 : i32, i32, i32, i32
  }
  func.func @transform_2(%arg0: i32, %arg1: i32, %arg2: i32) -> (i32, i32, i32, i32) {
    %c8_i32 = arith.constant 8 : i32
    %0 = arith.addi %c8_i32, %arg1 : i32
    %c0_i32 = arith.constant 0 : i32
    %c0_i32_0 = arith.constant 0 : i32
    %c0_i32_1 = arith.constant 0 : i32
    return %arg0, %0, %c0_i32, %c0_i32_0 : i32, i32, i32, i32
  }
  func.func @transform_3(%arg0: i32, %arg1: i32, %arg2: i32) -> (i32, i32) {
    %c0_i32 = arith.constant 0 : i32
    %c0_i32_0 = arith.constant 0 : i32
    return %arg2, %c0_i32 : i32, i32
  }
  func.func @transform_4(%arg0: i32, %arg1: i32, %arg2: i32) -> (i32, i32, i32) {
    %c0_i32 = arith.constant 0 : i32
    %c0_i32_0 = arith.constant 0 : i32
    %c0_i32_1 = arith.constant 0 : i32
    return %arg0, %c0_i32, %c0_i32_0 : i32, i32, i32
  }
  func.func @transform_5(%arg0: i32, %arg1: i32, %arg2: i32) -> (i32, i32, i32, i32) {
    %c0_i32 = arith.constant 0 : i32
    %c0_i32_0 = arith.constant 0 : i32
    return %arg0, %arg1, %arg2, %c0_i32 : i32, i32, i32, i32
  }
}

module attributes {stable_mosaic.version = 11 : i64} {
  func.func @_matmul_res_ln_kernel(%arg0: i32, %arg1: i32, %arg2: memref<16x128xbf16, #tpu.memory_space<vmem>>, %arg3: memref<128x128xbf16, #tpu.memory_space<vmem>>, %arg4: memref<1x128xf32, #tpu.memory_space<vmem>>, %arg5: memref<16x128xbf16, #tpu.memory_space<vmem>>, %arg6: memref<1x128xf32, #tpu.memory_space<vmem>>, %arg7: memref<1x128xf32, #tpu.memory_space<vmem>>, %arg8: memref<16x128xbf16, #tpu.memory_space<vmem>>, %arg9: memref<16x128xf32, #tpu.memory_space<vmem>>) attributes {dimension_semantics = [#tpu.dimension_semantics<parallel>, #tpu.dimension_semantics<arbitrary>], iteration_bounds = array<i64: 1, 1>, scalar_prefetch = 0 : i64, scratch_operands = 1 : i64, tpu.core_type = #tpu.core_type<tc>, window_params = [{transform_indices = @transform_0, window_bounds = array<i64: 16, 128>}, {transform_indices = @transform_1, window_bounds = array<i64: 128, 128>}, {pipeline_mode = #tpu.pipeline_mode<synchronous>, transform_indices = @transform_2, window_bounds = array<i64: 1, 128>}, {transform_indices = @transform_3, window_bounds = array<i64: 16, 128>}, {pipeline_mode = #tpu.pipeline_mode<synchronous>, transform_indices = @transform_4, window_bounds = array<i64: 1, 128>}, {pipeline_mode = #tpu.pipeline_mode<synchronous>, transform_indices = @transform_5, window_bounds = array<i64: 1, 128>}, {transform_indices = @transform_6, window_bounds = array<i64: 16, 128>}]} {
    %c0_i32 = arith.constant 0 : i32
    %0 = arith.cmpi eq, %arg1, %c0_i32 : i32
    %1 = arith.extui %0 : i1 to i32
    %c0_i32_0 = arith.constant 0 : i32
    %2 = arith.cmpi ne, %1, %c0_i32_0 : i32
    scf.if %2 {
      %cst_10 = arith.constant 0.000000e+00 : f32
      %12 = vector.broadcast %cst_10 : f32 to vector<16x128xf32>
      %c0_11 = arith.constant 0 : index
      %c0_12 = arith.constant 0 : index
      %13 = vector.load %arg9[%c0_11, %c0_12] : memref<16x128xf32, #tpu.memory_space<vmem>>, vector<16x128xf32>
      tpu.vector_store %arg9[%c0_11, %c0_12], %12 {strides = array<i32>} : memref<16x128xf32, #tpu.memory_space<vmem>>, vector<16x128xf32>,
    } else {
    }
    %c0 = arith.constant 0 : index
    %c0_1 = arith.constant 0 : index
    %3 = vector.load %arg9[%c0, %c0_1] : memref<16x128xf32, #tpu.memory_space<vmem>>, vector<16x128xf32>
    %c0_2 = arith.constant 0 : index
    %c0_3 = arith.constant 0 : index
    %4 = vector.load %arg2[%c0_2, %c0_3] : memref<16x128xbf16, #tpu.memory_space<vmem>>, vector<16x128xbf16>
    %c0_4 = arith.constant 0 : index
    %c0_5 = arith.constant 0 : index
    %5 = vector.load %arg3[%c0_4, %c0_5] : memref<128x128xbf16, #tpu.memory_space<vmem>>, vector<128x128xbf16>
    %cst = arith.constant dense<0.000000e+00> : vector<16x128xf32>
    %6 = tpu.matmul %4, %5, %cst {dimension_numbers = #tpu.dot_dimension_numbers<[1], [0], [0], [1], [0, 0, 1, 1], [], []>} : vector<16x128xbf16>, vector<128x128xbf16>, vector<16x128xf32> -> vector<16x128xf32>
    %7 = arith.addf %3, %6 : vector<16x128xf32>
    %c0_6 = arith.constant 0 : index
    %c0_7 = arith.constant 0 : index
    %8 = vector.load %arg9[%c0_6, %c0_7] : memref<16x128xf32, #tpu.memory_space<vmem>>, vector<16x128xf32>
    tpu.vector_store %arg9[%c0_6, %c0_7], %7 {strides = array<i32>} : memref<16x128xf32, #tpu.memory_space<vmem>>, vector<16x128xf32>,
    %c0_i32_8 = arith.constant 0 : i32
    %9 = arith.cmpi eq, %arg1, %c0_i32_8 : i32
    %10 = arith.extui %9 : i1 to i32
    %c0_i32_9 = arith.constant 0 : i32
    %11 = arith.cmpi ne, %10, %c0_i32_9 : i32
    scf.if %11 {
      %c0_10 = arith.constant 0 : index
      %c0_11 = arith.constant 0 : index
      %12 = vector.load %arg9[%c0_10, %c0_11] : memref<16x128xf32, #tpu.memory_space<vmem>>, vector<16x128xf32>
      %c0_12 = arith.constant 0 : index
      %c0_13 = arith.constant 0 : index
      %13 = vector.load %arg4[%c0_12, %c0_13] : memref<1x128xf32, #tpu.memory_space<vmem>>, vector<1x128xf32>
      %14 = vector.broadcast %13 : vector<1x128xf32> to vector<16x128xf32>
      %15 = arith.addf %12, %14 : vector<16x128xf32>
      %c0_14 = arith.constant 0 : index
      %c0_15 = arith.constant 0 : index
      %16 = vector.load %arg5[%c0_14, %c0_15] : memref<16x128xbf16, #tpu.memory_space<vmem>>, vector<16x128xbf16>
      %17 = arith.extf %16 : vector<16x128xbf16> to vector<16x128xf32>
      %18 = arith.addf %15, %17 : vector<16x128xf32>
      %cst_16 = arith.constant dense<0.000000e+00> : vector<16xf32>
      %19 = vector.multi_reduction <add>, %18, %cst_16 [1] : vector<16x128xf32> to vector<16xf32>
      %20 = vector.shape_cast %19 : vector<16xf32> to vector<16x1xf32>
      %cst_17 = arith.constant 1.280000e+02 : f32
      %21 = vector.broadcast %cst_17 : f32 to vector<16x1xf32>
      %22 = arith.divf %20, %21 : vector<16x1xf32>
      %23 = vector.broadcast %22 : vector<16x1xf32> to vector<16x128xf32>
      %24 = arith.subf %18, %23 : vector<16x128xf32>
      %25 = arith.mulf %24, %24 : vector<16x128xf32>
      %cst_18 = arith.constant dense<0.000000e+00> : vector<16xf32>
      %26 = vector.multi_reduction <add>, %25, %cst_18 [1] : vector<16x128xf32> to vector<16xf32>
      %27 = vector.shape_cast %26 : vector<16xf32> to vector<16x1xf32>
      %cst_19 = arith.constant 1.280000e+02 : f32
      %28 = vector.broadcast %cst_19 : f32 to vector<16x1xf32>
      %29 = arith.divf %27, %28 : vector<16x1xf32>
      %30 = vector.broadcast %22 : vector<16x1xf32> to vector<16x128xf32>
      %31 = arith.subf %18, %30 : vector<16x128xf32>
      %cst_20 = arith.constant 9.99999974E-6 : f32
      %32 = vector.broadcast %cst_20 : f32 to vector<16x1xf32>
      %33 = arith.addf %29, %32 : vector<16x1xf32>
      %34 = math.rsqrt %33 : vector<16x1xf32>
      %35 = vector.broadcast %34 : vector<16x1xf32> to vector<16x128xf32>
      %36 = arith.mulf %31, %35 : vector<16x128xf32>
      %c0_21 = arith.constant 0 : index
      %c0_22 = arith.constant 0 : index
      %37 = vector.load %arg6[%c0_21, %c0_22] : memref<1x128xf32, #tpu.memory_space<vmem>>, vector<1x128xf32>
      %38 = vector.broadcast %37 : vector<1x128xf32> to vector<16x128xf32>
      %39 = arith.mulf %36, %38 : vector<16x128xf32>
      %c0_23 = arith.constant 0 : index
      %c0_24 = arith.constant 0 : index
      %40 = vector.load %arg7[%c0_23, %c0_24] : memref<1x128xf32, #tpu.memory_space<vmem>>, vector<1x128xf32>
      %41 = vector.broadcast %40 : vector<1x128xf32> to vector<16x128xf32>
      %42 = arith.addf %39, %41 : vector<16x128xf32>
      %43 = arith.truncf %42 : vector<16x128xf32> to vector<16x128xbf16>
      %c0_25 = arith.constant 0 : index
      %c0_26 = arith.constant 0 : index
      %44 = vector.load %arg8[%c0_25, %c0_26] : memref<16x128xbf16, #tpu.memory_space<vmem>>, vector<16x128xbf16>
      tpu.vector_store %arg8[%c0_25, %c0_26], %43 {strides = array<i32>} : memref<16x128xbf16, #tpu.memory_space<vmem>>, vector<16x128xbf16>,
    } else {
    }
    return
  }
  func.func @transform_0(%arg0: i32, %arg1: i32) -> (i32, i32) {
    %c0_i32 = arith.constant 0 : i32
    return %arg0, %arg1 : i32, i32
  }
  func.func @transform_1(%arg0: i32, %arg1: i32) -> (i32, i32) {
    %c0_i32 = arith.constant 0 : i32
    %c0_i32_0 = arith.constant 0 : i32
    return %arg1, %c0_i32 : i32, i32
  }
  func.func @transform_2(%arg0: i32, %arg1: i32) -> (i32, i32) {
    %c0_i32 = arith.constant 0 : i32
    %c0_i32_0 = arith.constant 0 : i32
    %c0_i32_1 = arith.constant 0 : i32
    return %c0_i32, %c0_i32_0 : i32, i32
  }
  func.func @transform_3(%arg0: i32, %arg1: i32) -> (i32, i32) {
    %c0_i32 = arith.constant 0 : i32
    %c0_i32_0 = arith.constant 0 : i32
    return %arg0, %c0_i32 : i32, i32
  }
  func.func @transform_4(%arg0: i32, %arg1: i32) -> (i32, i32) {
    %c0_i32 = arith.constant 0 : i32
    %c0_i32_0 = arith.constant 0 : i32
    %c0_i32_1 = arith.constant 0 : i32
    return %c0_i32, %c0_i32_0 : i32, i32
  }
  func.func @transform_5(%arg0: i32, %arg1: i32) -> (i32, i32) {
    %c0_i32 = arith.constant 0 : i32
    %c0_i32_0 = arith.constant 0 : i32
    %c0_i32_1 = arith.constant 0 : i32
    return %c0_i32, %c0_i32_0 : i32, i32
  }
  func.func @transform_6(%arg0: i32, %arg1: i32) -> (i32, i32) {
    %c0_i32 = arith.constant 0 : i32
    %c0_i32_0 = arith.constant 0 : i32
    return %arg0, %c0_i32 : i32, i32
  }
}

module attributes {stable_mosaic.version = 11 : i64} {
  func.func @_linear_bias_kernel(%arg0: i32, %arg1: i32, %arg2: memref<16x128xbf16, #tpu.memory_space<vmem>>, %arg3: memref<128x128xbf16, #tpu.memory_space<vmem>>, %arg4: memref<1x128xf32, #tpu.memory_space<vmem>>, %arg5: memref<16x128xbf16, #tpu.memory_space<vmem>>) attributes {dimension_semantics = [#tpu.dimension_semantics<parallel>, #tpu.dimension_semantics<parallel>], iteration_bounds = array<i64: 1, 1>, scalar_prefetch = 0 : i64, scratch_operands = 0 : i64, tpu.core_type = #tpu.core_type<tc>, window_params = [{transform_indices = @transform_0, window_bounds = array<i64: 16, 128>}, {transform_indices = @transform_1, window_bounds = array<i64: 128, 128>}, {transform_indices = @transform_2, window_bounds = array<i64: 1, 128>}, {transform_indices = @transform_3, window_bounds = array<i64: 16, 128>}]} {
    %c0 = arith.constant 0 : index
    %c0_0 = arith.constant 0 : index
    %0 = vector.load %arg2[%c0, %c0_0] : memref<16x128xbf16, #tpu.memory_space<vmem>>, vector<16x128xbf16>
    %c0_1 = arith.constant 0 : index
    %c0_2 = arith.constant 0 : index
    %1 = vector.load %arg3[%c0_1, %c0_2] : memref<128x128xbf16, #tpu.memory_space<vmem>>, vector<128x128xbf16>
    %cst = arith.constant dense<0.000000e+00> : vector<16x128xf32>
    %2 = tpu.matmul %0, %1, %cst {dimension_numbers = #tpu.dot_dimension_numbers<[1], [0], [0], [1], [0, 0, 1, 1], [], []>} : vector<16x128xbf16>, vector<128x128xbf16>, vector<16x128xf32> -> vector<16x128xf32>
    %c0_3 = arith.constant 0 : index
    %c0_4 = arith.constant 0 : index
    %3 = vector.load %arg4[%c0_3, %c0_4] : memref<1x128xf32, #tpu.memory_space<vmem>>, vector<1x128xf32>
    %4 = vector.broadcast %3 : vector<1x128xf32> to vector<16x128xf32>
    %5 = arith.addf %2, %4 : vector<16x128xf32>
    %6 = arith.truncf %5 : vector<16x128xf32> to vector<16x128xbf16>
    %c0_5 = arith.constant 0 : index
    %c0_6 = arith.constant 0 : index
    %7 = vector.load %arg5[%c0_5, %c0_6] : memref<16x128xbf16, #tpu.memory_space<vmem>>, vector<16x128xbf16>
    tpu.vector_store %arg5[%c0_5, %c0_6], %6 {strides = array<i32>} : memref<16x128xbf16, #tpu.memory_space<vmem>>, vector<16x128xbf16>,
    return
  }
  func.func @transform_0(%arg0: i32, %arg1: i32) -> (i32, i32) {
    %c0_i32 = arith.constant 0 : i32
    %c0_i32_0 = arith.constant 0 : i32
    return %arg0, %c0_i32 : i32, i32
  }
  func.func @transform_1(%arg0: i32, %arg1: i32) -> (i32, i32) {
    %c0_i32 = arith.constant 0 : i32
    %c0_i32_0 = arith.constant 0 : i32
    return %c0_i32, %arg1 : i32, i32
  }
  func.func @transform_2(%arg0: i32, %arg1: i32) -> (i32, i32) {
    %c0_i32 = arith.constant 0 : i32
    %c0_i32_0 = arith.constant 0 : i32
    return %c0_i32, %arg1 : i32, i32
  }
  func.func @transform_3(%arg0: i32, %arg1: i32) -> (i32, i32) {
    %c0_i32 = arith.constant 0 : i32
    return %arg0, %arg1 : i32, i32
  }
}

module attributes {stable_mosaic.version = 11 : i64} {
  func.func @_linear_bias_kernel(%arg0: i32, %arg1: i32, %arg2: memref<32x128xbf16, #tpu.memory_space<vmem>>, %arg3: memref<128x256xbf16, #tpu.memory_space<vmem>>, %arg4: memref<1x256xf32, #tpu.memory_space<vmem>>, %arg5: memref<32x256xbf16, #tpu.memory_space<vmem>>) attributes {dimension_semantics = [#tpu.dimension_semantics<parallel>, #tpu.dimension_semantics<parallel>], iteration_bounds = array<i64: 1, 1>, scalar_prefetch = 0 : i64, scratch_operands = 0 : i64, tpu.core_type = #tpu.core_type<tc>, window_params = [{transform_indices = @transform_0, window_bounds = array<i64: 32, 128>}, {transform_indices = @transform_1, window_bounds = array<i64: 128, 256>}, {transform_indices = @transform_2, window_bounds = array<i64: 1, 256>}, {transform_indices = @transform_3, window_bounds = array<i64: 32, 256>}]} {
    %c0 = arith.constant 0 : index
    %c0_0 = arith.constant 0 : index
    %0 = vector.load %arg2[%c0, %c0_0] : memref<32x128xbf16, #tpu.memory_space<vmem>>, vector<32x128xbf16>
    %c0_1 = arith.constant 0 : index
    %c0_2 = arith.constant 0 : index
    %1 = vector.load %arg3[%c0_1, %c0_2] : memref<128x256xbf16, #tpu.memory_space<vmem>>, vector<128x256xbf16>
    %cst = arith.constant dense<0.000000e+00> : vector<32x256xf32>
    %2 = tpu.matmul %0, %1, %cst {dimension_numbers = #tpu.dot_dimension_numbers<[1], [0], [0], [1], [0, 0, 1, 1], [], []>} : vector<32x128xbf16>, vector<128x256xbf16>, vector<32x256xf32> -> vector<32x256xf32>
    %c0_3 = arith.constant 0 : index
    %c0_4 = arith.constant 0 : index
    %3 = vector.load %arg4[%c0_3, %c0_4] : memref<1x256xf32, #tpu.memory_space<vmem>>, vector<1x256xf32>
    %4 = vector.broadcast %3 : vector<1x256xf32> to vector<32x256xf32>
    %5 = arith.addf %2, %4 : vector<32x256xf32>
    %6 = arith.truncf %5 : vector<32x256xf32> to vector<32x256xbf16>
    %c0_5 = arith.constant 0 : index
    %c0_6 = arith.constant 0 : index
    %7 = vector.load %arg5[%c0_5, %c0_6] : memref<32x256xbf16, #tpu.memory_space<vmem>>, vector<32x256xbf16>
    tpu.vector_store %arg5[%c0_5, %c0_6], %6 {strides = array<i32>} : memref<32x256xbf16, #tpu.memory_space<vmem>>, vector<32x256xbf16>,
    return
  }
  func.func @transform_0(%arg0: i32, %arg1: i32) -> (i32, i32) {
    %c0_i32 = arith.constant 0 : i32
    %c0_i32_0 = arith.constant 0 : i32
    return %arg0, %c0_i32 : i32, i32
  }
  func.func @transform_1(%arg0: i32, %arg1: i32) -> (i32, i32) {
    %c0_i32 = arith.constant 0 : i32
    %c0_i32_0 = arith.constant 0 : i32
    return %c0_i32, %arg1 : i32, i32
  }
  func.func @transform_2(%arg0: i32, %arg1: i32) -> (i32, i32) {
    %c0_i32 = arith.constant 0 : i32
    %c0_i32_0 = arith.constant 0 : i32
    return %c0_i32, %arg1 : i32, i32
  }
  func.func @transform_3(%arg0: i32, %arg1: i32) -> (i32, i32) {
    %c0_i32 = arith.constant 0 : i32
    return %arg0, %arg1 : i32, i32
  }
}

module attributes {stable_mosaic.version = 11 : i64} {
  func.func @_attn_kernel(%arg0: i32, %arg1: i32, %arg2: i32, %arg3: memref<1x1x8x32xbf16, #tpu.memory_space<vmem>>, %arg4: memref<1x1x16x32xbf16, #tpu.memory_space<vmem>>, %arg5: memref<1x1x16x32xbf16, #tpu.memory_space<vmem>>, %arg6: memref<8x16xf32, #tpu.memory_space<vmem>>, %arg7: memref<1x1x16xf32, #tpu.memory_space<vmem>>, %arg8: memref<1x1x8x32xbf16, #tpu.memory_space<vmem>>) attributes {dimension_semantics = [#tpu.dimension_semantics<parallel>, #tpu.dimension_semantics<parallel>, #tpu.dimension_semantics<parallel>], iteration_bounds = array<i64: 2, 4, 1>, scalar_prefetch = 0 : i64, scratch_operands = 0 : i64, tpu.core_type = #tpu.core_type<tc>, window_params = [{transform_indices = @transform_0, window_bounds = array<i64: 1, 1, 8, 32>}, {transform_indices = @transform_1, window_bounds = array<i64: 1, 1, 16, 32>}, {transform_indices = @transform_2, window_bounds = array<i64: 1, 1, 16, 32>}, {transform_indices = @transform_3, window_bounds = array<i64: 8, 16>}, {transform_indices = @transform_4, window_bounds = array<i64: 1, 1, 16>}, {transform_indices = @transform_5, window_bounds = array<i64: 1, 1, 8, 32>}]} {
    %c0 = arith.constant 0 : index
    %c0_0 = arith.constant 0 : index
    %c0_1 = arith.constant 0 : index
    %c0_2 = arith.constant 0 : index
    %0 = vector.load %arg3[%c0, %c0_0, %c0_1, %c0_2] : memref<1x1x8x32xbf16, #tpu.memory_space<vmem>>, vector<1x1x8x32xbf16>
    %1 = vector.shape_cast %0 : vector<1x1x8x32xbf16> to vector<8x32xbf16>
    %c0_3 = arith.constant 0 : index
    %c0_4 = arith.constant 0 : index
    %c0_5 = arith.constant 0 : index
    %c0_6 = arith.constant 0 : index
    %2 = vector.load %arg4[%c0_3, %c0_4, %c0_5, %c0_6] : memref<1x1x16x32xbf16, #tpu.memory_space<vmem>>, vector<1x1x16x32xbf16>
    %3 = vector.shape_cast %2 : vector<1x1x16x32xbf16> to vector<16x32xbf16>
    %c0_7 = arith.constant 0 : index
    %c0_8 = arith.constant 0 : index
    %c0_9 = arith.constant 0 : index
    %c0_10 = arith.constant 0 : index
    %4 = vector.load %arg5[%c0_7, %c0_8, %c0_9, %c0_10] : memref<1x1x16x32xbf16, #tpu.memory_space<vmem>>, vector<1x1x16x32xbf16>
    %5 = vector.shape_cast %4 : vector<1x1x16x32xbf16> to vector<16x32xbf16>
    %cst = arith.constant dense<0.000000e+00> : vector<8x16xf32>
    %6 = tpu.matmul %1, %3, %cst {dimension_numbers = #tpu.dot_dimension_numbers<[1], [1], [0], [0], [0, 0, 1, 0], [], []>} : vector<8x32xbf16>, vector<16x32xbf16>, vector<8x16xf32> -> vector<8x16xf32>
    %c0_11 = arith.constant 0 : index
    %c0_12 = arith.constant 0 : index
    %7 = vector.load %arg6[%c0_11, %c0_12] : memref<8x16xf32, #tpu.memory_space<vmem>>, vector<8x16xf32>
    %8 = arith.addf %6, %7 : vector<8x16xf32>
    %c0_13 = arith.constant 0 : index
    %c0_14 = arith.constant 0 : index
    %c0_15 = arith.constant 0 : index
    %9 = vector.load %arg7[%c0_13, %c0_14, %c0_15] : memref<1x1x16xf32, #tpu.memory_space<vmem>>, vector<1x1x16xf32>
    %10 = vector.shape_cast %9 : vector<1x1x16xf32> to vector<1x16xf32>
    %11 = vector.broadcast %10 : vector<1x16xf32> to vector<8x16xf32>
    %12 = arith.addf %8, %11 : vector<8x16xf32>
    %cst_16 = arith.constant dense<0xFF800000> : vector<8xf32>
    %13 = vector.multi_reduction <maximumf>, %12, %cst_16 [1] : vector<8x16xf32> to vector<8xf32>
    %14 = vector.shape_cast %13 : vector<8xf32> to vector<8x1xf32>
    %15 = vector.broadcast %14 : vector<8x1xf32> to vector<8x16xf32>
    %16 = arith.subf %12, %15 : vector<8x16xf32>
    %17 = math.exp %16 : vector<8x16xf32>
    %cst_17 = arith.constant dense<0.000000e+00> : vector<8xf32>
    %18 = vector.multi_reduction <add>, %17, %cst_17 [1] : vector<8x16xf32> to vector<8xf32>
    %19 = vector.shape_cast %18 : vector<8xf32> to vector<8x1xf32>
    %20 = tpu.reciprocal %19 {approx = true} : vector<8x1xf32> -> vector<8x1xf32>
    %21 = vector.broadcast %20 : vector<8x1xf32> to vector<8x16xf32>
    %22 = arith.mulf %17, %21 : vector<8x16xf32>
    %23 = arith.truncf %22 : vector<8x16xf32> to vector<8x16xbf16>
    %cst_18 = arith.constant dense<0.000000e+00> : vector<8x32xf32>
    %24 = tpu.matmul %23, %5, %cst_18 {dimension_numbers = #tpu.dot_dimension_numbers<[1], [0], [0], [1], [0, 0, 1, 1], [], []>} : vector<8x16xbf16>, vector<16x32xbf16>, vector<8x32xf32> -> vector<8x32xf32>
    %25 = arith.truncf %24 : vector<8x32xf32> to vector<8x32xbf16>
    %c0_19 = arith.constant 0 : index
    %c0_20 = arith.constant 0 : index
    %c0_21 = arith.constant 0 : index
    %c0_22 = arith.constant 0 : index
    %26 = vector.load %arg8[%c0_19, %c0_20, %c0_21, %c0_22] : memref<1x1x8x32xbf16, #tpu.memory_space<vmem>>, vector<1x1x8x32xbf16>
    %27 = vector.shape_cast %26 : vector<1x1x8x32xbf16> to vector<8x32xbf16>
    %28 = vector.shape_cast %25 : vector<8x32xbf16> to vector<1x1x8x32xbf16>
    tpu.vector_store %arg8[%c0_19, %c0_20, %c0_21, %c0_22], %28 {strides = array<i32>} : memref<1x1x8x32xbf16, #tpu.memory_space<vmem>>, vector<1x1x8x32xbf16>,
    return
  }
  func.func @transform_0(%arg0: i32, %arg1: i32, %arg2: i32) -> (i32, i32, i32, i32) {
    %c0_i32 = arith.constant 0 : i32
    %c0_i32_0 = arith.constant 0 : i32
    return %arg0, %arg1, %arg2, %c0_i32 : i32, i32, i32, i32
  }
  func.func @transform_1(%arg0: i32, %arg1: i32, %arg2: i32) -> (i32, i32, i32, i32) {
    %c0_i32 = arith.constant 0 : i32
    %0 = arith.addi %c0_i32, %arg1 : i32
    %c0_i32_0 = arith.constant 0 : i32
    %c0_i32_1 = arith.constant 0 : i32
    %c0_i32_2 = arith.constant 0 : i32
    return %arg0, %0, %c0_i32_0, %c0_i32_1 : i32, i32, i32, i32
  }
  func.func @transform_2(%arg0: i32, %arg1: i32, %arg2: i32) -> (i32, i32, i32, i32) {
    %c4_i32 = arith.constant 4 : i32
    %0 = arith.addi %c4_i32, %arg1 : i32
    %c0_i32 = arith.constant 0 : i32
    %c0_i32_0 = arith.constant 0 : i32
    %c0_i32_1 = arith.constant 0 : i32
    return %arg0, %0, %c0_i32, %c0_i32_0 : i32, i32, i32, i32
  }
  func.func @transform_3(%arg0: i32, %arg1: i32, %arg2: i32) -> (i32, i32) {
    %c0_i32 = arith.constant 0 : i32
    %c0_i32_0 = arith.constant 0 : i32
    return %arg2, %c0_i32 : i32, i32
  }
  func.func @transform_4(%arg0: i32, %arg1: i32, %arg2: i32) -> (i32, i32, i32) {
    %c0_i32 = arith.constant 0 : i32
    %c0_i32_0 = arith.constant 0 : i32
    %c0_i32_1 = arith.constant 0 : i32
    return %arg0, %c0_i32, %c0_i32_0 : i32, i32, i32
  }
  func.func @transform_5(%arg0: i32, %arg1: i32, %arg2: i32) -> (i32, i32, i32, i32) {
    %c0_i32 = arith.constant 0 : i32
    %c0_i32_0 = arith.constant 0 : i32
    return %arg0, %arg1, %arg2, %c0_i32 : i32, i32, i32, i32
  }
}

module attributes {stable_mosaic.version = 11 : i64} {
  func.func @_ffn_res_ln_kernel(%arg0: i32, %arg1: i32, %arg2: memref<16x128xbf16, #tpu.memory_space<vmem>>, %arg3: memref<128x256xbf16, #tpu.memory_space<vmem>>, %arg4: memref<1x256xf32, #tpu.memory_space<vmem>>, %arg5: memref<256x128xbf16, #tpu.memory_space<vmem>>, %arg6: memref<1x128xf32, #tpu.memory_space<vmem>>, %arg7: memref<1x128xf32, #tpu.memory_space<vmem>>, %arg8: memref<1x128xf32, #tpu.memory_space<vmem>>, %arg9: memref<16x128xbf16, #tpu.memory_space<vmem>>, %arg10: memref<16x128xf32, #tpu.memory_space<vmem>>) attributes {dimension_semantics = [#tpu.dimension_semantics<parallel>, #tpu.dimension_semantics<arbitrary>], iteration_bounds = array<i64: 1, 1>, scalar_prefetch = 0 : i64, scratch_operands = 1 : i64, tpu.core_type = #tpu.core_type<tc>, window_params = [{transform_indices = @transform_0, window_bounds = array<i64: 16, 128>}, {transform_indices = @transform_1, window_bounds = array<i64: 128, 256>}, {transform_indices = @transform_2, window_bounds = array<i64: 1, 256>}, {transform_indices = @transform_3, window_bounds = array<i64: 256, 128>}, {pipeline_mode = #tpu.pipeline_mode<synchronous>, transform_indices = @transform_4, window_bounds = array<i64: 1, 128>}, {pipeline_mode = #tpu.pipeline_mode<synchronous>, transform_indices = @transform_5, window_bounds = array<i64: 1, 128>}, {pipeline_mode = #tpu.pipeline_mode<synchronous>, transform_indices = @transform_6, window_bounds = array<i64: 1, 128>}, {transform_indices = @transform_7, window_bounds = array<i64: 16, 128>}]} {
    %c0_i32 = arith.constant 0 : i32
    %0 = arith.cmpi eq, %arg1, %c0_i32 : i32
    %1 = arith.extui %0 : i1 to i32
    %c0_i32_0 = arith.constant 0 : i32
    %2 = arith.cmpi ne, %1, %c0_i32_0 : i32
    scf.if %2 {
      %cst_16 = arith.constant 0.000000e+00 : f32
      %20 = vector.broadcast %cst_16 : f32 to vector<16x128xf32>
      %c0_17 = arith.constant 0 : index
      %c0_18 = arith.constant 0 : index
      %21 = vector.load %arg10[%c0_17, %c0_18] : memref<16x128xf32, #tpu.memory_space<vmem>>, vector<16x128xf32>
      tpu.vector_store %arg10[%c0_17, %c0_18], %20 {strides = array<i32>} : memref<16x128xf32, #tpu.memory_space<vmem>>, vector<16x128xf32>,
    } else {
    }
    %c0 = arith.constant 0 : index
    %c0_1 = arith.constant 0 : index
    %3 = vector.load %arg2[%c0, %c0_1] : memref<16x128xbf16, #tpu.memory_space<vmem>>, vector<16x128xbf16>
    %c0_2 = arith.constant 0 : index
    %c0_3 = arith.constant 0 : index
    %4 = vector.load %arg3[%c0_2, %c0_3] : memref<128x256xbf16, #tpu.memory_space<vmem>>, vector<128x256xbf16>
    %cst = arith.constant dense<0.000000e+00> : vector<16x256xf32>
    %5 = tpu.matmul %3, %4, %cst {dimension_numbers = #tpu.dot_dimension_numbers<[1], [0], [0], [1], [0, 0, 1, 1], [], []>} : vector<16x128xbf16>, vector<128x256xbf16>, vector<16x256xf32> -> vector<16x256xf32>
    %c0_4 = arith.constant 0 : index
    %c0_5 = arith.constant 0 : index
    %6 = vector.load %arg4[%c0_4, %c0_5] : memref<1x256xf32, #tpu.memory_space<vmem>>, vector<1x256xf32>
    %7 = vector.broadcast %6 : vector<1x256xf32> to vector<16x256xf32>
    %8 = arith.addf %5, %7 : vector<16x256xf32>
    %cst_6 = arith.constant 0.000000e+00 : f32
    %9 = vector.broadcast %cst_6 : f32 to vector<16x256xf32>
    %10 = arith.maximumf %8, %9 : vector<16x256xf32>
    %11 = arith.truncf %10 : vector<16x256xf32> to vector<16x256xbf16>
    %c0_7 = arith.constant 0 : index
    %c0_8 = arith.constant 0 : index
    %12 = vector.load %arg10[%c0_7, %c0_8] : memref<16x128xf32, #tpu.memory_space<vmem>>, vector<16x128xf32>
    %c0_9 = arith.constant 0 : index
    %c0_10 = arith.constant 0 : index
    %13 = vector.load %arg5[%c0_9, %c0_10] : memref<256x128xbf16, #tpu.memory_space<vmem>>, vector<256x128xbf16>
    %cst_11 = arith.constant dense<0.000000e+00> : vector<16x128xf32>
    %14 = tpu.matmul %11, %13, %cst_11 {dimension_numbers = #tpu.dot_dimension_numbers<[1], [0], [0], [1], [0, 0, 1, 1], [], []>} : vector<16x256xbf16>, vector<256x128xbf16>, vector<16x128xf32> -> vector<16x128xf32>
    %15 = arith.addf %12, %14 : vector<16x128xf32>
    %c0_12 = arith.constant 0 : index
    %c0_13 = arith.constant 0 : index
    %16 = vector.load %arg10[%c0_12, %c0_13] : memref<16x128xf32, #tpu.memory_space<vmem>>, vector<16x128xf32>
    tpu.vector_store %arg10[%c0_12, %c0_13], %15 {strides = array<i32>} : memref<16x128xf32, #tpu.memory_space<vmem>>, vector<16x128xf32>,
    %c0_i32_14 = arith.constant 0 : i32
    %17 = arith.cmpi eq, %arg1, %c0_i32_14 : i32
    %18 = arith.extui %17 : i1 to i32
    %c0_i32_15 = arith.constant 0 : i32
    %19 = arith.cmpi ne, %18, %c0_i32_15 : i32
    scf.if %19 {
      %c0_16 = arith.constant 0 : index
      %c0_17 = arith.constant 0 : index
      %20 = vector.load %arg10[%c0_16, %c0_17] : memref<16x128xf32, #tpu.memory_space<vmem>>, vector<16x128xf32>
      %c0_18 = arith.constant 0 : index
      %c0_19 = arith.constant 0 : index
      %21 = vector.load %arg6[%c0_18, %c0_19] : memref<1x128xf32, #tpu.memory_space<vmem>>, vector<1x128xf32>
      %22 = vector.broadcast %21 : vector<1x128xf32> to vector<16x128xf32>
      %23 = arith.addf %20, %22 : vector<16x128xf32>
      %c0_20 = arith.constant 0 : index
      %c0_21 = arith.constant 0 : index
      %24 = vector.load %arg2[%c0_20, %c0_21] : memref<16x128xbf16, #tpu.memory_space<vmem>>, vector<16x128xbf16>
      %25 = arith.extf %24 : vector<16x128xbf16> to vector<16x128xf32>
      %26 = arith.addf %23, %25 : vector<16x128xf32>
      %cst_22 = arith.constant dense<0.000000e+00> : vector<16xf32>
      %27 = vector.multi_reduction <add>, %26, %cst_22 [1] : vector<16x128xf32> to vector<16xf32>
      %28 = vector.shape_cast %27 : vector<16xf32> to vector<16x1xf32>
      %cst_23 = arith.constant 1.280000e+02 : f32
      %29 = vector.broadcast %cst_23 : f32 to vector<16x1xf32>
      %30 = arith.divf %28, %29 : vector<16x1xf32>
      %31 = vector.broadcast %30 : vector<16x1xf32> to vector<16x128xf32>
      %32 = arith.subf %26, %31 : vector<16x128xf32>
      %33 = arith.mulf %32, %32 : vector<16x128xf32>
      %cst_24 = arith.constant dense<0.000000e+00> : vector<16xf32>
      %34 = vector.multi_reduction <add>, %33, %cst_24 [1] : vector<16x128xf32> to vector<16xf32>
      %35 = vector.shape_cast %34 : vector<16xf32> to vector<16x1xf32>
      %cst_25 = arith.constant 1.280000e+02 : f32
      %36 = vector.broadcast %cst_25 : f32 to vector<16x1xf32>
      %37 = arith.divf %35, %36 : vector<16x1xf32>
      %38 = vector.broadcast %30 : vector<16x1xf32> to vector<16x128xf32>
      %39 = arith.subf %26, %38 : vector<16x128xf32>
      %cst_26 = arith.constant 9.99999974E-6 : f32
      %40 = vector.broadcast %cst_26 : f32 to vector<16x1xf32>
      %41 = arith.addf %37, %40 : vector<16x1xf32>
      %42 = math.rsqrt %41 : vector<16x1xf32>
      %43 = vector.broadcast %42 : vector<16x1xf32> to vector<16x128xf32>
      %44 = arith.mulf %39, %43 : vector<16x128xf32>
      %c0_27 = arith.constant 0 : index
      %c0_28 = arith.constant 0 : index
      %45 = vector.load %arg7[%c0_27, %c0_28] : memref<1x128xf32, #tpu.memory_space<vmem>>, vector<1x128xf32>
      %46 = vector.broadcast %45 : vector<1x128xf32> to vector<16x128xf32>
      %47 = arith.mulf %44, %46 : vector<16x128xf32>
      %c0_29 = arith.constant 0 : index
      %c0_30 = arith.constant 0 : index
      %48 = vector.load %arg8[%c0_29, %c0_30] : memref<1x128xf32, #tpu.memory_space<vmem>>, vector<1x128xf32>
      %49 = vector.broadcast %48 : vector<1x128xf32> to vector<16x128xf32>
      %50 = arith.addf %47, %49 : vector<16x128xf32>
      %51 = arith.truncf %50 : vector<16x128xf32> to vector<16x128xbf16>
      %c0_31 = arith.constant 0 : index
      %c0_32 = arith.constant 0 : index
      %52 = vector.load %arg9[%c0_31, %c0_32] : memref<16x128xbf16, #tpu.memory_space<vmem>>, vector<16x128xbf16>
      tpu.vector_store %arg9[%c0_31, %c0_32], %51 {strides = array<i32>} : memref<16x128xbf16, #tpu.memory_space<vmem>>, vector<16x128xbf16>,
    } else {
    }
    return
  }
  func.func @transform_0(%arg0: i32, %arg1: i32) -> (i32, i32) {
    %c0_i32 = arith.constant 0 : i32
    %c0_i32_0 = arith.constant 0 : i32
    return %arg0, %c0_i32 : i32, i32
  }
  func.func @transform_1(%arg0: i32, %arg1: i32) -> (i32, i32) {
    %c0_i32 = arith.constant 0 : i32
    %c0_i32_0 = arith.constant 0 : i32
    return %c0_i32, %arg1 : i32, i32
  }
  func.func @transform_2(%arg0: i32, %arg1: i32) -> (i32, i32) {
    %c0_i32 = arith.constant 0 : i32
    %c0_i32_0 = arith.constant 0 : i32
    return %c0_i32, %arg1 : i32, i32
  }
  func.func @transform_3(%arg0: i32, %arg1: i32) -> (i32, i32) {
    %c0_i32 = arith.constant 0 : i32
    %c0_i32_0 = arith.constant 0 : i32
    return %arg1, %c0_i32 : i32, i32
  }
  func.func @transform_4(%arg0: i32, %arg1: i32) -> (i32, i32) {
    %c0_i32 = arith.constant 0 : i32
    %c0_i32_0 = arith.constant 0 : i32
    %c0_i32_1 = arith.constant 0 : i32
    return %c0_i32, %c0_i32_0 : i32, i32
  }
  func.func @transform_5(%arg0: i32, %arg1: i32) -> (i32, i32) {
    %c0_i32 = arith.constant 0 : i32
    %c0_i32_0 = arith.constant 0 : i32
    %c0_i32_1 = arith.constant 0 : i32
    return %c0_i32, %c0_i32_0 : i32, i32
  }
  func.func @transform_6(%arg0: i32, %arg1: i32) -> (i32, i32) {
    %c0_i32 = arith.constant 0 : i32
    %c0_i32_0 = arith.constant 0 : i32
    %c0_i32_1 = arith.constant 0 : i32
    return %c0_i32, %c0_i32_0 : i32, i32
  }
  func.func @transform_7(%arg0: i32, %arg1: i32) -> (i32, i32) {
    %c0_i32 = arith.constant 0 : i32
    %c0_i32_0 = arith.constant 0 : i32
    return %arg0, %c0_i32 : i32, i32
  }
}

module attributes {stable_mosaic.version = 11 : i64} {
  func.func @_ln_kernel(%arg0: i32, %arg1: memref<16x128xbf16, #tpu.memory_space<vmem>>, %arg2: memref<1x128xf32, #tpu.memory_space<vmem>>, %arg3: memref<1x128xf32, #tpu.memory_space<vmem>>, %arg4: memref<16x128xf32, #tpu.memory_space<vmem>>) attributes {dimension_semantics = [#tpu.dimension_semantics<parallel>], iteration_bounds = array<i64: 1>, scalar_prefetch = 0 : i64, scratch_operands = 0 : i64, tpu.core_type = #tpu.core_type<tc>, window_params = [{transform_indices = @transform_0, window_bounds = array<i64: 16, 128>}, {pipeline_mode = #tpu.pipeline_mode<synchronous>, transform_indices = @transform_1, window_bounds = array<i64: 1, 128>}, {pipeline_mode = #tpu.pipeline_mode<synchronous>, transform_indices = @transform_2, window_bounds = array<i64: 1, 128>}, {transform_indices = @transform_3, window_bounds = array<i64: 16, 128>}]} {
    %c0 = arith.constant 0 : index
    %c0_0 = arith.constant 0 : index
    %0 = vector.load %arg1[%c0, %c0_0] : memref<16x128xbf16, #tpu.memory_space<vmem>>, vector<16x128xbf16>
    %1 = arith.extf %0 : vector<16x128xbf16> to vector<16x128xf32>
    %cst = arith.constant dense<0.000000e+00> : vector<16xf32>
    %2 = vector.multi_reduction <add>, %1, %cst [1] : vector<16x128xf32> to vector<16xf32>
    %3 = vector.shape_cast %2 : vector<16xf32> to vector<16x1xf32>
    %cst_1 = arith.constant 1.280000e+02 : f32
    %4 = vector.broadcast %cst_1 : f32 to vector<16x1xf32>
    %5 = arith.divf %3, %4 : vector<16x1xf32>
    %6 = vector.broadcast %5 : vector<16x1xf32> to vector<16x128xf32>
    %7 = arith.subf %1, %6 : vector<16x128xf32>
    %8 = arith.mulf %7, %7 : vector<16x128xf32>
    %cst_2 = arith.constant dense<0.000000e+00> : vector<16xf32>
    %9 = vector.multi_reduction <add>, %8, %cst_2 [1] : vector<16x128xf32> to vector<16xf32>
    %10 = vector.shape_cast %9 : vector<16xf32> to vector<16x1xf32>
    %cst_3 = arith.constant 1.280000e+02 : f32
    %11 = vector.broadcast %cst_3 : f32 to vector<16x1xf32>
    %12 = arith.divf %10, %11 : vector<16x1xf32>
    %13 = vector.broadcast %5 : vector<16x1xf32> to vector<16x128xf32>
    %14 = arith.subf %1, %13 : vector<16x128xf32>
    %cst_4 = arith.constant 9.99999974E-6 : f32
    %15 = vector.broadcast %cst_4 : f32 to vector<16x1xf32>
    %16 = arith.addf %12, %15 : vector<16x1xf32>
    %17 = math.rsqrt %16 : vector<16x1xf32>
    %18 = vector.broadcast %17 : vector<16x1xf32> to vector<16x128xf32>
    %19 = arith.mulf %14, %18 : vector<16x128xf32>
    %c0_5 = arith.constant 0 : index
    %c0_6 = arith.constant 0 : index
    %20 = vector.load %arg2[%c0_5, %c0_6] : memref<1x128xf32, #tpu.memory_space<vmem>>, vector<1x128xf32>
    %21 = vector.broadcast %20 : vector<1x128xf32> to vector<16x128xf32>
    %22 = arith.mulf %19, %21 : vector<16x128xf32>
    %c0_7 = arith.constant 0 : index
    %c0_8 = arith.constant 0 : index
    %23 = vector.load %arg3[%c0_7, %c0_8] : memref<1x128xf32, #tpu.memory_space<vmem>>, vector<1x128xf32>
    %24 = vector.broadcast %23 : vector<1x128xf32> to vector<16x128xf32>
    %25 = arith.addf %22, %24 : vector<16x128xf32>
    %c0_9 = arith.constant 0 : index
    %c0_10 = arith.constant 0 : index
    %26 = vector.load %arg4[%c0_9, %c0_10] : memref<16x128xf32, #tpu.memory_space<vmem>>, vector<16x128xf32>
    tpu.vector_store %arg4[%c0_9, %c0_10], %25 {strides = array<i32>} : memref<16x128xf32, #tpu.memory_space<vmem>>, vector<16x128xf32>,
    return
  }
  func.func @transform_0(%arg0: i32) -> (i32, i32) {
    %c0_i32 = arith.constant 0 : i32
    %c0_i32_0 = arith.constant 0 : i32
    return %arg0, %c0_i32 : i32, i32
  }
  func.func @transform_1(%arg0: i32) -> (i32, i32) {
    %c0_i32 = arith.constant 0 : i32
    %c0_i32_0 = arith.constant 0 : i32
    %c0_i32_1 = arith.constant 0 : i32
    return %c0_i32, %c0_i32_0 : i32, i32
  }
  func.func @transform_2(%arg0: i32) -> (i32, i32) {
    %c0_i32 = arith.constant 0 : i32
    %c0_i32_0 = arith.constant 0 : i32
    %c0_i32_1 = arith.constant 0 : i32
    return %c0_i32, %c0_i32_0 : i32, i32
  }
  func.func @transform_3(%arg0: i32) -> (i32, i32) {
    %c0_i32 = arith.constant 0 : i32
    %c0_i32_0 = arith.constant 0 : i32
    return %arg0, %c0_i32 : i32, i32
  }
}

</mosaic_0001>

<llo_original>
// kernel: _lambda_.18
$region0: #{_lambda_.18}
  #allocation0 [shape = 'u32[]', space=smem, size = 0x4, offset = 0x4, fixed_abs, tag = 'smem constant byte address 0x4 - core index']
  #allocation1 [shape = 'u32[144,128]{1,0:T(1,128)}', space=vmem, size = 0x12000, scoped, tag = 'internal scratch']
  %s0 = inlined_call_operand.hbm [shape: bf16[2,12,8,32], index: 0, kind: input, shape index: {}, may-alias: {0,1,2}]
  %s1 = inlined_call_operand.hbm [shape: bf16[2,12,8,32], index: 1, kind: input, shape index: {}, may-alias: {0,1,2}]
  %s2 = inlined_call_operand.hbm [shape: bf16[2,12,8,32], index: 2, kind: input, shape index: {}, may-alias: {0,1,2}]
  %s3 = inlined_call_operand.hbm [shape: f32[8,8], index: 3, kind: input, shape index: {}]
  %s4 = inlined_call_operand.hbm [shape: f32[2,1,8], index: 4, kind: input, shape index: {}]
  %s5 = inlined_call_operand.hbm [shape: bf16[2,4,8,32], index: 5, kind: output, shape index: {}]
  %s6 = sld [smem:[#allocation0]]
  $region73: #{_lambda_.18} parent=0
    _
  %s8 = ssub.s32 1, %s6
  %s9 = scalar_select 0, %s8, %s6
  $region1: #{_lambda_.18} parent=0
    #allocation2 [shape = 'u8[4096]{0}', space=vmem, size = 0x1000, scoped, tag = 'input window, operand 0']
    #allocation3 [shape = 's32[2]{0}', space=sflag, size = 0x8, scoped, tag = 'scoped memory for _lambda_.18']
    #allocation4 [shape = 's32[2]{0}', space=sflag, size = 0x8, scoped, tag = 'scoped memory for _lambda_.18']
    #allocation5 [shape = 'u8[4096]{0}', space=vmem, size = 0x1000, scoped, tag = 'input window, operand 1']
    #allocation6 [shape = 's32[2]{0}', space=sflag, size = 0x8, scoped, tag = 'scoped memory for _lambda_.18']
    #allocation7 [shape = 'u8[4096]{0}', space=vmem, size = 0x1000, scoped, tag = 'input window, operand 2']
    #allocation8 [shape = 'u8[4096]{0}', space=vmem, size = 0x1000, scoped, tag = 'input window, operand 3, single buffered']
    #allocation9 [shape = 's32[1]{0}', space=sflag, size = 0x4, scoped, tag = 'scoped memory for _lambda_.18']
    #allocation10 [shape = 'u8[1024]{0}', space=vmem, size = 0x400, scoped, tag = 'input window, operand 4']
    #allocation11 [shape = 'u8[4096]{0}', space=vmem, size = 0x1000, scoped, tag = 'output window, operand 0']
    %10 = vsyncpa [#allocation3], 0
    %s11 = scalar_lea.sflag [#allocation3], 1
    %12 = vsyncpa %s11, 0
    %13 = vsyncpa [#allocation6], 0
    %s14 = scalar_lea.sflag [#allocation6], 1
    %15 = vsyncpa %s14, 0
    %16 = vsyncpa [#allocation9], 0
    %17 = vsyncpa [#allocation4], 0
    %s18 = scalar_lea.sflag [#allocation4], 1
    %19 = vsyncpa %s18, 0
    loop: start=0, step=1, limit=10
    $region2: #{_lambda_.18} parent=1 // loop_pre_header
      _
    $region3: #{_lambda_.18} parent=1 // loop_header
      %s21 = sphi 0, %s25
      %p22 = scmp.ge.s32.totalorder %s21, 10
      %s28 = sphi 0, %s47
      %s29 = sphi 0, %s43
      %s30 = sphi 0, %s39
      %s31 = sphi 0, %s28
      %s32 = sphi 0, %s29
      %s33 = sphi 0, %s30
      %s34 = sphi 0, %s31
      %s35 = sphi 0, %s32
      %s36 = sphi 0, %s33
      %s54 = sphi 0, %s56
      %s57 = sphi 0, %s54
      %s58 = sphi 0, %s57
      %s74 = sphi 0, %s58
      %s84 = sphi 0, %s86
      %s87 = sphi 0, %s84
      %s88 = sphi 0, %s87
      %s104 = sphi 0, %s88
      %s114 = sphi 0, %s116
      %s117 = sphi 0, %s114
      %s118 = sphi 0, %s117
      %s134 = sphi 0, %s118
      %s140 = sphi 0, %s142
      %s143 = sphi 0, %s140
      %s144 = sphi 0, %s143
      %s160 = sphi 0, %s144
      %s166 = sphi 0, %s168
      %s169 = sphi 0, %s166
      %s170 = sphi 0, %s169
      %s186 = sphi 0, %s170
      %s196 = sphi 0, %s198
      %s199 = sphi 0, %s196
      %s200 = sphi 0, %s199
      %s216 = sphi 0, %s200
    $region4: #{_lambda_.18} parent=1 // loop_header_branch
      %24 = sbr.rel (%p22) target = $region8
    $region5: #{_lambda_.18} parent=1 // loop_body
      %s26 = ssub.s32 %s21, 1
      %s27 = ssub.s32 %s21, 2
      %s37 = sadd.s32 1, %s30
      %p38 = scmp.ge.s32.totalorder %s37, 1
      %s39 = scalar_select %p38, 0, %s37
      %s40 = sadd.s32 1, %s29
      %s41 = scalar_select %p38, %s40, %s29
      %p42 = scmp.ge.s32.totalorder %s41, 4
      %s43 = scalar_select %p42, 0, %s41
      %s44 = sadd.s32 1, %s28
      %s45 = scalar_select %p42, %s44, %s28
      %p46 = scmp.ge.s32.totalorder %s45, 2
      %s47 = scalar_select %p46, 0, %s45
      %s48 = ssub.s32 %s28, %s47
      %s49 = ssub.s32 %s29, %s43
      %s50 = sor.u32 %s48, %s49
      %s51 = ssub.s32 %s30, %s39
      %s52 = sor.u32 %s50, %s51
      %p53 = scmp.eq.s32.totalorder %s52, 0
      %s55 = sadd.s32 %s54, 1
      %s56 = scalar_select %p53, %s54, %s55
      %p59 = pneg %p53
      %p60 = scmp.eq.s32.totalorder %s21, 7
      %p61 = por %p59, %p60
      %p62 = scmp.ne.s32.totalorder %s54, %s57
      %p63 = scmp.eq.s32.totalorder %s21, 0
      %p64 = por %p62, %p63
      %p65 = scmp.ne.s32.totalorder %s54, %s57
      %p66 = scmp.eq.s32.totalorder %s26, 7
      %p67 = por %p65, %p66
      %p68 = scmp.ne.s32.totalorder %s57, %s58
      %p69 = scmp.eq.s32.totalorder %s26, 0
      %p70 = por %p68, %p69
      %p71 = scmp.ne.s32.totalorder %s57, %s58
      %p72 = scmp.eq.s32.totalorder %s27, 7
      %p73 = por %p71, %p72
      %p75 = scmp.ne.s32.totalorder %s58, %s74
      %p76 = scmp.eq.s32.totalorder %s27, 0
      %p77 = por %p75, %p76
      %s78 = sadd.s32 %s29, 4
      %s79 = sadd.s32 %s43, 4
      %s80 = ssub.s32 %s28, %s47
      %s81 = ssub.s32 %s78, %s79
      %s82 = sor.u32 %s80, %s81
      %p83 = scmp.eq.s32.totalorder %s82, 0
      %s85 = sadd.s32 %s84, 1
      %s86 = scalar_select %p83, %s84, %s85
      %p89 = pneg %p83
      %p90 = scmp.eq.s32.totalorder %s21, 7
      %p91 = por %p89, %p90
      %p92 = scmp.ne.s32.totalorder %s84, %s87
      %p93 = scmp.eq.s32.totalorder %s21, 0
      %p94 = por %p92, %p93
      %p95 = scmp.ne.s32.totalorder %s84, %s87
      %p96 = scmp.eq.s32.totalorder %s26, 7
      %p97 = por %p95, %p96
      %p98 = scmp.ne.s32.totalorder %s87, %s88
      %p99 = scmp.eq.s32.totalorder %s26, 0
      %p100 = por %p98, %p99
      %p101 = scmp.ne.s32.totalorder %s87, %s88
      %p102 = scmp.eq.s32.totalorder %s27, 7
      %p103 = por %p101, %p102
      %p105 = scmp.ne.s32.totalorder %s88, %s104
      %p106 = scmp.eq.s32.totalorder %s27, 0
      %p107 = por %p105, %p106
      %s108 = sadd.s32 %s29, 8
      %s109 = sadd.s32 %s43, 8
      %s110 = ssub.s32 %s28, %s47
      %s111 = ssub.s32 %s108, %s109
      %s112 = sor.u32 %s110, %s111
      %p113 = scmp.eq.s32.totalorder %s112, 0
      %s115 = sadd.s32 %s114, 1
      %s116 = scalar_select %p113, %s114, %s115
      %p119 = pneg %p113
      %p120 = scmp.eq.s32.totalorder %s21, 7
      %p121 = por %p119, %p120
      %p122 = scmp.ne.s32.totalorder %s114, %s117
      %p123 = scmp.eq.s32.totalorder %s21, 0
      %p124 = por %p122, %p123
      %p125 = scmp.ne.s32.totalorder %s114, %s117
      %p126 = scmp.eq.s32.totalorder %s26, 7
      %p127 = por %p125, %p126
      %p128 = scmp.ne.s32.totalorder %s117, %s118
      %p129 = scmp.eq.s32.totalorder %s26, 0
      %p130 = por %p128, %p129
      %p131 = scmp.ne.s32.totalorder %s117, %s118
      %p132 = scmp.eq.s32.totalorder %s27, 7
      %p133 = por %p131, %p132
      %p135 = scmp.ne.s32.totalorder %s118, %s134
      %p136 = scmp.eq.s32.totalorder %s27, 0
      %p137 = por %p135, %p136
      %s138 = ssub.s32 %s30, %s39
      %p139 = scmp.eq.s32.totalorder %s138, 0
      %s141 = sadd.s32 %s140, 1
      %s142 = scalar_select %p139, %s140, %s141
      %p145 = pneg %p139
      %p146 = scmp.eq.s32.totalorder %s21, 7
      %p147 = por %p145, %p146
      %p148 = scmp.ne.s32.totalorder %s140, %s143
      %p149 = scmp.eq.s32.totalorder %s21, 0
      %p150 = por %p148, %p149
      %p151 = scmp.ne.s32.totalorder %s140, %s143
      %p152 = scmp.eq.s32.totalorder %s26, 7
      %p153 = por %p151, %p152
      %p154 = scmp.ne.s32.totalorder %s143, %s144
      %p155 = scmp.eq.s32.totalorder %s26, 0
      %p156 = por %p154, %p155
      %p157 = scmp.ne.s32.totalorder %s143, %s144
      %p158 = scmp.eq.s32.totalorder %s27, 7
      %p159 = por %p157, %p158
      %p161 = scmp.ne.s32.totalorder %s144, %s160
      %p162 = scmp.eq.s32.totalorder %s27, 0
      %p163 = por %p161, %p162
      %s164 = ssub.s32 %s28, %s47
      %p165 = scmp.eq.s32.totalorder %s164, 0
      %s167 = sadd.s32 %s166, 1
      %s168 = scalar_select %p165, %s166, %s167
      %p171 = pneg %p165
      %p172 = scmp.eq.s32.totalorder %s21, 7
      %p173 = por %p171, %p172
      %p174 = scmp.ne.s32.totalorder %s166, %s169
      %p175 = scmp.eq.s32.totalorder %s21, 0
      %p176 = por %p174, %p175
      %p177 = scmp.ne.s32.totalorder %s166, %s169
      %p178 = scmp.eq.s32.totalorder %s26, 7
      %p179 = por %p177, %p178
      %p180 = scmp.ne.s32.totalorder %s169, %s170
      %p181 = scmp.eq.s32.totalorder %s26, 0
      %p182 = por %p180, %p181
      %p183 = scmp.ne.s32.totalorder %s169, %s170
      %p184 = scmp.eq.s32.totalorder %s27, 7
      %p185 = por %p183, %p184
      %p187 = scmp.ne.s32.totalorder %s170, %s186
      %p188 = scmp.eq.s32.totalorder %s27, 0
      %p189 = por %p187, %p188
      %s190 = ssub.s32 %s28, %s47
      %s191 = ssub.s32 %s29, %s43
      %s192 = sor.u32 %s190, %s191
      %s193 = ssub.s32 %s30, %s39
      %s194 = sor.u32 %s192, %s193
      %p195 = scmp.eq.s32.totalorder %s194, 0
      %s197 = sadd.s32 %s196, 1
      %s198 = scalar_select %p195, %s196, %s197
      %p201 = pneg %p195
      %p202 = scmp.eq.s32.totalorder %s21, 7
      %p203 = por %p201, %p202
      %p204 = scmp.ne.s32.totalorder %s196, %s199
      %p205 = scmp.eq.s32.totalorder %s21, 0
      %p206 = por %p204, %p205
      %p207 = scmp.ne.s32.totalorder %s196, %s199
      %p208 = scmp.eq.s32.totalorder %s26, 7
      %p209 = por %p207, %p208
      %p210 = scmp.ne.s32.totalorder %s199, %s200
      %p211 = scmp.eq.s32.totalorder %s26, 0
      %p212 = por %p210, %p211
      %p213 = scmp.ne.s32.totalorder %s199, %s200
      %p214 = scmp.eq.s32.totalorder %s27, 7
      %p215 = por %p213, %p214
      %p217 = scmp.ne.s32.totalorder %s200, %s216
      %p218 = scmp.eq.s32.totalorder %s27, 0
      %p219 = por %p217, %p218
      %p220 = scmp.le.s32.totalorder 1, %s21
      %p221 = scmp.lt.s32.totalorder %s21, 9
      %p222 = pnand %p220, %p221
      %p223 = pneg %p222
      // Predicated region
      $region9: #{_lambda_.18} parent=5 // pred_check
        _
      $region10: #{_lambda_.18} parent=5 // pred_check_branch
        %225 = sbr.rel (%p222) target = $region12
      $region11: #{_lambda_.18} parent=5 // pred_region
        %s226 = ssub.s32 %s21, 1
        // Predicated region
        $region13: #{_lambda_.18} parent=11 // pred_check
          %p227 = pneg %p156
        $region14: #{_lambda_.18} parent=11 // pred_check_branch
          %229 = sbr.rel (%p227) target = $region16
        $region15: #{_lambda_.18} parent=11 // pred_region
          %s231 = ssub.s32 128, 128
          %232 = vsyncadd [#allocation9], %s231
          %s233 = smul.addr %s33, 128
          %s234 = scalar_lea.hbm %s3, %s233
          %s236 = sshll.u32 [#allocation8], 4
          %s237 = int_to_ptr.vmem [resolvable:$true] %s236
          %239 = dma.hbm_to_vmem [thread:$0]  %s234, 128, %s237, [#allocation9]
        $region16: #{_lambda_.18} parent=11 // pred_fallthru
          _
      $region12: #{_lambda_.18} parent=5 // pred_fallthru
        _
      %p240 = scmp.lt.s32.totalorder %s21, 8
      // Predicated region
      $region17: #{_lambda_.18} parent=5 // pred_check
        %p241 = pneg %p240
      $region18: #{_lambda_.18} parent=5 // pred_check_branch
        %243 = sbr.rel (%p241) target = $region20
      $region19: #{_lambda_.18} parent=5 // pred_region
        // Predicated region
        $region21: #{_lambda_.18} parent=19 // pred_check
          %p244 = pneg %p64
        $region22: #{_lambda_.18} parent=19 // pred_check_branch
          %246 = sbr.rel (%p244) target = $region24
        $region23: #{_lambda_.18} parent=19 // pred_region
          %s247 = sand.u32 %s21, 1
          %s248 = scalar_lea.sflag [#allocation3], %s247
          %s249 = sand.u32 %s54, 1
          %s250 = smul.addr %s249, 4
          %s251 = scalar_lea.vmem [#allocation2], %s250
          %s253 = ssub.s32 64, 64
          %254 = vsyncadd %s248, %s253
          %s255 = sadd.s32 %s30, %s29
          %s256 = smul.addr %s28, 12
          %s257 = sadd.s32 %s255, %s256
          %s258 = smul.addr %s257, 64
          %s259 = scalar_lea.hbm %s0, %s258
          %s261 = sshll.u32 %s251, 4
          %s262 = int_to_ptr.vmem [resolvable:$true] %s261
          %264 = dma.hbm_to_vmem [thread:$0]  %s259, 64, %s262, %s248
        $region24: #{_lambda_.18} parent=19 // pred_fallthru
          _
        // Predicated region
        $region25: #{_lambda_.18} parent=19 // pred_check
          %p265 = pneg %p94
        $region26: #{_lambda_.18} parent=19 // pred_check_branch
          %267 = sbr.rel (%p265) target = $region28
        $region27: #{_lambda_.18} parent=19 // pred_region
          %s268 = sand.u32 %s21, 1
          %s269 = scalar_lea.sflag [#allocation6], %s268
          %s270 = sand.u32 %s84, 1
          %s271 = smul.addr %s270, 4
          %s272 = scalar_lea.vmem [#allocation5], %s271
          %s273 = sadd.s32 %s29, 4
          %s275 = ssub.s32 64, 64
          %276 = vsyncadd %s269, %s275
          %s277 = smul.addr %s28, 12
          %s278 = sadd.s32 %s273, %s277
          %s279 = smul.addr %s278, 64
          %s280 = scalar_lea.hbm %s1, %s279
          %s282 = sshll.u32 %s272, 4
          %s283 = int_to_ptr.vmem [resolvable:$true] %s282
          %285 = dma.hbm_to_vmem [thread:$0]  %s280, 64, %s283, %s269
        $region28: #{_lambda_.18} parent=19 // pred_fallthru
          _
        // Predicated region
        $region29: #{_lambda_.18} parent=19 // pred_check
          %p286 = pneg %p124
        $region30: #{_lambda_.18} parent=19 // pred_check_branch
          %288 = sbr.rel (%p286) target = $region32
        $region31: #{_lambda_.18} parent=19 // pred_region
          %s289 = sand.u32 %s21, 1
          %s290 = scalar_lea.sflag [#allocation6], %s289
          %s291 = sand.u32 %s114, 1
          %s292 = smul.addr %s291, 4
          %s293 = scalar_lea.vmem [#allocation7], %s292
          %s294 = sadd.s32 %s29, 8
          %s296 = ssub.s32 64, 64
          %297 = vsyncadd %s290, %s296
          %s298 = smul.addr %s28, 12
          %s299 = sadd.s32 %s294, %s298
          %s300 = smul.addr %s299, 64
          %s301 = scalar_lea.hbm %s2, %s300
          %s303 = sshll.u32 %s293, 4
          %s304 = int_to_ptr.vmem [resolvable:$true] %s303
          %306 = dma.hbm_to_vmem [thread:$0]  %s301, 64, %s304, %s290
        $region32: #{_lambda_.18} parent=19 // pred_fallthru
          _
        // Predicated region
        $region33: #{_lambda_.18} parent=19 // pred_check
          %p307 = pneg %p176
        $region34: #{_lambda_.18} parent=19 // pred_check_branch
          %309 = sbr.rel (%p307) target = $region36
        $region35: #{_lambda_.18} parent=19 // pred_region
          %s310 = sand.u32 %s21, 1
          %s311 = scalar_lea.sflag [#allocation3], %s310
          %s312 = sand.u32 %s166, 1
          %s313 = scalar_lea.vmem [#allocation10], %s312
          %s315 = ssub.s32 16, 16
          %316 = vsyncadd %s311, %s315
          %s317 = smul.addr %s28, 16
          %s318 = scalar_lea.hbm %s4, %s317
          %s320 = sshll.u32 %s313, 4
          %s321 = int_to_ptr.vmem [resolvable:$true] %s320
          %323 = dma.hbm_to_vmem [thread:$0]  %s318, 16, %s321, %s311
        $region36: #{_lambda_.18} parent=19 // pred_fallthru
          _
      $region20: #{_lambda_.18} parent=5 // pred_fallthru
        _
      %p324 = scmp.le.s32.totalorder 1, %s21
      %p325 = scmp.lt.s32.totalorder %s21, 9
      %p326 = pnand %p324, %p325
      %p327 = pneg %p326
      // Predicated region
      $region37: #{_lambda_.18} parent=5 // pred_check
        _
      $region38: #{_lambda_.18} parent=5 // pred_check_branch
        %329 = sbr.rel (%p326) target = $region40
      $region39: #{_lambda_.18} parent=5 // pred_region
        %s330 = ssub.s32 %s21, 1
        %s331 = sand.u32 %s26, 1
        %s332 = scalar_lea.sflag [#allocation3], %s331
        %s333 = sand.u32 %s57, 1
        %s334 = smul.addr %s333, 4
        %s335 = scalar_lea.vmem [#allocation2], %s334
        // Predicated region
        $region41: #{_lambda_.18} parent=39 // pred_check
          %p336 = pneg %p70
        $region42: #{_lambda_.18} parent=39 // pred_check_branch
          %338 = sbr.rel (%p336) target = $region44
        $region43: #{_lambda_.18} parent=39 // pred_region
          %339 = dma.done %s332, 64
        $region44: #{_lambda_.18} parent=39 // pred_fallthru
          _
        %s340 = sand.u32 %s26, 1
        %s341 = scalar_lea.sflag [#allocation6], %s340
        %s342 = sand.u32 %s87, 1
        %s343 = smul.addr %s342, 4
        %s344 = scalar_lea.vmem [#allocation5], %s343
        // Predicated region
        $region45: #{_lambda_.18} parent=39 // pred_check
          %p345 = pneg %p100
        $region46: #{_lambda_.18} parent=39 // pred_check_branch
          %347 = sbr.rel (%p345) target = $region48
        $region47: #{_lambda_.18} parent=39 // pred_region
          %348 = dma.done %s341, 64
        $region48: #{_lambda_.18} parent=39 // pred_fallthru
          _
        %s349 = sand.u32 %s26, 1
        %s350 = scalar_lea.sflag [#allocation6], %s349
        %s351 = sand.u32 %s117, 1
        %s352 = smul.addr %s351, 4
        %s353 = scalar_lea.vmem [#allocation7], %s352
        // Predicated region
        $region49: #{_lambda_.18} parent=39 // pred_check
          %p354 = pneg %p130
        $region50: #{_lambda_.18} parent=39 // pred_check_branch
          %356 = sbr.rel (%p354) target = $region52
        $region51: #{_lambda_.18} parent=39 // pred_region
          %357 = dma.done %s350, 64
        $region52: #{_lambda_.18} parent=39 // pred_fallthru
          _
        // Predicated region
        $region53: #{_lambda_.18} parent=39 // pred_check
          %p358 = pneg %p156
        $region54: #{_lambda_.18} parent=39 // pred_check_branch
          %360 = sbr.rel (%p358) target = $region56
        $region55: #{_lambda_.18} parent=39 // pred_region
          %361 = dma.done [#allocation9], 128
        $region56: #{_lambda_.18} parent=39 // pred_fallthru
          _
        %s362 = sand.u32 %s26, 1
        %s363 = scalar_lea.sflag [#allocation3], %s362
        %s364 = sand.u32 %s169, 1
        %s365 = scalar_lea.vmem [#allocation10], %s364
        // Predicated region
        $region57: #{_lambda_.18} parent=39 // pred_check
          %p366 = pneg %p182
        $region58: #{_lambda_.18} parent=39 // pred_check_branch
          %368 = sbr.rel (%p366) target = $region60
        $region59: #{_lambda_.18} parent=39 // pred_region
          %369 = dma.done %s363, 16
        $region60: #{_lambda_.18} parent=39 // pred_fallthru
          _
        %s370 = sand.u32 %s26, 1
        %s371 = scalar_lea.sflag [#allocation3], %s370
        %s372 = sand.u32 %s57, 1
        %s373 = smul.addr %s372, 4
        %s374 = scalar_lea.vmem [#allocation2], %s373
        %p375 = pneg %p70
        %p376 = pneg %p67
        %s377 = sand.u32 %s26, 1
        %s378 = scalar_lea.sflag [#allocation6], %s377
        %s379 = sand.u32 %s87, 1
        %s380 = smul.addr %s379, 4
        %s381 = scalar_lea.vmem [#allocation5], %s380
        %p382 = pneg %p100
        %p383 = pneg %p97
        %s384 = sand.u32 %s26, 1
        %s385 = scalar_lea.sflag [#allocation6], %s384
        %s386 = sand.u32 %s117, 1
        %s387 = smul.addr %s386, 4
        %s388 = scalar_lea.vmem [#allocation7], %s387
        %p389 = pneg %p130
        %p390 = pneg %p127
        %p391 = pneg %p156
        %p392 = pneg %p153
        %s393 = sand.u32 %s26, 1
        %s394 = scalar_lea.sflag [#allocation3], %s393
        %s395 = sand.u32 %s169, 1
        %s396 = scalar_lea.vmem [#allocation10], %s395
        %p397 = pneg %p182
        %p398 = pneg %p179
        %p399 = pneg %p212
        %p400 = pneg %p209
        %s401 = sand.u32 %s199, 1
        %s402 = scalar_lea.sflag [#allocation4], %s401
        %s403 = sand.u32 %s199, 1
        %s404 = smul.addr %s403, 4
        %s405 = scalar_lea.vmem [#allocation11], %s404
        %s406 = sadd.s32 %s32, 4
        %s407 = sadd.s32 %s32, 8
        %v409 = vld [vmem:[%s335] sm:$0xf]
        %v410 = vld [vmem:[%s344] sm:$0xf]
        %v411 = vld [vmem:[%s353] sm:$0xf]
        %v412 = vld [vmem:[#allocation8] sm:$0xff]
        %vm413 = vcmask 261120
        %v415 = vsel %vm413, %v409, 0
        %v418 = vsel %vm413, %v410, 0
        %420 = vmatprep.subr.bf16.mxu0 0
        %421 = vmatpush1.bf16.xpose.msra.mxu0 %v418
        %422 = vmatprep.subr.bf16.mxu0 0
        %423 = vmatpush1.bf16.xpose.msra.mxu0 0
        %424 = vmatprep.subr.bf16.mxu0 0
        %425 = vmatpush1.bf16.xpose.msra.mxu0 0
        %426 = vmatprep.subr.bf16.mxu0 0
        %427 = vmatpush1.bf16.xpose.msra.mxu0 0
        %428 = vmatprep.subr.bf16.mxu0 0
        %429 = vmatpush1.bf16.xpose.msra.mxu0 0
        %430 = vmatprep.subr.bf16.mxu0 0
        %431 = vmatpush1.bf16.xpose.msra.mxu0 0
        %432 = vmatprep.subr.bf16.mxu0 0
        %433 = vmatpush1.bf16.xpose.msra.mxu0 0
        %434 = vmatprep.subr.bf16.mxu0 0
        %435 = vmatpush1.bf16.xpose.msra.mxu0 0
        %436 = vmatprep.subr.bf16.mxu0 0
        %437 = vmatpush1.bf16.xpose.msra.mxu0 0
        %438 = vmatprep.subr.bf16.mxu0 0
        %439 = vmatpush1.bf16.xpose.msra.mxu0 0
        %440 = vmatprep.subr.bf16.mxu0 0
        %441 = vmatpush1.bf16.xpose.msra.mxu0 0
        %442 = vmatprep.subr.bf16.mxu0 0
        %443 = vmatpush1.bf16.xpose.msra.mxu0 0
        %444 = vmatprep.subr.bf16.mxu0 0
        %445 = vmatpush1.bf16.xpose.msra.mxu0 0
        %446 = vmatprep.subr.bf16.mxu0 0
        %447 = vmatpush1.bf16.xpose.msra.mxu0 0
        %448 = vmatprep.subr.bf16.mxu0 0
        %449 = vmatpush1.bf16.xpose.msra.mxu0 0
        %450 = vmatprep.subr.bf16.mxu0 0
        %451 = vmatpush1.bf16.xpose.msra.mxu0 0
        %452 = vmatprep.mubr.bf16.mxu0 0
        %453 = vmatmul.mubr.bf16.gmra.mrb[0].mxu0 %v415
        %v454 = vpop.f32.mrb[0].mxu0
        %v455 = vadd.f32 %v412, %v454
        %v456 = vpop.f32.mrb[0].mxu0
        %v457 = vpop.f32.mrb[0].mxu0
        %v458 = vpop.f32.mrb[0].mxu0
        %459 = vdwg.mxu0
        %v460 = vld [vmem:[%s365] sm:$0x1]
        %v462 = vlaneseq
        %v463 = vshrl.u32 %v462, 7
        %v464 = vsub.s32 0, %v463
        %v465 = vrot.slane %v460, %v464
        %v467 = vadd.f32 %v455, %v465
        %vm468 = vcmask 64512
        %v469 = vsel %vm468, %v467, -inf
        %470 = vmax.xlane.f32.xlu0 %v469
        %v471 = vpop.xlane.xlu0 %470
        %v472 = vsub.f32 %v467, %v471
        %v473 = vmul.f32 %v472, 1.442695
        %v474 = vpow.pop %v473
        %v475 = vsel %vm468, %v474, 0.0
        %476 = vadd.xlane.f32.xlu0 %v475
        %v477 = vpop.xlane.xlu0 %476
        %v478 = vrcp.pop %v477
        %v479 = vmul.f32 %v474, %v478
        %v480 = vpack.c.bf16 %v479, %v479
        %v482 = vsel %vm468, %v480, 0
        %vm484 = vcmask 1043456
        %v486 = vsel %vm484, %v411, 0
        %488 = vmatprep.subr.bf16.mxu0 0
        %489 = vmatpush1.bf16.msra.mxu0 %v486
        %490 = vmatprep.subr.bf16.mxu0 0
        %491 = vmatpush1.bf16.msra.mxu0 0
        %492 = vmatprep.subr.bf16.mxu0 0
        %493 = vmatpush1.bf16.msra.mxu0 0
        %494 = vmatprep.subr.bf16.mxu0 0
        %495 = vmatpush1.bf16.msra.mxu0 0
        %496 = vmatprep.subr.bf16.mxu0 0
        %497 = vmatpush1.bf16.msra.mxu0 0
        %498 = vmatprep.subr.bf16.mxu0 0
        %499 = vmatpush1.bf16.msra.mxu0 0
        %500 = vmatprep.subr.bf16.mxu0 0
        %501 = vmatpush1.bf16.msra.mxu0 0
        %502 = vmatprep.subr.bf16.mxu0 0
        %503 = vmatpush1.bf16.msra.mxu0 0
        %504 = vmatprep.subr.bf16.mxu0 0
        %505 = vmatpush1.bf16.msra.mxu0 0
        %506 = vmatprep.subr.bf16.mxu0 0
        %507 = vmatpush1.bf16.msra.mxu0 0
        %508 = vmatprep.subr.bf16.mxu0 0
        %509 = vmatpush1.bf16.msra.mxu0 0
        %510 = vmatprep.subr.bf16.mxu0 0
        %511 = vmatpush1.bf16.msra.mxu0 0
        %512 = vmatprep.subr.bf16.mxu0 0
        %513 = vmatpush1.bf16.msra.mxu0 0
        %514 = vmatprep.subr.bf16.mxu0 0
        %515 = vmatpush1.bf16.msra.mxu0 0
        %516 = vmatprep.subr.bf16.mxu0 0
        %517 = vmatpush1.bf16.msra.mxu0 0
        %518 = vmatprep.subr.bf16.mxu0 0
        %519 = vmatpush1.bf16.msra.mxu0 0
        %520 = vmatprep.mubr.bf16.mxu0 0
        %521 = vmatmul.mubr.bf16.gmra.mrb[0].mxu0 %v482
        %v522 = vpop.f32.mrb[0].mxu0
        %v523 = vadd.f32 0.0, %v522
        %v524 = vpop.f32.mrb[0].mxu0
        %v525 = vpop.f32.mrb[0].mxu0
        %v526 = vpop.f32.mrb[0].mxu0
        %527 = vdwg.mxu0
        %v528 = vpack.c.bf16 %v523, %v523
        %vm529 = vcmask 257024
        %530 = vst.msk [vmem:[%s405] sm:$0xf] %vm529, %v528
        %s531 = sand.u32 %s199, 1
        %s532 = scalar_lea.sflag [#allocation4], %s531
        %s533 = sand.u32 %s199, 1
        %s534 = smul.addr %s533, 4
        %s535 = scalar_lea.vmem [#allocation11], %s534
        // Predicated region
        $region61: #{_lambda_.18} parent=39 // pred_check
          %p536 = pneg %p209
        $region62: #{_lambda_.18} parent=39 // pred_check_branch
          %538 = sbr.rel (%p536) target = $region64
        $region63: #{_lambda_.18} parent=39 // pred_region
          %s540 = ssub.s32 64, 64
          %541 = vsyncadd %s532, %s540
          %s542 = sadd.s32 %s33, %s32
          %s543 = smul.addr %s31, 4
          %s544 = sadd.s32 %s542, %s543
          %s545 = smul.addr %s544, 64
          %s546 = scalar_lea.hbm %s5, %s545
          %s548 = sshll.u32 %s535, 4
          %s549 = int_to_ptr.vmem [resolvable:$true] %s548
          %551 = dma.vmem_to_hbm [thread:$0]  %s549, 64, %s546, %s532
        $region64: #{_lambda_.18} parent=39 // pred_fallthru
          _
      $region40: #{_lambda_.18} parent=5 // pred_fallthru
        _
      %p552 = scmp.le.s32.totalorder 2, %s21
      // Predicated region
      $region65: #{_lambda_.18} parent=5 // pred_check
        %p553 = pneg %p552
      $region66: #{_lambda_.18} parent=5 // pred_check_branch
        %555 = sbr.rel (%p553) target = $region68
      $region67: #{_lambda_.18} parent=5 // pred_region
        %s556 = ssub.s32 %s21, 2
        // Predicated region
        $region69: #{_lambda_.18} parent=67 // pred_check
          %p557 = pneg %p215
        $region70: #{_lambda_.18} parent=67 // pred_check_branch
          %559 = sbr.rel (%p557) target = $region72
        $region71: #{_lambda_.18} parent=67 // pred_region
          %s560 = sand.u32 %s200, 1
          %s561 = scalar_lea.sflag [#allocation4], %s560
          %s562 = sand.u32 %s200, 1
          %s563 = smul.addr %s562, 4
          %s564 = scalar_lea.vmem [#allocation11], %s563
          %565 = dma.done %s561, 64
        $region72: #{_lambda_.18} parent=67 // pred_fallthru
          _
      $region68: #{_lambda_.18} parent=5 // pred_fallthru
        _
    $region6: #{_lambda_.18} parent=1 // loop_footer
      %s25 = sadd.s32 1, %s21
    $region7: #{_lambda_.18} parent=1 // loop_footer_branch
      %20 = sbr.rel target = $region3
    $region8: #{_lambda_.18} parent=1 // loop_exit
      _
    %566 = vsyncpa [#allocation3], 1
    %s567 = scalar_lea.sflag [#allocation3], 1
    %568 = vsyncpa %s567, 1
    %569 = vsyncpa [#allocation6], 1
    %s570 = scalar_lea.sflag [#allocation6], 1
    %571 = vsyncpa %s570, 1
    %572 = vsyncpa [#allocation9], 1
    %573 = vsyncpa [#allocation4], 1
    %s574 = scalar_lea.sflag [#allocation4], 1
    %575 = vsyncpa %s574, 1

// kernel: _lambda_.17
$region0: #{_lambda_.17}
  #allocation0 [shape = 'u32[]', space=smem, size = 0x4, offset = 0x4, fixed_abs, tag = 'smem constant byte address 0x4 - core index']
  #allocation1 [shape = 'u32[144,128]{1,0:T(1,128)}', space=vmem, size = 0x12000, scoped, tag = 'internal scratch']
  %s0 = inlined_call_operand.hbm [shape: bf16[16,128], index: 0, kind: input, shape index: {}]
  %s1 = inlined_call_operand.hbm [shape: bf16[128,384], index: 1, kind: input, shape index: {}]
  %s2 = inlined_call_operand.hbm [shape: f32[1,384], index: 2, kind: input, shape index: {}]
  %s3 = inlined_call_operand.hbm [shape: bf16[16,384], index: 3, kind: output, shape index: {}]
  %s4 = sld [smem:[#allocation0]]
  $region34: #{_lambda_.17} parent=0
    _
  %s6 = ssub.s32 1, %s4
  %s7 = scalar_select 0, %s6, %s4
  $region1: #{_lambda_.17} parent=0
    #allocation2 [shape = 'u8[4096]{0}', space=vmem, size = 0x1000, scoped, tag = 'input window, operand 0, single buffered']
    #allocation3 [shape = 's32[1]{0}', space=sflag, size = 0x4, scoped, tag = 'scoped memory for _lambda_.17']
    #allocation4 [shape = 's32[1]{0}', space=sflag, size = 0x4, scoped, tag = 'scoped memory for _lambda_.17']
    #allocation5 [shape = 'u8[98304]{0}', space=vmem, size = 0x18000, scoped, tag = 'input window, operand 1, single buffered']
    #allocation6 [shape = 's32[1]{0}', space=sflag, size = 0x4, scoped, tag = 'scoped memory for _lambda_.17']
    #allocation7 [shape = 'u8[1536]{0}', space=vmem, size = 0x800, scoped, tag = 'input window, operand 2, single buffered']
    #allocation8 [shape = 'u8[12288]{0}', space=vmem, size = 0x3000, scoped, tag = 'output window, operand 0, single buffered']
    %8 = vsyncpa [#allocation3], 0
    %9 = vsyncpa [#allocation6], 0
    %10 = vsyncpa [#allocation4], 0
    // Predicated region
    $region2: #{_lambda_.17} parent=1 // pred_check
      _
    $region3: #{_lambda_.17} parent=1 // pred_check_branch
      %12 = sbr.rel (0) target = $region5
    $region4: #{_lambda_.17} parent=1 // pred_region
      %s14 = ssub.s32 128, 128
      %15 = vsyncadd [#allocation3], %s14
      %s16 = sshll.u32 [#allocation2], 4
      %s17 = int_to_ptr.vmem [resolvable:$true] %s16
      %22 = dma.hbm_to_vmem [thread:$0]  %s0, 128, %s17, [#allocation3], 64, 64, 4
    $region5: #{_lambda_.17} parent=1 // pred_fallthru
      _
    // Predicated region
    $region6: #{_lambda_.17} parent=1 // pred_check
      _
    $region7: #{_lambda_.17} parent=1 // pred_check_branch
      %24 = sbr.rel (0) target = $region9
    $region8: #{_lambda_.17} parent=1 // pred_region
      %s26 = ssub.s32 3072, 3072
      %27 = vsyncadd [#allocation6], %s26
      %s28 = sshll.u32 [#allocation5], 4
      %s29 = int_to_ptr.vmem [resolvable:$true] %s28
      %34 = dma.hbm_to_vmem [thread:$0]  %s1, 3072, %s29, [#allocation6], 192, 192, 12
    $region9: #{_lambda_.17} parent=1 // pred_fallthru
      _
    // Predicated region
    $region10: #{_lambda_.17} parent=1 // pred_check
      _
    $region11: #{_lambda_.17} parent=1 // pred_check_branch
      %36 = sbr.rel (0) target = $region13
    $region12: #{_lambda_.17} parent=1 // pred_region
      %s38 = ssub.s32 48, 48
      %39 = vsyncadd [#allocation6], %s38
      %s41 = sshll.u32 [#allocation7], 4
      %s42 = int_to_ptr.vmem [resolvable:$true] %s41
      %44 = dma.hbm_to_vmem [thread:$0]  %s2, 48, %s42, [#allocation6]
    $region13: #{_lambda_.17} parent=1 // pred_fallthru
      _
    // Predicated region
    $region14: #{_lambda_.17} parent=1 // pred_check
      _
    $region15: #{_lambda_.17} parent=1 // pred_check_branch
      %46 = sbr.rel (0) target = $region17
    $region16: #{_lambda_.17} parent=1 // pred_region
      %47 = dma.done [#allocation3], 128
    $region17: #{_lambda_.17} parent=1 // pred_fallthru
      _
    // Predicated region
    $region18: #{_lambda_.17} parent=1 // pred_check
      _
    $region19: #{_lambda_.17} parent=1 // pred_check_branch
      %49 = sbr.rel (0) target = $region21
    $region20: #{_lambda_.17} parent=1 // pred_region
      %50 = dma.done [#allocation6], 3072
    $region21: #{_lambda_.17} parent=1 // pred_fallthru
      _
    // Predicated region
    $region22: #{_lambda_.17} parent=1 // pred_check
      _
    $region23: #{_lambda_.17} parent=1 // pred_check_branch
      %52 = sbr.rel (0) target = $region25
    $region24: #{_lambda_.17} parent=1 // pred_region
      %53 = dma.done [#allocation6], 48
    $region25: #{_lambda_.17} parent=1 // pred_fallthru
      _
    %v55 = vld [vmem:[#allocation2] sm:$0xf]
    %v56 = vld [vmem:[#allocation2 + $0x4] sm:$0xf]
    %v57 = vld [vmem:[#allocation5] sm:$0xff]
    %v58 = vld [vmem:[#allocation5 + $0x8] sm:$0xf]
    %v59 = vld [vmem:[#allocation5 + $0xc] sm:$0xff]
    %v60 = vld [vmem:[#allocation5 + $0x14] sm:$0xf]
    %v61 = vld [vmem:[#allocation5 + $0x18] sm:$0xff]
    %v62 = vld [vmem:[#allocation5 + $0x20] sm:$0xf]
    %v63 = vld [vmem:[#allocation5 + $0x24] sm:$0xff]
    %v64 = vld [vmem:[#allocation5 + $0x2c] sm:$0xf]
    %v65 = vld [vmem:[#allocation5 + $0x30] sm:$0xff]
    %v66 = vld [vmem:[#allocation5 + $0x38] sm:$0xf]
    %v67 = vld [vmem:[#allocation5 + $0x3c] sm:$0xff]
    %v68 = vld [vmem:[#allocation5 + $0x44] sm:$0xf]
    %v69 = vld [vmem:[#allocation5 + $0x48] sm:$0xff]
    %v70 = vld [vmem:[#allocation5 + $0x50] sm:$0xf]
    %v71 = vld [vmem:[#allocation5 + $0x54] sm:$0xff]
    %v72 = vld [vmem:[#allocation5 + $0x5c] sm:$0xf]
    %v73 = vld [vmem:[#allocation5 + $0x60] sm:$0xff]
    %v74 = vld [vmem:[#allocation5 + $0x68] sm:$0xf]
    %v75 = vld [vmem:[#allocation5 + $0x6c] sm:$0xff]
    %v76 = vld [vmem:[#allocation5 + $0x74] sm:$0xf]
    %v77 = vld [vmem:[#allocation5 + $0x78] sm:$0xff]
    %v78 = vld [vmem:[#allocation5 + $0x80] sm:$0xf]
    %v79 = vld [vmem:[#allocation5 + $0x84] sm:$0xff]
    %v80 = vld [vmem:[#allocation5 + $0x8c] sm:$0xf]
    %v81 = vld [vmem:[#allocation5 + $0x90] sm:$0xff]
    %v82 = vld [vmem:[#allocation5 + $0x98] sm:$0xf]
    %v83 = vld [vmem:[#allocation5 + $0x9c] sm:$0xff]
    %v84 = vld [vmem:[#allocation5 + $0xa4] sm:$0xf]
    %v85 = vld [vmem:[#allocation5 + $0xa8] sm:$0xff]
    %v86 = vld [vmem:[#allocation5 + $0xb0] sm:$0xf]
    %v87 = vld [vmem:[#allocation5 + $0xb4] sm:$0xff]
    %v88 = vld [vmem:[#allocation5 + $0xbc] sm:$0xf]
    %v89 = vld [vmem:[#allocation7] sm:$0x7]
    %v91 = vlaneseq
    %v92 = vshrl.u32 %v91, 7
    %v93 = vsub.s32 0, %v92
    %v94 = vrot.slane %v89, %v93
    %v95 = vlaneseq
    %v96 = vshrl.u32 %v95, 7
    %v97 = vsub.s32 1, %v96
    %v98 = vrot.slane %v89, %v97
    %v99 = vlaneseq
    %v100 = vshrl.u32 %v99, 7
    %v101 = vsub.s32 2, %v100
    %v102 = vrot.slane %v89, %v101
    %v108 = vunpack.c.l.b16 %v55
    %v109 = vunpack.c.l.b16 %v56
    %v110 = vpack.c.b16 %v109, %v108
    %v144 = vunpack.c.l.b16 %v57
    %v145 = vunpack.c.h.b16 %v57
    %v146 = vunpack.c.l.b16 %v58
    %v147 = vunpack.c.l.b16 %v59
    %v148 = vunpack.c.h.b16 %v59
    %v149 = vunpack.c.l.b16 %v60
    %v150 = vunpack.c.l.b16 %v61
    %v151 = vunpack.c.h.b16 %v61
    %v152 = vunpack.c.l.b16 %v62
    %v153 = vunpack.c.l.b16 %v63
    %v154 = vunpack.c.h.b16 %v63
    %v155 = vunpack.c.l.b16 %v64
    %v156 = vunpack.c.l.b16 %v65
    %v157 = vunpack.c.h.b16 %v65
    %v158 = vunpack.c.l.b16 %v66
    %v159 = vunpack.c.l.b16 %v67
    %v160 = vunpack.c.h.b16 %v67
    %v161 = vunpack.c.l.b16 %v68
    %v162 = vunpack.c.l.b16 %v69
    %v163 = vunpack.c.h.b16 %v69
    %v164 = vunpack.c.l.b16 %v70
    %v165 = vunpack.c.l.b16 %v71
    %v166 = vunpack.c.h.b16 %v71
    %v167 = vunpack.c.l.b16 %v72
    %v168 = vunpack.c.l.b16 %v73
    %v169 = vunpack.c.h.b16 %v73
    %v170 = vunpack.c.l.b16 %v74
    %v171 = vunpack.c.l.b16 %v75
    %v172 = vunpack.c.h.b16 %v75
    %v173 = vunpack.c.l.b16 %v76
    %v174 = vunpack.c.l.b16 %v77
    %v175 = vunpack.c.h.b16 %v77
    %v176 = vunpack.c.l.b16 %v78
    %v177 = vunpack.c.l.b16 %v79
    %v178 = vunpack.c.h.b16 %v79
    %v179 = vunpack.c.l.b16 %v80
    %v180 = vunpack.c.l.b16 %v81
    %v181 = vunpack.c.h.b16 %v81
    %v182 = vunpack.c.l.b16 %v82
    %v183 = vunpack.c.l.b16 %v83
    %v184 = vunpack.c.h.b16 %v83
    %v185 = vunpack.c.l.b16 %v84
    %v186 = vunpack.c.l.b16 %v85
    %v187 = vunpack.c.h.b16 %v85
    %v188 = vunpack.c.l.b16 %v86
    %v189 = vunpack.c.l.b16 %v87
    %v190 = vunpack.c.h.b16 %v87
    %v191 = vunpack.c.l.b16 %v88
    %v192 = vpack.c.b16 %v147, %v144
    %v193 = vpack.c.b16 %v148, %v145
    %v194 = vpack.c.b16 %v149, %v146
    %v195 = vpack.c.b16 %v153, %v150
    %v196 = vpack.c.b16 %v154, %v151
    %v197 = vpack.c.b16 %v155, %v152
    %v198 = vpack.c.b16 %v159, %v156
    %v199 = vpack.c.b16 %v160, %v157
    %v200 = vpack.c.b16 %v161, %v158
    %v201 = vpack.c.b16 %v165, %v162
    %v202 = vpack.c.b16 %v166, %v163
    %v203 = vpack.c.b16 %v167, %v164
    %v204 = vpack.c.b16 %v171, %v168
    %v205 = vpack.c.b16 %v172, %v169
    %v206 = vpack.c.b16 %v173, %v170
    %v207 = vpack.c.b16 %v177, %v174
    %v208 = vpack.c.b16 %v178, %v175
    %v209 = vpack.c.b16 %v179, %v176
    %v210 = vpack.c.b16 %v183, %v180
    %v211 = vpack.c.b16 %v184, %v181
    %v212 = vpack.c.b16 %v185, %v182
    %v213 = vpack.c.b16 %v189, %v186
    %v214 = vpack.c.b16 %v190, %v187
    %v215 = vpack.c.b16 %v191, %v188
    %240 = vmatprep.subr.bf16.mxu0 %v193
    %241 = vmatpush1.bf16.msra.mxu0 %v192
    %242 = vmatprep.subr.bf16.mxu0 %v196
    %243 = vmatpush1.bf16.msra.mxu0 %v195
    %244 = vmatprep.subr.bf16.mxu0 %v199
    %245 = vmatpush1.bf16.msra.mxu0 %v198
    %246 = vmatprep.subr.bf16.mxu0 %v202
    %247 = vmatpush1.bf16.msra.mxu0 %v201
    %248 = vmatprep.subr.bf16.mxu0 %v205
    %249 = vmatpush1.bf16.msra.mxu0 %v204
    %250 = vmatprep.subr.bf16.mxu0 %v208
    %251 = vmatpush1.bf16.msra.mxu0 %v207
    %252 = vmatprep.subr.bf16.mxu0 %v211
    %253 = vmatpush1.bf16.msra.mxu0 %v210
    %254 = vmatprep.subr.bf16.mxu0 %v214
    %255 = vmatpush1.bf16.msra.mxu0 %v213
    %256 = vmatprep.subr.bf16.mxu0 0
    %257 = vmatpush1.bf16.msra.mxu0 0
    %258 = vmatprep.subr.bf16.mxu0 0
    %259 = vmatpush1.bf16.msra.mxu0 0
    %260 = vmatprep.subr.bf16.mxu0 0
    %261 = vmatpush1.bf16.msra.mxu0 0
    %262 = vmatprep.subr.bf16.mxu0 0
    %263 = vmatpush1.bf16.msra.mxu0 0
    %264 = vmatprep.subr.bf16.mxu0 0
    %265 = vmatpush1.bf16.msra.mxu0 0
    %266 = vmatprep.subr.bf16.mxu0 0
    %267 = vmatpush1.bf16.msra.mxu0 0
    %268 = vmatprep.subr.bf16.mxu0 0
    %269 = vmatpush1.bf16.msra.mxu0 0
    %270 = vmatprep.subr.bf16.mxu0 0
    %271 = vmatpush1.bf16.msra.mxu0 0
    %272 = vmatprep.mubr.bf16.mxu0 0
    %273 = vmatmul.mubr.bf16.gmra.mrb[0].mxu0 %v110
    %v274 = vpop.f32.mrb[0].mxu0
    %v275 = vadd.f32 %v94, %v274
    %v276 = vpop.f32.mrb[0].mxu0
    %v277 = vadd.f32 %v98, %v276
    %v278 = vpop.f32.mrb[0].mxu0
    %v279 = vadd.f32 %v94, %v278
    %v280 = vpop.f32.mrb[0].mxu0
    %v281 = vadd.f32 %v98, %v280
    %282 = vdwg.mxu0
    %283 = vmatprep.subr.bf16.mxu0 0
    %284 = vmatpush1.bf16.msra.mxu0 %v194
    %285 = vmatprep.subr.bf16.mxu0 0
    %286 = vmatpush1.bf16.msra.mxu0 %v197
    %287 = vmatprep.subr.bf16.mxu0 0
    %288 = vmatpush1.bf16.msra.mxu0 %v200
    %289 = vmatprep.subr.bf16.mxu0 0
    %290 = vmatpush1.bf16.msra.mxu0 %v203
    %291 = vmatprep.subr.bf16.mxu0 0
    %292 = vmatpush1.bf16.msra.mxu0 %v206
    %293 = vmatprep.subr.bf16.mxu0 0
    %294 = vmatpush1.bf16.msra.mxu0 %v209
    %295 = vmatprep.subr.bf16.mxu0 0
    %296 = vmatpush1.bf16.msra.mxu0 %v212
    %297 = vmatprep.subr.bf16.mxu0 0
    %298 = vmatpush1.bf16.msra.mxu0 %v215
    %299 = vmatprep.subr.bf16.mxu0 0
    %300 = vmatpush1.bf16.msra.mxu0 0
    %301 = vmatprep.subr.bf16.mxu0 0
    %302 = vmatpush1.bf16.msra.mxu0 0
    %303 = vmatprep.subr.bf16.mxu0 0
    %304 = vmatpush1.bf16.msra.mxu0 0
    %305 = vmatprep.subr.bf16.mxu0 0
    %306 = vmatpush1.bf16.msra.mxu0 0
    %307 = vmatprep.subr.bf16.mxu0 0
    %308 = vmatpush1.bf16.msra.mxu0 0
    %309 = vmatprep.subr.bf16.mxu0 0
    %310 = vmatpush1.bf16.msra.mxu0 0
    %311 = vmatprep.subr.bf16.mxu0 0
    %312 = vmatpush1.bf16.msra.mxu0 0
    %313 = vmatprep.subr.bf16.mxu0 0
    %314 = vmatpush1.bf16.msra.mxu0 0
    %315 = vmatprep.mubr.bf16.mxu0 0
    %316 = vmatmul.mubr.bf16.gmra.mrb[0].mxu0 %v110
    %v317 = vpop.f32.mrb[0].mxu0
    %v318 = vadd.f32 %v102, %v317
    %v319 = vpop.f32.mrb[0].mxu0
    %v320 = vpop.f32.mrb[0].mxu0
    %v321 = vadd.f32 %v102, %v320
    %v322 = vpop.f32.mrb[0].mxu0
    %323 = vdwg.mxu0
    %v324 = vpack.c.bf16 %v279, %v275
    %v325 = vpack.c.bf16 %v281, %v277
    %v326 = vpack.c.bf16 %v321, %v318
    %v330 = vunpack.c.l.b16 %v324
    %v331 = vunpack.c.l.b16 %v325
    %v332 = vunpack.c.l.b16 %v326
    %v333 = vunpack.c.h.b16 %v324
    %v334 = vunpack.c.h.b16 %v325
    %v335 = vunpack.c.h.b16 %v326
    %v336 = vpack.c.b16 %v331, %v330
    %v337 = vpack.c.b16 %v332, %v332
    %v338 = vpack.c.b16 %v334, %v333
    %v339 = vpack.c.b16 %v335, %v335
    %344 = vst [vmem:[#allocation8] sm:$0xff] %v336
    %345 = vst [vmem:[#allocation8 + $0x8] sm:$0xf] %v337
    %346 = vst [vmem:[#allocation8 + $0xc] sm:$0xff] %v338
    %347 = vst [vmem:[#allocation8 + $0x14] sm:$0xf] %v339
    // Predicated region
    $region26: #{_lambda_.17} parent=1 // pred_check
      _
    $region27: #{_lambda_.17} parent=1 // pred_check_branch
      %349 = sbr.rel (0) target = $region29
    $region28: #{_lambda_.17} parent=1 // pred_region
      %s351 = ssub.s32 384, 384
      %352 = vsyncadd [#allocation4], %s351
      %s353 = sshll.u32 [#allocation8], 4
      %s354 = int_to_ptr.vmem [resolvable:$true] %s353
      %359 = dma.vmem_to_hbm [thread:$0]  %s354, 384, %s3, [#allocation4], 192, 192, 12
    $region29: #{_lambda_.17} parent=1 // pred_fallthru
      _
    // Predicated region
    $region30: #{_lambda_.17} parent=1 // pred_check
      _
    $region31: #{_lambda_.17} parent=1 // pred_check_branch
      %361 = sbr.rel (0) target = $region33
    $region32: #{_lambda_.17} parent=1 // pred_region
      %362 = dma.done [#allocation4], 384
    $region33: #{_lambda_.17} parent=1 // pred_fallthru
      _
    %363 = vsyncpa [#allocation3], 1
    %364 = vsyncpa [#allocation6], 1
    %365 = vsyncpa [#allocation4], 1

// kernel: _lambda_.20
$region0: #{_lambda_.20}
  #allocation0 [shape = 'u32[]', space=smem, size = 0x4, offset = 0x4, fixed_abs, tag = 'smem constant byte address 0x4 - core index']
  #allocation1 [shape = 'u32[144,128]{1,0:T(1,128)}', space=vmem, size = 0x12000, scoped, tag = 'internal scratch']
  %s0 = inlined_call_operand.hbm [shape: bf16[16,128], index: 0, kind: input, shape index: {}]
  %s1 = inlined_call_operand.hbm [shape: bf16[128,128], index: 1, kind: input, shape index: {}]
  %s2 = inlined_call_operand.hbm [shape: f32[1,128], index: 2, kind: input, shape index: {}]
  %s3 = inlined_call_operand.hbm [shape: bf16[16,128], index: 3, kind: output, shape index: {}]
  %s4 = sld [smem:[#allocation0]]
  $region34: #{_lambda_.20} parent=0
    _
  %s6 = ssub.s32 1, %s4
  %s7 = scalar_select 0, %s6, %s4
  $region1: #{_lambda_.20} parent=0
    #allocation2 [shape = 'u8[4096]{0}', space=vmem, size = 0x1000, scoped, tag = 'input window, operand 0, single buffered']
    #allocation3 [shape = 's32[1]{0}', space=sflag, size = 0x4, scoped, tag = 'scoped memory for _lambda_.20']
    #allocation4 [shape = 's32[1]{0}', space=sflag, size = 0x4, scoped, tag = 'scoped memory for _lambda_.20']
    #allocation5 [shape = 'u8[32768]{0}', space=vmem, size = 0x8000, scoped, tag = 'input window, operand 1, single buffered']
    #allocation6 [shape = 's32[1]{0}', space=sflag, size = 0x4, scoped, tag = 'scoped memory for _lambda_.20']
    #allocation7 [shape = 'u8[512]{0}', space=vmem, size = 0x400, scoped, tag = 'input window, operand 2, single buffered']
    #allocation8 [shape = 'u8[4096]{0}', space=vmem, size = 0x1000, scoped, tag = 'output window, operand 0, single buffered']
    %8 = vsyncpa [#allocation3], 0
    %9 = vsyncpa [#allocation6], 0
    %10 = vsyncpa [#allocation4], 0
    // Predicated region
    $region2: #{_lambda_.20} parent=1 // pred_check
      _
    $region3: #{_lambda_.20} parent=1 // pred_check_branch
      %12 = sbr.rel (0) target = $region5
    $region4: #{_lambda_.20} parent=1 // pred_region
      %s14 = ssub.s32 128, 128
      %15 = vsyncadd [#allocation3], %s14
      %s16 = sshll.u32 [#allocation2], 4
      %s17 = int_to_ptr.vmem [resolvable:$true] %s16
      %22 = dma.hbm_to_vmem [thread:$0]  %s0, 128, %s17, [#allocation3], 64, 64, 4
    $region5: #{_lambda_.20} parent=1 // pred_fallthru
      _
    // Predicated region
    $region6: #{_lambda_.20} parent=1 // pred_check
      _
    $region7: #{_lambda_.20} parent=1 // pred_check_branch
      %24 = sbr.rel (0) target = $region9
    $region8: #{_lambda_.20} parent=1 // pred_region
      %s26 = ssub.s32 1024, 1024
      %27 = vsyncadd [#allocation6], %s26
      %s28 = sshll.u32 [#allocation5], 4
      %s29 = int_to_ptr.vmem [resolvable:$true] %s28
      %34 = dma.hbm_to_vmem [thread:$0]  %s1, 1024, %s29, [#allocation6], 64, 64, 4
    $region9: #{_lambda_.20} parent=1 // pred_fallthru
      _
    // Predicated region
    $region10: #{_lambda_.20} parent=1 // pred_check
      _
    $region11: #{_lambda_.20} parent=1 // pred_check_branch
      %36 = sbr.rel (0) target = $region13
    $region12: #{_lambda_.20} parent=1 // pred_region
      %s38 = ssub.s32 16, 16
      %39 = vsyncadd [#allocation6], %s38
      %s41 = sshll.u32 [#allocation7], 4
      %s42 = int_to_ptr.vmem [resolvable:$true] %s41
      %44 = dma.hbm_to_vmem [thread:$0]  %s2, 16, %s42, [#allocation6]
    $region13: #{_lambda_.20} parent=1 // pred_fallthru
      _
    // Predicated region
    $region14: #{_lambda_.20} parent=1 // pred_check
      _
    $region15: #{_lambda_.20} parent=1 // pred_check_branch
      %46 = sbr.rel (0) target = $region17
    $region16: #{_lambda_.20} parent=1 // pred_region
      %47 = dma.done [#allocation3], 128
    $region17: #{_lambda_.20} parent=1 // pred_fallthru
      _
    // Predicated region
    $region18: #{_lambda_.20} parent=1 // pred_check
      _
    $region19: #{_lambda_.20} parent=1 // pred_check_branch
      %49 = sbr.rel (0) target = $region21
    $region20: #{_lambda_.20} parent=1 // pred_region
      %50 = dma.done [#allocation6], 1024
    $region21: #{_lambda_.20} parent=1 // pred_fallthru
      _
    // Predicated region
    $region22: #{_lambda_.20} parent=1 // pred_check
      _
    $region23: #{_lambda_.20} parent=1 // pred_check_branch
      %52 = sbr.rel (0) target = $region25
    $region24: #{_lambda_.20} parent=1 // pred_region
      %53 = dma.done [#allocation6], 16
    $region25: #{_lambda_.20} parent=1 // pred_fallthru
      _
    %v55 = vld [vmem:[#allocation2] sm:$0xf]
    %v56 = vld [vmem:[#allocation2 + $0x4] sm:$0xf]
    %v57 = vld [vmem:[#allocation5] sm:$0xf]
    %v58 = vld [vmem:[#allocation5 + $0x4] sm:$0xf]
    %v59 = vld [vmem:[#allocation5 + $0x8] sm:$0xf]
    %v60 = vld [vmem:[#allocation5 + $0xc] sm:$0xf]
    %v61 = vld [vmem:[#allocation5 + $0x10] sm:$0xf]
    %v62 = vld [vmem:[#allocation5 + $0x14] sm:$0xf]
    %v63 = vld [vmem:[#allocation5 + $0x18] sm:$0xf]
    %v64 = vld [vmem:[#allocation5 + $0x1c] sm:$0xf]
    %v65 = vld [vmem:[#allocation5 + $0x20] sm:$0xf]
    %v66 = vld [vmem:[#allocation5 + $0x24] sm:$0xf]
    %v67 = vld [vmem:[#allocation5 + $0x28] sm:$0xf]
    %v68 = vld [vmem:[#allocation5 + $0x2c] sm:$0xf]
    %v69 = vld [vmem:[#allocation5 + $0x30] sm:$0xf]
    %v70 = vld [vmem:[#allocation5 + $0x34] sm:$0xf]
    %v71 = vld [vmem:[#allocation5 + $0x38] sm:$0xf]
    %v72 = vld [vmem:[#allocation5 + $0x3c] sm:$0xf]
    %v73 = vld [vmem:[#allocation7] sm:$0x1]
    %v75 = vlaneseq
    %v76 = vshrl.u32 %v75, 7
    %v77 = vsub.s32 0, %v76
    %v78 = vrot.slane %v73, %v77
    %v82 = vunpack.c.l.b16 %v55
    %v83 = vunpack.c.l.b16 %v56
    %v84 = vpack.c.b16 %v83, %v82
    %v102 = vunpack.c.l.b16 %v57
    %v103 = vunpack.c.l.b16 %v58
    %v104 = vunpack.c.l.b16 %v59
    %v105 = vunpack.c.l.b16 %v60
    %v106 = vunpack.c.l.b16 %v61
    %v107 = vunpack.c.l.b16 %v62
    %v108 = vunpack.c.l.b16 %v63
    %v109 = vunpack.c.l.b16 %v64
    %v110 = vunpack.c.l.b16 %v65
    %v111 = vunpack.c.l.b16 %v66
    %v112 = vunpack.c.l.b16 %v67
    %v113 = vunpack.c.l.b16 %v68
    %v114 = vunpack.c.l.b16 %v69
    %v115 = vunpack.c.l.b16 %v70
    %v116 = vunpack.c.l.b16 %v71
    %v117 = vunpack.c.l.b16 %v72
    %v118 = vpack.c.b16 %v103, %v102
    %v119 = vpack.c.b16 %v105, %v104
    %v120 = vpack.c.b16 %v107, %v106
    %v121 = vpack.c.b16 %v109, %v108
    %v122 = vpack.c.b16 %v111, %v110
    %v123 = vpack.c.b16 %v113, %v112
    %v124 = vpack.c.b16 %v115, %v114
    %v125 = vpack.c.b16 %v117, %v116
    %134 = vmatprep.subr.bf16.mxu0 0
    %135 = vmatpush1.bf16.msra.mxu0 %v118
    %136 = vmatprep.subr.bf16.mxu0 0
    %137 = vmatpush1.bf16.msra.mxu0 %v119
    %138 = vmatprep.subr.bf16.mxu0 0
    %139 = vmatpush1.bf16.msra.mxu0 %v120
    %140 = vmatprep.subr.bf16.mxu0 0
    %141 = vmatpush1.bf16.msra.mxu0 %v121
    %142 = vmatprep.subr.bf16.mxu0 0
    %143 = vmatpush1.bf16.msra.mxu0 %v122
    %144 = vmatprep.subr.bf16.mxu0 0
    %145 = vmatpush1.bf16.msra.mxu0 %v123
    %146 = vmatprep.subr.bf16.mxu0 0
    %147 = vmatpush1.bf16.msra.mxu0 %v124
    %148 = vmatprep.subr.bf16.mxu0 0
    %149 = vmatpush1.bf16.msra.mxu0 %v125
    %150 = vmatprep.subr.bf16.mxu0 0
    %151 = vmatpush1.bf16.msra.mxu0 0
    %152 = vmatprep.subr.bf16.mxu0 0
    %153 = vmatpush1.bf16.msra.mxu0 0
    %154 = vmatprep.subr.bf16.mxu0 0
    %155 = vmatpush1.bf16.msra.mxu0 0
    %156 = vmatprep.subr.bf16.mxu0 0
    %157 = vmatpush1.bf16.msra.mxu0 0
    %158 = vmatprep.subr.bf16.mxu0 0
    %159 = vmatpush1.bf16.msra.mxu0 0
    %160 = vmatprep.subr.bf16.mxu0 0
    %161 = vmatpush1.bf16.msra.mxu0 0
    %162 = vmatprep.subr.bf16.mxu0 0
    %163 = vmatpush1.bf16.msra.mxu0 0
    %164 = vmatprep.subr.bf16.mxu0 0
    %165 = vmatpush1.bf16.msra.mxu0 0
    %166 = vmatprep.mubr.bf16.mxu0 0
    %167 = vmatmul.mubr.bf16.gmra.mrb[0].mxu0 %v84
    %v168 = vpop.f32.mrb[0].mxu0
    %v169 = vadd.f32 %v78, %v168
    %v170 = vpop.f32.mrb[0].mxu0
    %v171 = vpop.f32.mrb[0].mxu0
    %v172 = vadd.f32 %v78, %v171
    %v173 = vpop.f32.mrb[0].mxu0
    %174 = vdwg.mxu0
    %v175 = vpack.c.bf16 %v172, %v169
    %v177 = vunpack.c.l.b16 %v175
    %v178 = vunpack.c.h.b16 %v175
    %v179 = vpack.c.b16 %v177, %v177
    %v180 = vpack.c.b16 %v178, %v178
    %183 = vst [vmem:[#allocation8] sm:$0xf] %v179
    %184 = vst [vmem:[#allocation8 + $0x4] sm:$0xf] %v180
    // Predicated region
    $region26: #{_lambda_.20} parent=1 // pred_check
      _
    $region27: #{_lambda_.20} parent=1 // pred_check_branch
      %186 = sbr.rel (0) target = $region29
    $region28: #{_lambda_.20} parent=1 // pred_region
      %s188 = ssub.s32 128, 128
      %189 = vsyncadd [#allocation4], %s188
      %s190 = sshll.u32 [#allocation8], 4
      %s191 = int_to_ptr.vmem [resolvable:$true] %s190
      %196 = dma.vmem_to_hbm [thread:$0]  %s191, 128, %s3, [#allocation4], 64, 64, 4
    $region29: #{_lambda_.20} parent=1 // pred_fallthru
      _
    // Predicated region
    $region30: #{_lambda_.20} parent=1 // pred_check
      _
    $region31: #{_lambda_.20} parent=1 // pred_check_branch
      %198 = sbr.rel (0) target = $region33
    $region32: #{_lambda_.20} parent=1 // pred_region
      %199 = dma.done [#allocation4], 128
    $region33: #{_lambda_.20} parent=1 // pred_fallthru
      _
    %200 = vsyncpa [#allocation3], 1
    %201 = vsyncpa [#allocation6], 1
    %202 = vsyncpa [#allocation4], 1

// kernel: _lambda_.19
$region0: #{_lambda_.19}
  #allocation0 [shape = 'u32[]', space=smem, size = 0x4, offset = 0x4, fixed_abs, tag = 'smem constant byte address 0x4 - core index']
  #allocation1 [shape = 'u32[144,128]{1,0:T(1,128)}', space=vmem, size = 0x12000, scoped, tag = 'internal scratch']
  #allocation2 [shape = 'f32[16,128]{1,0:T(8,128)}', space=vmem, size = 0x2000, scoped, tag = 'scratch operand']
  %s0 = inlined_call_operand.hbm [shape: bf16[16,128], index: 0, kind: input, shape index: {}]
  %s1 = inlined_call_operand.hbm [shape: bf16[128,128], index: 1, kind: input, shape index: {}]
  %s2 = inlined_call_operand.hbm [shape: f32[1,128], index: 2, kind: input, shape index: {}, may-alias: {2,5}]
  %s3 = inlined_call_operand.hbm [shape: bf16[16,128], index: 3, kind: input, shape index: {}]
  %s4 = inlined_call_operand.hbm [shape: f32[1,128], index: 4, kind: input, shape index: {}]
  %s5 = inlined_call_operand.hbm [shape: f32[1,128], index: 5, kind: input, shape index: {}, may-alias: {2,5}]
  %s6 = inlined_call_operand.hbm [shape: bf16[16,128], index: 6, kind: output, shape index: {}]
  %s7 = sld [smem:[#allocation0]]
  $region66: #{_lambda_.19} parent=0
    _
  %s9 = ssub.s32 1, %s7
  %s10 = scalar_select 0, %s9, %s7
  $region1: #{_lambda_.19} parent=0
    #allocation3 [shape = 'u8[4096]{0}', space=vmem, size = 0x1000, scoped, tag = 'input window, operand 0, single buffered']
    #allocation4 [shape = 's32[1]{0}', space=sflag, size = 0x4, scoped, tag = 'scoped memory for _lambda_.19']
    #allocation5 [shape = 's32[1]{0}', space=sflag, size = 0x4, scoped, tag = 'scoped memory for _lambda_.19']
    #allocation6 [shape = 'u8[32768]{0}', space=vmem, size = 0x8000, scoped, tag = 'input window, operand 1, single buffered']
    #allocation7 [shape = 's32[1]{0}', space=sflag, size = 0x4, scoped, tag = 'scoped memory for _lambda_.19']
    #allocation8 [shape = 'u8[512]{0}', space=vmem, size = 0x400, scoped, tag = 'input window, operand 2, single buffered']
    #allocation9 [shape = 'u8[4096]{0}', space=vmem, size = 0x1000, scoped, tag = 'input window, operand 3, single buffered']
    #allocation10 [shape = 's32[1]{0}', space=sflag, size = 0x4, scoped, tag = 'scoped memory for _lambda_.19']
    #allocation11 [shape = 'u8[512]{0}', space=vmem, size = 0x400, scoped, tag = 'input window, operand 4, single buffered']
    #allocation12 [shape = 'u8[512]{0}', space=vmem, size = 0x400, scoped, tag = 'input window, operand 5, single buffered']
    #allocation13 [shape = 's32[1]{0}', space=sflag, size = 0x4, scoped, tag = 'scoped memory for _lambda_.19']
    #allocation14 [shape = 'u8[4096]{0}', space=vmem, size = 0x1000, scoped, tag = 'output window, operand 0, single buffered']
    %11 = vsyncpa [#allocation4], 0
    %12 = vsyncpa [#allocation7], 0
    %13 = vsyncpa [#allocation10], 0
    %14 = vsyncpa [#allocation13], 0
    %15 = vsyncpa [#allocation5], 0
    // Predicated region
    $region2: #{_lambda_.19} parent=1 // pred_check
      _
    $region3: #{_lambda_.19} parent=1 // pred_check_branch
      %17 = sbr.rel (0) target = $region5
    $region4: #{_lambda_.19} parent=1 // pred_region
      %s19 = ssub.s32 128, 128
      %20 = vsyncadd [#allocation4], %s19
      %s21 = sshll.u32 [#allocation3], 4
      %s22 = int_to_ptr.vmem [resolvable:$true] %s21
      %27 = dma.hbm_to_vmem [thread:$0]  %s0, 128, %s22, [#allocation4], 64, 64, 4
    $region5: #{_lambda_.19} parent=1 // pred_fallthru
      _
    // Predicated region
    $region6: #{_lambda_.19} parent=1 // pred_check
      _
    $region7: #{_lambda_.19} parent=1 // pred_check_branch
      %29 = sbr.rel (0) target = $region9
    $region8: #{_lambda_.19} parent=1 // pred_region
      %s31 = ssub.s32 1024, 1024
      %32 = vsyncadd [#allocation7], %s31
      %s33 = sshll.u32 [#allocation6], 4
      %s34 = int_to_ptr.vmem [resolvable:$true] %s33
      %39 = dma.hbm_to_vmem [thread:$0]  %s1, 1024, %s34, [#allocation7], 64, 64, 4
    $region9: #{_lambda_.19} parent=1 // pred_fallthru
      _
    // Predicated region
    $region10: #{_lambda_.19} parent=1 // pred_check
      _
    $region11: #{_lambda_.19} parent=1 // pred_check_branch
      %41 = sbr.rel (0) target = $region13
    $region12: #{_lambda_.19} parent=1 // pred_region
      %s43 = ssub.s32 16, 16
      %44 = vsyncadd [#allocation7], %s43
      %s46 = sshll.u32 [#allocation8], 4
      %s47 = int_to_ptr.vmem [resolvable:$true] %s46
      %49 = dma.hbm_to_vmem [thread:$0]  %s2, 16, %s47, [#allocation7]
    $region13: #{_lambda_.19} parent=1 // pred_fallthru
      _
    // Predicated region
    $region14: #{_lambda_.19} parent=1 // pred_check
      _
    $region15: #{_lambda_.19} parent=1 // pred_check_branch
      %51 = sbr.rel (0) target = $region17
    $region16: #{_lambda_.19} parent=1 // pred_region
      %s53 = ssub.s32 128, 128
      %54 = vsyncadd [#allocation10], %s53
      %s55 = sshll.u32 [#allocation9], 4
      %s56 = int_to_ptr.vmem [resolvable:$true] %s55
      %61 = dma.hbm_to_vmem [thread:$0]  %s3, 128, %s56, [#allocation10], 64, 64, 4
    $region17: #{_lambda_.19} parent=1 // pred_fallthru
      _
    // Predicated region
    $region18: #{_lambda_.19} parent=1 // pred_check
      _
    $region19: #{_lambda_.19} parent=1 // pred_check_branch
      %63 = sbr.rel (0) target = $region21
    $region20: #{_lambda_.19} parent=1 // pred_region
      %s65 = ssub.s32 16, 16
      %66 = vsyncadd [#allocation10], %s65
      %s68 = sshll.u32 [#allocation11], 4
      %s69 = int_to_ptr.vmem [resolvable:$true] %s68
      %71 = dma.hbm_to_vmem [thread:$0]  %s4, 16, %s69, [#allocation10]
    $region21: #{_lambda_.19} parent=1 // pred_fallthru
      _
    // Predicated region
    $region22: #{_lambda_.19} parent=1 // pred_check
      _
    $region23: #{_lambda_.19} parent=1 // pred_check_branch
      %73 = sbr.rel (0) target = $region25
    $region24: #{_lambda_.19} parent=1 // pred_region
      %s75 = ssub.s32 16, 16
      %76 = vsyncadd [#allocation13], %s75
      %s78 = sshll.u32 [#allocation12], 4
      %s79 = int_to_ptr.vmem [resolvable:$true] %s78
      %81 = dma.hbm_to_vmem [thread:$0]  %s5, 16, %s79, [#allocation13]
    $region25: #{_lambda_.19} parent=1 // pred_fallthru
      _
    // Predicated region
    $region26: #{_lambda_.19} parent=1 // pred_check
      _
    $region27: #{_lambda_.19} parent=1 // pred_check_branch
      %83 = sbr.rel (0) target = $region29
    $region28: #{_lambda_.19} parent=1 // pred_region
      %84 = dma.done [#allocation4], 128
    $region29: #{_lambda_.19} parent=1 // pred_fallthru
      _
    // Predicated region
    $region30: #{_lambda_.19} parent=1 // pred_check
      _
    $region31: #{_lambda_.19} parent=1 // pred_check_branch
      %86 = sbr.rel (0) target = $region33
    $region32: #{_lambda_.19} parent=1 // pred_region
      %87 = dma.done [#allocation7], 1024
    $region33: #{_lambda_.19} parent=1 // pred_fallthru
      _
    // Predicated region
    $region34: #{_lambda_.19} parent=1 // pred_check
      _
    $region35: #{_lambda_.19} parent=1 // pred_check_branch
      %89 = sbr.rel (0) target = $region37
    $region36: #{_lambda_.19} parent=1 // pred_region
      %90 = dma.done [#allocation7], 16
    $region37: #{_lambda_.19} parent=1 // pred_fallthru
      _
    // Predicated region
    $region38: #{_lambda_.19} parent=1 // pred_check
      _
    $region39: #{_lambda_.19} parent=1 // pred_check_branch
      %92 = sbr.rel (0) target = $region41
    $region40: #{_lambda_.19} parent=1 // pred_region
      %93 = dma.done [#allocation10], 128
    $region41: #{_lambda_.19} parent=1 // pred_fallthru
      _
    // Predicated region
    $region42: #{_lambda_.19} parent=1 // pred_check
      _
    $region43: #{_lambda_.19} parent=1 // pred_check_branch
      %95 = sbr.rel (0) target = $region45
    $region44: #{_lambda_.19} parent=1 // pred_region
      %96 = dma.done [#allocation10], 16
    $region45: #{_lambda_.19} parent=1 // pred_fallthru
      _
    // Predicated region
    $region46: #{_lambda_.19} parent=1 // pred_check
      _
    $region47: #{_lambda_.19} parent=1 // pred_check_branch
      %98 = sbr.rel (0) target = $region49
    $region48: #{_lambda_.19} parent=1 // pred_region
      %99 = dma.done [#allocation13], 16
    $region49: #{_lambda_.19} parent=1 // pred_fallthru
      _
    %p101 = scmp.eq.s32.totalorder 0, 0
    // Predicated region
    $region50: #{_lambda_.19} parent=1 // pred_check
      %p102 = pneg %p101
    $region51: #{_lambda_.19} parent=1 // pred_check_branch
      %104 = sbr.rel (%p102) target = $region53
    $region52: #{_lambda_.19} parent=1 // pred_region
      %105 = vst [vmem:[#allocation2] sm:$0xff] 0.0
      %106 = vst [vmem:[#allocation2 + $0x8] sm:$0xff] 0.0
    $region53: #{_lambda_.19} parent=1 // pred_fallthru
      _
    %v107 = vld [vmem:[#allocation2] sm:$0xff]
    %v108 = vld [vmem:[#allocation2 + $0x8] sm:$0xff]
    %v109 = vld [vmem:[#allocation3] sm:$0xf]
    %v110 = vld [vmem:[#allocation3 + $0x4] sm:$0xf]
    %v111 = vld [vmem:[#allocation6] sm:$0xf]
    %v112 = vld [vmem:[#allocation6 + $0x4] sm:$0xf]
    %v113 = vld [vmem:[#allocation6 + $0x8] sm:$0xf]
    %v114 = vld [vmem:[#allocation6 + $0xc] sm:$0xf]
    %v115 = vld [vmem:[#allocation6 + $0x10] sm:$0xf]
    %v116 = vld [vmem:[#allocation6 + $0x14] sm:$0xf]
    %v117 = vld [vmem:[#allocation6 + $0x18] sm:$0xf]
    %v118 = vld [vmem:[#allocation6 + $0x1c] sm:$0xf]
    %v119 = vld [vmem:[#allocation6 + $0x20] sm:$0xf]
    %v120 = vld [vmem:[#allocation6 + $0x24] sm:$0xf]
    %v121 = vld [vmem:[#allocation6 + $0x28] sm:$0xf]
    %v122 = vld [vmem:[#allocation6 + $0x2c] sm:$0xf]
    %v123 = vld [vmem:[#allocation6 + $0x30] sm:$0xf]
    %v124 = vld [vmem:[#allocation6 + $0x34] sm:$0xf]
    %v125 = vld [vmem:[#allocation6 + $0x38] sm:$0xf]
    %v126 = vld [vmem:[#allocation6 + $0x3c] sm:$0xf]
    %v129 = vunpack.c.l.b16 %v109
    %v130 = vunpack.c.l.b16 %v110
    %v131 = vpack.c.b16 %v130, %v129
    %v149 = vunpack.c.l.b16 %v111
    %v150 = vunpack.c.l.b16 %v112
    %v151 = vunpack.c.l.b16 %v113
    %v152 = vunpack.c.l.b16 %v114
    %v153 = vunpack.c.l.b16 %v115
    %v154 = vunpack.c.l.b16 %v116
    %v155 = vunpack.c.l.b16 %v117
    %v156 = vunpack.c.l.b16 %v118
    %v157 = vunpack.c.l.b16 %v119
    %v158 = vunpack.c.l.b16 %v120
    %v159 = vunpack.c.l.b16 %v121
    %v160 = vunpack.c.l.b16 %v122
    %v161 = vunpack.c.l.b16 %v123
    %v162 = vunpack.c.l.b16 %v124
    %v163 = vunpack.c.l.b16 %v125
    %v164 = vunpack.c.l.b16 %v126
    %v165 = vpack.c.b16 %v150, %v149
    %v166 = vpack.c.b16 %v152, %v151
    %v167 = vpack.c.b16 %v154, %v153
    %v168 = vpack.c.b16 %v156, %v155
    %v169 = vpack.c.b16 %v158, %v157
    %v170 = vpack.c.b16 %v160, %v159
    %v171 = vpack.c.b16 %v162, %v161
    %v172 = vpack.c.b16 %v164, %v163
    %181 = vmatprep.subr.bf16.mxu0 0
    %182 = vmatpush1.bf16.msra.mxu0 %v165
    %183 = vmatprep.subr.bf16.mxu0 0
    %184 = vmatpush1.bf16.msra.mxu0 %v166
    %185 = vmatprep.subr.bf16.mxu0 0
    %186 = vmatpush1.bf16.msra.mxu0 %v167
    %187 = vmatprep.subr.bf16.mxu0 0
    %188 = vmatpush1.bf16.msra.mxu0 %v168
    %189 = vmatprep.subr.bf16.mxu0 0
    %190 = vmatpush1.bf16.msra.mxu0 %v169
    %191 = vmatprep.subr.bf16.mxu0 0
    %192 = vmatpush1.bf16.msra.mxu0 %v170
    %193 = vmatprep.subr.bf16.mxu0 0
    %194 = vmatpush1.bf16.msra.mxu0 %v171
    %195 = vmatprep.subr.bf16.mxu0 0
    %196 = vmatpush1.bf16.msra.mxu0 %v172
    %197 = vmatprep.subr.bf16.mxu0 0
    %198 = vmatpush1.bf16.msra.mxu0 0
    %199 = vmatprep.subr.bf16.mxu0 0
    %200 = vmatpush1.bf16.msra.mxu0 0
    %201 = vmatprep.subr.bf16.mxu0 0
    %202 = vmatpush1.bf16.msra.mxu0 0
    %203 = vmatprep.subr.bf16.mxu0 0
    %204 = vmatpush1.bf16.msra.mxu0 0
    %205 = vmatprep.subr.bf16.mxu0 0
    %206 = vmatpush1.bf16.msra.mxu0 0
    %207 = vmatprep.subr.bf16.mxu0 0
    %208 = vmatpush1.bf16.msra.mxu0 0
    %209 = vmatprep.subr.bf16.mxu0 0
    %210 = vmatpush1.bf16.msra.mxu0 0
    %211 = vmatprep.subr.bf16.mxu0 0
    %212 = vmatpush1.bf16.msra.mxu0 0
    %213 = vmatprep.mubr.bf16.mxu0 0
    %214 = vmatmul.mubr.bf16.gmra.mrb[0].mxu0 %v131
    %v215 = vpop.f32.mrb[0].mxu0
    %v216 = vadd.f32 0.0, %v215
    %v217 = vpop.f32.mrb[0].mxu0
    %v218 = vpop.f32.mrb[0].mxu0
    %v219 = vadd.f32 0.0, %v218
    %v220 = vpop.f32.mrb[0].mxu0
    %221 = vdwg.mxu0
    %v222 = vadd.f32 %v107, %v216
    %v223 = vadd.f32 %v108, %v219
    %224 = vst [vmem:[#allocation2] sm:$0xff] %v222
    %225 = vst [vmem:[#allocation2 + $0x8] sm:$0xff] %v223
    // Predicated region
    $region54: #{_lambda_.19} parent=1 // pred_check
      %p226 = pneg %p101
    $region55: #{_lambda_.19} parent=1 // pred_check_branch
      %228 = sbr.rel (%p226) target = $region57
    $region56: #{_lambda_.19} parent=1 // pred_region
      %v229 = vld [vmem:[#allocation2] sm:$0xff]
      %v230 = vld [vmem:[#allocation2 + $0x8] sm:$0xff]
      %v231 = vld [vmem:[#allocation8] sm:$0x1]
      %v233 = vlaneseq
      %v234 = vshrl.u32 %v233, 7
      %v235 = vsub.s32 0, %v234
      %v236 = vrot.slane %v231, %v235
      %v238 = vadd.f32 %v229, %v236
      %v239 = vadd.f32 %v230, %v236
      %v240 = vld [vmem:[#allocation9] sm:$0xf]
      %v241 = vld [vmem:[#allocation9 + $0x4] sm:$0xf]
      %v242 = vunpack.c.l.bf16 %v240
      %v243 = vunpack.c.l.bf16 %v241
      %v244 = vadd.f32 %v238, %v242
      %v245 = vadd.f32 %v239, %v243
      %246 = vadd.xlane.f32.xlu0 %v244
      %v247 = vpop.xlane.xlu0 %246
      %248 = vadd.xlane.f32.xlu0 %v245
      %v249 = vpop.xlane.xlu0 %248
      %v250 = vrcp.pop 128.0
      %v251 = vmul.f32 %v247, %v250
      %v252 = vmul.f32 %v249, %v250
      %v253 = vsub.f32 %v244, %v251
      %v254 = vsub.f32 %v245, %v252
      %v255 = vmul.f32 %v253, %v253
      %v256 = vmul.f32 %v254, %v254
      %257 = vadd.xlane.f32.xlu0 %v255
      %v258 = vpop.xlane.xlu0 %257
      %259 = vadd.xlane.f32.xlu0 %v256
      %v260 = vpop.xlane.xlu0 %259
      %v261 = vmul.f32 %v258, %v250
      %v262 = vmul.f32 %v260, %v250
      %v263 = vadd.f32 %v261, 1e-05
      %v264 = vadd.f32 %v262, 1e-05
      %v265 = vrsqrt.pop %v263
      %v266 = vrsqrt.pop %v264
      %v267 = vmul.f32 %v253, %v265
      %v268 = vmul.f32 %v254, %v266
      %v269 = vld [vmem:[#allocation11] sm:$0x1]
      %v271 = vlaneseq
      %v272 = vshrl.u32 %v271, 7
      %v273 = vsub.s32 0, %v272
      %v274 = vrot.slane %v269, %v273
      %v276 = vmul.f32 %v267, %v274
      %v277 = vmul.f32 %v268, %v274
      %v278 = vld [vmem:[#allocation12] sm:$0x1]
      %v280 = vlaneseq
      %v281 = vshrl.u32 %v280, 7
      %v282 = vsub.s32 0, %v281
      %v283 = vrot.slane %v278, %v282
      %v285 = vadd.f32 %v276, %v283
      %v286 = vadd.f32 %v277, %v283
      %v287 = vpack.c.bf16 %v286, %v285
      %v289 = vunpack.c.l.b16 %v287
      %v290 = vunpack.c.h.b16 %v287
      %v291 = vpack.c.b16 %v289, %v289
      %v292 = vpack.c.b16 %v290, %v290
      %295 = vst [vmem:[#allocation14] sm:$0xf] %v291
      %296 = vst [vmem:[#allocation14 + $0x4] sm:$0xf] %v292
    $region57: #{_lambda_.19} parent=1 // pred_fallthru
      _
    // Predicated region
    $region58: #{_lambda_.19} parent=1 // pred_check
      _
    $region59: #{_lambda_.19} parent=1 // pred_check_branch
      %298 = sbr.rel (0) target = $region61
    $region60: #{_lambda_.19} parent=1 // pred_region
      %s300 = ssub.s32 128, 128
      %301 = vsyncadd [#allocation5], %s300
      %s302 = sshll.u32 [#allocation14], 4
      %s303 = int_to_ptr.vmem [resolvable:$true] %s302
      %308 = dma.vmem_to_hbm [thread:$0]  %s303, 128, %s6, [#allocation5], 64, 64, 4
    $region61: #{_lambda_.19} parent=1 // pred_fallthru
      _
    // Predicated region
    $region62: #{_lambda_.19} parent=1 // pred_check
      _
    $region63: #{_lambda_.19} parent=1 // pred_check_branch
      %310 = sbr.rel (0) target = $region65
    $region64: #{_lambda_.19} parent=1 // pred_region
      %311 = dma.done [#allocation5], 128
    $region65: #{_lambda_.19} parent=1 // pred_fallthru
      _
    %312 = vsyncpa [#allocation4], 1
    %313 = vsyncpa [#allocation7], 1
    %314 = vsyncpa [#allocation10], 1
    %315 = vsyncpa [#allocation13], 1
    %316 = vsyncpa [#allocation5], 1

// kernel: _lambda_.21
$region0: #{_lambda_.21}
  #allocation0 [shape = 'u32[]', space=smem, size = 0x4, offset = 0x4, fixed_abs, tag = 'smem constant byte address 0x4 - core index']
  #allocation1 [shape = 'u32[144,128]{1,0:T(1,128)}', space=vmem, size = 0x12000, scoped, tag = 'internal scratch']
  %s0 = inlined_call_operand.hbm [shape: bf16[32,128], index: 0, kind: input, shape index: {}]
  %s1 = inlined_call_operand.hbm [shape: bf16[128,256], index: 1, kind: input, shape index: {}]
  %s2 = inlined_call_operand.hbm [shape: f32[1,256], index: 2, kind: input, shape index: {}]
  %s3 = inlined_call_operand.hbm [shape: bf16[32,256], index: 3, kind: output, shape index: {}]
  %s4 = sld [smem:[#allocation0]]
  $region34: #{_lambda_.21} parent=0
    _
  %s6 = ssub.s32 1, %s4
  %s7 = scalar_select 0, %s6, %s4
  $region1: #{_lambda_.21} parent=0
    #allocation2 [shape = 'u8[8192]{0}', space=vmem, size = 0x2000, scoped, tag = 'input window, operand 0, single buffered']
    #allocation3 [shape = 's32[1]{0}', space=sflag, size = 0x4, scoped, tag = 'scoped memory for _lambda_.21']
    #allocation4 [shape = 's32[1]{0}', space=sflag, size = 0x4, scoped, tag = 'scoped memory for _lambda_.21']
    #allocation5 [shape = 'u8[65536]{0}', space=vmem, size = 0x10000, scoped, tag = 'input window, operand 1, single buffered']
    #allocation6 [shape = 's32[1]{0}', space=sflag, size = 0x4, scoped, tag = 'scoped memory for _lambda_.21']
    #allocation7 [shape = 'u8[1024]{0}', space=vmem, size = 0x400, scoped, tag = 'input window, operand 2, single buffered']
    #allocation8 [shape = 'u8[16384]{0}', space=vmem, size = 0x4000, scoped, tag = 'output window, operand 0, single buffered']
    %8 = vsyncpa [#allocation3], 0
    %9 = vsyncpa [#allocation6], 0
    %10 = vsyncpa [#allocation4], 0
    // Predicated region
    $region2: #{_lambda_.21} parent=1 // pred_check
      _
    $region3: #{_lambda_.21} parent=1 // pred_check_branch
      %12 = sbr.rel (0) target = $region5
    $region4: #{_lambda_.21} parent=1 // pred_region
      %s14 = ssub.s32 256, 256
      %15 = vsyncadd [#allocation3], %s14
      %s16 = sshll.u32 [#allocation2], 4
      %s17 = int_to_ptr.vmem [resolvable:$true] %s16
      %22 = dma.hbm_to_vmem [thread:$0]  %s0, 256, %s17, [#allocation3], 64, 64, 4
    $region5: #{_lambda_.21} parent=1 // pred_fallthru
      _
    // Predicated region
    $region6: #{_lambda_.21} parent=1 // pred_check
      _
    $region7: #{_lambda_.21} parent=1 // pred_check_branch
      %24 = sbr.rel (0) target = $region9
    $region8: #{_lambda_.21} parent=1 // pred_region
      %s26 = ssub.s32 2048, 2048
      %27 = vsyncadd [#allocation6], %s26
      %s28 = sshll.u32 [#allocation5], 4
      %s29 = int_to_ptr.vmem [resolvable:$true] %s28
      %34 = dma.hbm_to_vmem [thread:$0]  %s1, 2048, %s29, [#allocation6], 128, 128, 8
    $region9: #{_lambda_.21} parent=1 // pred_fallthru
      _
    // Predicated region
    $region10: #{_lambda_.21} parent=1 // pred_check
      _
    $region11: #{_lambda_.21} parent=1 // pred_check_branch
      %36 = sbr.rel (0) target = $region13
    $region12: #{_lambda_.21} parent=1 // pred_region
      %s38 = ssub.s32 32, 32
      %39 = vsyncadd [#allocation6], %s38
      %s41 = sshll.u32 [#allocation7], 4
      %s42 = int_to_ptr.vmem [resolvable:$true] %s41
      %44 = dma.hbm_to_vmem [thread:$0]  %s2, 32, %s42, [#allocation6]
    $region13: #{_lambda_.21} parent=1 // pred_fallthru
      _
    // Predicated region
    $region14: #{_lambda_.21} parent=1 // pred_check
      _
    $region15: #{_lambda_.21} parent=1 // pred_check_branch
      %46 = sbr.rel (0) target = $region17
    $region16: #{_lambda_.21} parent=1 // pred_region
      %47 = dma.done [#allocation3], 256
    $region17: #{_lambda_.21} parent=1 // pred_fallthru
      _
    // Predicated region
    $region18: #{_lambda_.21} parent=1 // pred_check
      _
    $region19: #{_lambda_.21} parent=1 // pred_check_branch
      %49 = sbr.rel (0) target = $region21
    $region20: #{_lambda_.21} parent=1 // pred_region
      %50 = dma.done [#allocation6], 2048
    $region21: #{_lambda_.21} parent=1 // pred_fallthru
      _
    // Predicated region
    $region22: #{_lambda_.21} parent=1 // pred_check
      _
    $region23: #{_lambda_.21} parent=1 // pred_check_branch
      %52 = sbr.rel (0) target = $region25
    $region24: #{_lambda_.21} parent=1 // pred_region
      %53 = dma.done [#allocation6], 32
    $region25: #{_lambda_.21} parent=1 // pred_fallthru
      _
    %v55 = vld [vmem:[#allocation2] sm:$0xf]
    %v56 = vld [vmem:[#allocation2 + $0x4] sm:$0xf]
    %v57 = vld [vmem:[#allocation2 + $0x8] sm:$0xf]
    %v58 = vld [vmem:[#allocation2 + $0xc] sm:$0xf]
    %v59 = vld [vmem:[#allocation5] sm:$0xff]
    %v60 = vld [vmem:[#allocation5 + $0x8] sm:$0xff]
    %v61 = vld [vmem:[#allocation5 + $0x10] sm:$0xff]
    %v62 = vld [vmem:[#allocation5 + $0x18] sm:$0xff]
    %v63 = vld [vmem:[#allocation5 + $0x20] sm:$0xff]
    %v64 = vld [vmem:[#allocation5 + $0x28] sm:$0xff]
    %v65 = vld [vmem:[#allocation5 + $0x30] sm:$0xff]
    %v66 = vld [vmem:[#allocation5 + $0x38] sm:$0xff]
    %v67 = vld [vmem:[#allocation5 + $0x40] sm:$0xff]
    %v68 = vld [vmem:[#allocation5 + $0x48] sm:$0xff]
    %v69 = vld [vmem:[#allocation5 + $0x50] sm:$0xff]
    %v70 = vld [vmem:[#allocation5 + $0x58] sm:$0xff]
    %v71 = vld [vmem:[#allocation5 + $0x60] sm:$0xff]
    %v72 = vld [vmem:[#allocation5 + $0x68] sm:$0xff]
    %v73 = vld [vmem:[#allocation5 + $0x70] sm:$0xff]
    %v74 = vld [vmem:[#allocation5 + $0x78] sm:$0xff]
    %v75 = vld [vmem:[#allocation7] sm:$0x3]
    %v77 = vlaneseq
    %v78 = vshrl.u32 %v77, 7
    %v79 = vsub.s32 0, %v78
    %v80 = vrot.slane %v75, %v79
    %v81 = vlaneseq
    %v82 = vshrl.u32 %v81, 7
    %v83 = vsub.s32 1, %v82
    %v84 = vrot.slane %v75, %v83
    %v91 = vunpack.c.l.b16 %v55
    %v92 = vunpack.c.l.b16 %v56
    %v93 = vunpack.c.l.b16 %v57
    %v94 = vunpack.c.l.b16 %v58
    %v95 = vpack.c.b16 %v92, %v91
    %v96 = vpack.c.b16 %v94, %v93
    %v115 = vunpack.c.l.b16 %v59
    %v116 = vunpack.c.h.b16 %v59
    %v117 = vunpack.c.l.b16 %v60
    %v118 = vunpack.c.h.b16 %v60
    %v119 = vunpack.c.l.b16 %v61
    %v120 = vunpack.c.h.b16 %v61
    %v121 = vunpack.c.l.b16 %v62
    %v122 = vunpack.c.h.b16 %v62
    %v123 = vunpack.c.l.b16 %v63
    %v124 = vunpack.c.h.b16 %v63
    %v125 = vunpack.c.l.b16 %v64
    %v126 = vunpack.c.h.b16 %v64
    %v127 = vunpack.c.l.b16 %v65
    %v128 = vunpack.c.h.b16 %v65
    %v129 = vunpack.c.l.b16 %v66
    %v130 = vunpack.c.h.b16 %v66
    %v131 = vunpack.c.l.b16 %v67
    %v132 = vunpack.c.h.b16 %v67
    %v133 = vunpack.c.l.b16 %v68
    %v134 = vunpack.c.h.b16 %v68
    %v135 = vunpack.c.l.b16 %v69
    %v136 = vunpack.c.h.b16 %v69
    %v137 = vunpack.c.l.b16 %v70
    %v138 = vunpack.c.h.b16 %v70
    %v139 = vunpack.c.l.b16 %v71
    %v140 = vunpack.c.h.b16 %v71
    %v141 = vunpack.c.l.b16 %v72
    %v142 = vunpack.c.h.b16 %v72
    %v143 = vunpack.c.l.b16 %v73
    %v144 = vunpack.c.h.b16 %v73
    %v145 = vunpack.c.l.b16 %v74
    %v146 = vunpack.c.h.b16 %v74
    %v147 = vpack.c.b16 %v117, %v115
    %v148 = vpack.c.b16 %v118, %v116
    %v149 = vpack.c.b16 %v121, %v119
    %v150 = vpack.c.b16 %v122, %v120
    %v151 = vpack.c.b16 %v125, %v123
    %v152 = vpack.c.b16 %v126, %v124
    %v153 = vpack.c.b16 %v129, %v127
    %v154 = vpack.c.b16 %v130, %v128
    %v155 = vpack.c.b16 %v133, %v131
    %v156 = vpack.c.b16 %v134, %v132
    %v157 = vpack.c.b16 %v137, %v135
    %v158 = vpack.c.b16 %v138, %v136
    %v159 = vpack.c.b16 %v141, %v139
    %v160 = vpack.c.b16 %v142, %v140
    %v161 = vpack.c.b16 %v145, %v143
    %v162 = vpack.c.b16 %v146, %v144
    %179 = vmatprep.subr.bf16.mxu0 %v148
    %180 = vmatpush1.bf16.msra.mxu0 %v147
    %181 = vmatprep.subr.bf16.mxu0 %v150
    %182 = vmatpush1.bf16.msra.mxu0 %v149
    %183 = vmatprep.subr.bf16.mxu0 %v152
    %184 = vmatpush1.bf16.msra.mxu0 %v151
    %185 = vmatprep.subr.bf16.mxu0 %v154
    %186 = vmatpush1.bf16.msra.mxu0 %v153
    %187 = vmatprep.subr.bf16.mxu0 %v156
    %188 = vmatpush1.bf16.msra.mxu0 %v155
    %189 = vmatprep.subr.bf16.mxu0 %v158
    %190 = vmatpush1.bf16.msra.mxu0 %v157
    %191 = vmatprep.subr.bf16.mxu0 %v160
    %192 = vmatpush1.bf16.msra.mxu0 %v159
    %193 = vmatprep.subr.bf16.mxu0 %v162
    %194 = vmatpush1.bf16.msra.mxu0 %v161
    %195 = vmatprep.subr.bf16.mxu0 0
    %196 = vmatpush1.bf16.msra.mxu0 0
    %197 = vmatprep.subr.bf16.mxu0 0
    %198 = vmatpush1.bf16.msra.mxu0 0
    %199 = vmatprep.subr.bf16.mxu0 0
    %200 = vmatpush1.bf16.msra.mxu0 0
    %201 = vmatprep.subr.bf16.mxu0 0
    %202 = vmatpush1.bf16.msra.mxu0 0
    %203 = vmatprep.subr.bf16.mxu0 0
    %204 = vmatpush1.bf16.msra.mxu0 0
    %205 = vmatprep.subr.bf16.mxu0 0
    %206 = vmatpush1.bf16.msra.mxu0 0
    %207 = vmatprep.subr.bf16.mxu0 0
    %208 = vmatpush1.bf16.msra.mxu0 0
    %209 = vmatprep.subr.bf16.mxu0 0
    %210 = vmatpush1.bf16.msra.mxu0 0
    %211 = vmatprep.mubr.bf16.mxu0 0
    %212 = vmatmul.mubr.bf16.gmra.mrb[0].mxu0 %v95
    %v213 = vpop.f32.mrb[0].mxu0
    %v214 = vadd.f32 %v80, %v213
    %v215 = vpop.f32.mrb[0].mxu0
    %v216 = vadd.f32 %v84, %v215
    %v217 = vpop.f32.mrb[0].mxu0
    %v218 = vadd.f32 %v80, %v217
    %v219 = vpop.f32.mrb[0].mxu0
    %v220 = vadd.f32 %v84, %v219
    %221 = vmatprep.mubr.bf16.mxu0 0
    %222 = vmatmul.mubr.bf16.gmra.mrb[0].mxu0 %v96
    %v223 = vpop.f32.mrb[0].mxu0
    %v224 = vadd.f32 %v80, %v223
    %v225 = vpop.f32.mrb[0].mxu0
    %v226 = vadd.f32 %v84, %v225
    %v227 = vpop.f32.mrb[0].mxu0
    %v228 = vadd.f32 %v80, %v227
    %v229 = vpop.f32.mrb[0].mxu0
    %v230 = vadd.f32 %v84, %v229
    %231 = vdwg.mxu0
    %v232 = vpack.c.bf16 %v218, %v214
    %v233 = vpack.c.bf16 %v220, %v216
    %v234 = vpack.c.bf16 %v228, %v224
    %v235 = vpack.c.bf16 %v230, %v226
    %v240 = vunpack.c.l.b16 %v232
    %v241 = vunpack.c.l.b16 %v233
    %v242 = vunpack.c.h.b16 %v232
    %v243 = vunpack.c.h.b16 %v233
    %v244 = vunpack.c.l.b16 %v234
    %v245 = vunpack.c.l.b16 %v235
    %v246 = vunpack.c.h.b16 %v234
    %v247 = vunpack.c.h.b16 %v235
    %v248 = vpack.c.b16 %v241, %v240
    %v249 = vpack.c.b16 %v243, %v242
    %v250 = vpack.c.b16 %v245, %v244
    %v251 = vpack.c.b16 %v247, %v246
    %256 = vst [vmem:[#allocation8] sm:$0xff] %v248
    %257 = vst [vmem:[#allocation8 + $0x8] sm:$0xff] %v249
    %258 = vst [vmem:[#allocation8 + $0x10] sm:$0xff] %v250
    %259 = vst [vmem:[#allocation8 + $0x18] sm:$0xff] %v251
    // Predicated region
    $region26: #{_lambda_.21} parent=1 // pred_check
      _
    $region27: #{_lambda_.21} parent=1 // pred_check_branch
      %261 = sbr.rel (0) target = $region29
    $region28: #{_lambda_.21} parent=1 // pred_region
      %s263 = ssub.s32 512, 512
      %264 = vsyncadd [#allocation4], %s263
      %s265 = sshll.u32 [#allocation8], 4
      %s266 = int_to_ptr.vmem [resolvable:$true] %s265
      %271 = dma.vmem_to_hbm [thread:$0]  %s266, 512, %s3, [#allocation4], 128, 128, 8
    $region29: #{_lambda_.21} parent=1 // pred_fallthru
      _
    // Predicated region
    $region30: #{_lambda_.21} parent=1 // pred_check
      _
    $region31: #{_lambda_.21} parent=1 // pred_check_branch
      %273 = sbr.rel (0) target = $region33
    $region32: #{_lambda_.21} parent=1 // pred_region
      %274 = dma.done [#allocation4], 512
    $region33: #{_lambda_.21} parent=1 // pred_fallthru
      _
    %275 = vsyncpa [#allocation3], 1
    %276 = vsyncpa [#allocation6], 1
    %277 = vsyncpa [#allocation4], 1

// kernel: _lambda_.22
$region0: #{_lambda_.22}
  #allocation0 [shape = 'u32[]', space=smem, size = 0x4, offset = 0x4, fixed_abs, tag = 'smem constant byte address 0x4 - core index']
  #allocation1 [shape = 'u32[144,128]{1,0:T(1,128)}', space=vmem, size = 0x12000, scoped, tag = 'internal scratch']
  %s0 = inlined_call_operand.hbm [shape: bf16[2,4,8,32], index: 0, kind: input, shape index: {}]
  %s1 = inlined_call_operand.hbm [shape: bf16[2,8,16,32], index: 1, kind: input, shape index: {}, may-alias: {1,2}]
  %s2 = inlined_call_operand.hbm [shape: bf16[2,8,16,32], index: 2, kind: input, shape index: {}, may-alias: {1,2}]
  %s3 = inlined_call_operand.hbm [shape: f32[8,16], index: 3, kind: input, shape index: {}]
  %s4 = inlined_call_operand.hbm [shape: f32[2,1,16], index: 4, kind: input, shape index: {}]
  %s5 = inlined_call_operand.hbm [shape: bf16[2,4,8,32], index: 5, kind: output, shape index: {}]
  %s6 = sld [smem:[#allocation0]]
  $region73: #{_lambda_.22} parent=0
    _
  %s8 = ssub.s32 1, %s6
  %s9 = scalar_select 0, %s8, %s6
  $region1: #{_lambda_.22} parent=0
    #allocation2 [shape = 'u8[4096]{0}', space=vmem, size = 0x1000, scoped, tag = 'input window, operand 0']
    #allocation3 [shape = 's32[2]{0}', space=sflag, size = 0x8, scoped, tag = 'scoped memory for _lambda_.22']
    #allocation4 [shape = 's32[2]{0}', space=sflag, size = 0x8, scoped, tag = 'scoped memory for _lambda_.22']
    #allocation5 [shape = 'u8[8192]{0}', space=vmem, size = 0x2000, scoped, tag = 'input window, operand 1']
    #allocation6 [shape = 's32[2]{0}', space=sflag, size = 0x8, scoped, tag = 'scoped memory for _lambda_.22']
    #allocation7 [shape = 'u8[8192]{0}', space=vmem, size = 0x2000, scoped, tag = 'input window, operand 2']
    #allocation8 [shape = 'u8[4096]{0}', space=vmem, size = 0x1000, scoped, tag = 'input window, operand 3, single buffered']
    #allocation9 [shape = 's32[1]{0}', space=sflag, size = 0x4, scoped, tag = 'scoped memory for _lambda_.22']
    #allocation10 [shape = 'u8[1024]{0}', space=vmem, size = 0x400, scoped, tag = 'input window, operand 4']
    #allocation11 [shape = 'u8[4096]{0}', space=vmem, size = 0x1000, scoped, tag = 'output window, operand 0']
    %10 = vsyncpa [#allocation3], 0
    %s11 = scalar_lea.sflag [#allocation3], 1
    %12 = vsyncpa %s11, 0
    %13 = vsyncpa [#allocation6], 0
    %s14 = scalar_lea.sflag [#allocation6], 1
    %15 = vsyncpa %s14, 0
    %16 = vsyncpa [#allocation9], 0
    %17 = vsyncpa [#allocation4], 0
    %s18 = scalar_lea.sflag [#allocation4], 1
    %19 = vsyncpa %s18, 0
    loop: start=0, step=1, limit=10
    $region2: #{_lambda_.22} parent=1 // loop_pre_header
      _
    $region3: #{_lambda_.22} parent=1 // loop_header
      %s21 = sphi 0, %s25
      %p22 = scmp.ge.s32.totalorder %s21, 10
      %s28 = sphi 0, %s47
      %s29 = sphi 0, %s43
      %s30 = sphi 0, %s39
      %s31 = sphi 0, %s28
      %s32 = sphi 0, %s29
      %s33 = sphi 0, %s30
      %s34 = sphi 0, %s31
      %s35 = sphi 0, %s32
      %s36 = sphi 0, %s33
      %s54 = sphi 0, %s56
      %s57 = sphi 0, %s54
      %s58 = sphi 0, %s57
      %s74 = sphi 0, %s58
      %s82 = sphi 0, %s84
      %s85 = sphi 0, %s82
      %s86 = sphi 0, %s85
      %s102 = sphi 0, %s86
      %s112 = sphi 0, %s114
      %s115 = sphi 0, %s112
      %s116 = sphi 0, %s115
      %s132 = sphi 0, %s116
      %s138 = sphi 0, %s140
      %s141 = sphi 0, %s138
      %s142 = sphi 0, %s141
      %s158 = sphi 0, %s142
      %s164 = sphi 0, %s166
      %s167 = sphi 0, %s164
      %s168 = sphi 0, %s167
      %s184 = sphi 0, %s168
      %s194 = sphi 0, %s196
      %s197 = sphi 0, %s194
      %s198 = sphi 0, %s197
      %s214 = sphi 0, %s198
    $region4: #{_lambda_.22} parent=1 // loop_header_branch
      %24 = sbr.rel (%p22) target = $region8
    $region5: #{_lambda_.22} parent=1 // loop_body
      %s26 = ssub.s32 %s21, 1
      %s27 = ssub.s32 %s21, 2
      %s37 = sadd.s32 1, %s30
      %p38 = scmp.ge.s32.totalorder %s37, 1
      %s39 = scalar_select %p38, 0, %s37
      %s40 = sadd.s32 1, %s29
      %s41 = scalar_select %p38, %s40, %s29
      %p42 = scmp.ge.s32.totalorder %s41, 4
      %s43 = scalar_select %p42, 0, %s41
      %s44 = sadd.s32 1, %s28
      %s45 = scalar_select %p42, %s44, %s28
      %p46 = scmp.ge.s32.totalorder %s45, 2
      %s47 = scalar_select %p46, 0, %s45
      %s48 = ssub.s32 %s28, %s47
      %s49 = ssub.s32 %s29, %s43
      %s50 = sor.u32 %s48, %s49
      %s51 = ssub.s32 %s30, %s39
      %s52 = sor.u32 %s50, %s51
      %p53 = scmp.eq.s32.totalorder %s52, 0
      %s55 = sadd.s32 %s54, 1
      %s56 = scalar_select %p53, %s54, %s55
      %p59 = pneg %p53
      %p60 = scmp.eq.s32.totalorder %s21, 7
      %p61 = por %p59, %p60
      %p62 = scmp.ne.s32.totalorder %s54, %s57
      %p63 = scmp.eq.s32.totalorder %s21, 0
      %p64 = por %p62, %p63
      %p65 = scmp.ne.s32.totalorder %s54, %s57
      %p66 = scmp.eq.s32.totalorder %s26, 7
      %p67 = por %p65, %p66
      %p68 = scmp.ne.s32.totalorder %s57, %s58
      %p69 = scmp.eq.s32.totalorder %s26, 0
      %p70 = por %p68, %p69
      %p71 = scmp.ne.s32.totalorder %s57, %s58
      %p72 = scmp.eq.s32.totalorder %s27, 7
      %p73 = por %p71, %p72
      %p75 = scmp.ne.s32.totalorder %s58, %s74
      %p76 = scmp.eq.s32.totalorder %s27, 0
      %p77 = por %p75, %p76
      %s78 = ssub.s32 %s28, %s47
      %s79 = ssub.s32 %s29, %s43
      %s80 = sor.u32 %s78, %s79
      %p81 = scmp.eq.s32.totalorder %s80, 0
      %s83 = sadd.s32 %s82, 1
      %s84 = scalar_select %p81, %s82, %s83
      %p87 = pneg %p81
      %p88 = scmp.eq.s32.totalorder %s21, 7
      %p89 = por %p87, %p88
      %p90 = scmp.ne.s32.totalorder %s82, %s85
      %p91 = scmp.eq.s32.totalorder %s21, 0
      %p92 = por %p90, %p91
      %p93 = scmp.ne.s32.totalorder %s82, %s85
      %p94 = scmp.eq.s32.totalorder %s26, 7
      %p95 = por %p93, %p94
      %p96 = scmp.ne.s32.totalorder %s85, %s86
      %p97 = scmp.eq.s32.totalorder %s26, 0
      %p98 = por %p96, %p97
      %p99 = scmp.ne.s32.totalorder %s85, %s86
      %p100 = scmp.eq.s32.totalorder %s27, 7
      %p101 = por %p99, %p100
      %p103 = scmp.ne.s32.totalorder %s86, %s102
      %p104 = scmp.eq.s32.totalorder %s27, 0
      %p105 = por %p103, %p104
      %s106 = sadd.s32 %s29, 4
      %s107 = sadd.s32 %s43, 4
      %s108 = ssub.s32 %s28, %s47
      %s109 = ssub.s32 %s106, %s107
      %s110 = sor.u32 %s108, %s109
      %p111 = scmp.eq.s32.totalorder %s110, 0
      %s113 = sadd.s32 %s112, 1
      %s114 = scalar_select %p111, %s112, %s113
      %p117 = pneg %p111
      %p118 = scmp.eq.s32.totalorder %s21, 7
      %p119 = por %p117, %p118
      %p120 = scmp.ne.s32.totalorder %s112, %s115
      %p121 = scmp.eq.s32.totalorder %s21, 0
      %p122 = por %p120, %p121
      %p123 = scmp.ne.s32.totalorder %s112, %s115
      %p124 = scmp.eq.s32.totalorder %s26, 7
      %p125 = por %p123, %p124
      %p126 = scmp.ne.s32.totalorder %s115, %s116
      %p127 = scmp.eq.s32.totalorder %s26, 0
      %p128 = por %p126, %p127
      %p129 = scmp.ne.s32.totalorder %s115, %s116
      %p130 = scmp.eq.s32.totalorder %s27, 7
      %p131 = por %p129, %p130
      %p133 = scmp.ne.s32.totalorder %s116, %s132
      %p134 = scmp.eq.s32.totalorder %s27, 0
      %p135 = por %p133, %p134
      %s136 = ssub.s32 %s30, %s39
      %p137 = scmp.eq.s32.totalorder %s136, 0
      %s139 = sadd.s32 %s138, 1
      %s140 = scalar_select %p137, %s138, %s139
      %p143 = pneg %p137
      %p144 = scmp.eq.s32.totalorder %s21, 7
      %p145 = por %p143, %p144
      %p146 = scmp.ne.s32.totalorder %s138, %s141
      %p147 = scmp.eq.s32.totalorder %s21, 0
      %p148 = por %p146, %p147
      %p149 = scmp.ne.s32.totalorder %s138, %s141
      %p150 = scmp.eq.s32.totalorder %s26, 7
      %p151 = por %p149, %p150
      %p152 = scmp.ne.s32.totalorder %s141, %s142
      %p153 = scmp.eq.s32.totalorder %s26, 0
      %p154 = por %p152, %p153
      %p155 = scmp.ne.s32.totalorder %s141, %s142
      %p156 = scmp.eq.s32.totalorder %s27, 7
      %p157 = por %p155, %p156
      %p159 = scmp.ne.s32.totalorder %s142, %s158
      %p160 = scmp.eq.s32.totalorder %s27, 0
      %p161 = por %p159, %p160
      %s162 = ssub.s32 %s28, %s47
      %p163 = scmp.eq.s32.totalorder %s162, 0
      %s165 = sadd.s32 %s164, 1
      %s166 = scalar_select %p163, %s164, %s165
      %p169 = pneg %p163
      %p170 = scmp.eq.s32.totalorder %s21, 7
      %p171 = por %p169, %p170
      %p172 = scmp.ne.s32.totalorder %s164, %s167
      %p173 = scmp.eq.s32.totalorder %s21, 0
      %p174 = por %p172, %p173
      %p175 = scmp.ne.s32.totalorder %s164, %s167
      %p176 = scmp.eq.s32.totalorder %s26, 7
      %p177 = por %p175, %p176
      %p178 = scmp.ne.s32.totalorder %s167, %s168
      %p179 = scmp.eq.s32.totalorder %s26, 0
      %p180 = por %p178, %p179
      %p181 = scmp.ne.s32.totalorder %s167, %s168
      %p182 = scmp.eq.s32.totalorder %s27, 7
      %p183 = por %p181, %p182
      %p185 = scmp.ne.s32.totalorder %s168, %s184
      %p186 = scmp.eq.s32.totalorder %s27, 0
      %p187 = por %p185, %p186
      %s188 = ssub.s32 %s28, %s47
      %s189 = ssub.s32 %s29, %s43
      %s190 = sor.u32 %s188, %s189
      %s191 = ssub.s32 %s30, %s39
      %s192 = sor.u32 %s190, %s191
      %p193 = scmp.eq.s32.totalorder %s192, 0
      %s195 = sadd.s32 %s194, 1
      %s196 = scalar_select %p193, %s194, %s195
      %p199 = pneg %p193
      %p200 = scmp.eq.s32.totalorder %s21, 7
      %p201 = por %p199, %p200
      %p202 = scmp.ne.s32.totalorder %s194, %s197
      %p203 = scmp.eq.s32.totalorder %s21, 0
      %p204 = por %p202, %p203
      %p205 = scmp.ne.s32.totalorder %s194, %s197
      %p206 = scmp.eq.s32.totalorder %s26, 7
      %p207 = por %p205, %p206
      %p208 = scmp.ne.s32.totalorder %s197, %s198
      %p209 = scmp.eq.s32.totalorder %s26, 0
      %p210 = por %p208, %p209
      %p211 = scmp.ne.s32.totalorder %s197, %s198
      %p212 = scmp.eq.s32.totalorder %s27, 7
      %p213 = por %p211, %p212
      %p215 = scmp.ne.s32.totalorder %s198, %s214
      %p216 = scmp.eq.s32.totalorder %s27, 0
      %p217 = por %p215, %p216
      %p218 = scmp.le.s32.totalorder 1, %s21
      %p219 = scmp.lt.s32.totalorder %s21, 9
      %p220 = pnand %p218, %p219
      %p221 = pneg %p220
      // Predicated region
      $region9: #{_lambda_.22} parent=5 // pred_check
        _
      $region10: #{_lambda_.22} parent=5 // pred_check_branch
        %223 = sbr.rel (%p220) target = $region12
      $region11: #{_lambda_.22} parent=5 // pred_region
        %s224 = ssub.s32 %s21, 1
        // Predicated region
        $region13: #{_lambda_.22} parent=11 // pred_check
          %p225 = pneg %p154
        $region14: #{_lambda_.22} parent=11 // pred_check_branch
          %227 = sbr.rel (%p225) target = $region16
        $region15: #{_lambda_.22} parent=11 // pred_region
          %s229 = ssub.s32 128, 128
          %230 = vsyncadd [#allocation9], %s229
          %s231 = smul.addr %s33, 128
          %s232 = scalar_lea.hbm %s3, %s231
          %s234 = sshll.u32 [#allocation8], 4
          %s235 = int_to_ptr.vmem [resolvable:$true] %s234
          %237 = dma.hbm_to_vmem [thread:$0]  %s232, 128, %s235, [#allocation9]
        $region16: #{_lambda_.22} parent=11 // pred_fallthru
          _
      $region12: #{_lambda_.22} parent=5 // pred_fallthru
        _
      %p238 = scmp.lt.s32.totalorder %s21, 8
      // Predicated region
      $region17: #{_lambda_.22} parent=5 // pred_check
        %p239 = pneg %p238
      $region18: #{_lambda_.22} parent=5 // pred_check_branch
        %241 = sbr.rel (%p239) target = $region20
      $region19: #{_lambda_.22} parent=5 // pred_region
        // Predicated region
        $region21: #{_lambda_.22} parent=19 // pred_check
          %p242 = pneg %p64
        $region22: #{_lambda_.22} parent=19 // pred_check_branch
          %244 = sbr.rel (%p242) target = $region24
        $region23: #{_lambda_.22} parent=19 // pred_region
          %s245 = sand.u32 %s21, 1
          %s246 = scalar_lea.sflag [#allocation3], %s245
          %s247 = sand.u32 %s54, 1
          %s248 = smul.addr %s247, 4
          %s249 = scalar_lea.vmem [#allocation2], %s248
          %s251 = ssub.s32 64, 64
          %252 = vsyncadd %s246, %s251
          %s253 = sadd.s32 %s30, %s29
          %s254 = smul.addr %s28, 4
          %s255 = sadd.s32 %s253, %s254
          %s256 = smul.addr %s255, 64
          %s257 = scalar_lea.hbm %s0, %s256
          %s259 = sshll.u32 %s249, 4
          %s260 = int_to_ptr.vmem [resolvable:$true] %s259
          %262 = dma.hbm_to_vmem [thread:$0]  %s257, 64, %s260, %s246
        $region24: #{_lambda_.22} parent=19 // pred_fallthru
          _
        // Predicated region
        $region25: #{_lambda_.22} parent=19 // pred_check
          %p263 = pneg %p92
        $region26: #{_lambda_.22} parent=19 // pred_check_branch
          %265 = sbr.rel (%p263) target = $region28
        $region27: #{_lambda_.22} parent=19 // pred_region
          %s266 = sand.u32 %s21, 1
          %s267 = scalar_lea.sflag [#allocation6], %s266
          %s268 = sand.u32 %s82, 1
          %s269 = smul.addr %s268, 8
          %s270 = scalar_lea.vmem [#allocation5], %s269
          %s272 = ssub.s32 128, 128
          %273 = vsyncadd %s267, %s272
          %s274 = smul.addr %s29, 2
          %s275 = smul.addr %s28, 16
          %s276 = sadd.s32 %s274, %s275
          %s277 = smul.addr %s276, 64
          %s278 = scalar_lea.hbm %s1, %s277
          %s279 = sshll.u32 %s270, 4
          %s280 = int_to_ptr.vmem [resolvable:$true] %s279
          %285 = dma.hbm_to_vmem [thread:$0]  %s278, 128, %s280, %s267, 64, 64, 4
        $region28: #{_lambda_.22} parent=19 // pred_fallthru
          _
        // Predicated region
        $region29: #{_lambda_.22} parent=19 // pred_check
          %p286 = pneg %p122
        $region30: #{_lambda_.22} parent=19 // pred_check_branch
          %288 = sbr.rel (%p286) target = $region32
        $region31: #{_lambda_.22} parent=19 // pred_region
          %s289 = sand.u32 %s21, 1
          %s290 = scalar_lea.sflag [#allocation6], %s289
          %s291 = sand.u32 %s112, 1
          %s292 = smul.addr %s291, 8
          %s293 = scalar_lea.vmem [#allocation7], %s292
          %s294 = sadd.s32 %s29, 4
          %s296 = ssub.s32 128, 128
          %297 = vsyncadd %s290, %s296
          %s298 = smul.addr %s294, 2
          %s299 = smul.addr %s28, 16
          %s300 = sadd.s32 %s298, %s299
          %s301 = smul.addr %s300, 64
          %s302 = scalar_lea.hbm %s2, %s301
          %s303 = sshll.u32 %s293, 4
          %s304 = int_to_ptr.vmem [resolvable:$true] %s303
          %309 = dma.hbm_to_vmem [thread:$0]  %s302, 128, %s304, %s290, 64, 64, 4
        $region32: #{_lambda_.22} parent=19 // pred_fallthru
          _
        // Predicated region
        $region33: #{_lambda_.22} parent=19 // pred_check
          %p310 = pneg %p174
        $region34: #{_lambda_.22} parent=19 // pred_check_branch
          %312 = sbr.rel (%p310) target = $region36
        $region35: #{_lambda_.22} parent=19 // pred_region
          %s313 = sand.u32 %s21, 1
          %s314 = scalar_lea.sflag [#allocation3], %s313
          %s315 = sand.u32 %s164, 1
          %s316 = scalar_lea.vmem [#allocation10], %s315
          %s318 = ssub.s32 16, 16
          %319 = vsyncadd %s314, %s318
          %s320 = smul.addr %s28, 16
          %s321 = scalar_lea.hbm %s4, %s320
          %s323 = sshll.u32 %s316, 4
          %s324 = int_to_ptr.vmem [resolvable:$true] %s323
          %326 = dma.hbm_to_vmem [thread:$0]  %s321, 16, %s324, %s314
        $region36: #{_lambda_.22} parent=19 // pred_fallthru
          _
      $region20: #{_lambda_.22} parent=5 // pred_fallthru
        _
      %p327 = scmp.le.s32.totalorder 1, %s21
      %p328 = scmp.lt.s32.totalorder %s21, 9
      %p329 = pnand %p327, %p328
      %p330 = pneg %p329
      // Predicated region
      $region37: #{_lambda_.22} parent=5 // pred_check
        _
      $region38: #{_lambda_.22} parent=5 // pred_check_branch
        %332 = sbr.rel (%p329) target = $region40
      $region39: #{_lambda_.22} parent=5 // pred_region
        %s333 = ssub.s32 %s21, 1
        %s334 = sand.u32 %s26, 1
        %s335 = scalar_lea.sflag [#allocation3], %s334
        %s336 = sand.u32 %s57, 1
        %s337 = smul.addr %s336, 4
        %s338 = scalar_lea.vmem [#allocation2], %s337
        // Predicated region
        $region41: #{_lambda_.22} parent=39 // pred_check
          %p339 = pneg %p70
        $region42: #{_lambda_.22} parent=39 // pred_check_branch
          %341 = sbr.rel (%p339) target = $region44
        $region43: #{_lambda_.22} parent=39 // pred_region
          %342 = dma.done %s335, 64
        $region44: #{_lambda_.22} parent=39 // pred_fallthru
          _
        %s343 = sand.u32 %s26, 1
        %s344 = scalar_lea.sflag [#allocation6], %s343
        %s345 = sand.u32 %s85, 1
        %s346 = smul.addr %s345, 8
        %s347 = scalar_lea.vmem [#allocation5], %s346
        // Predicated region
        $region45: #{_lambda_.22} parent=39 // pred_check
          %p348 = pneg %p98
        $region46: #{_lambda_.22} parent=39 // pred_check_branch
          %350 = sbr.rel (%p348) target = $region48
        $region47: #{_lambda_.22} parent=39 // pred_region
          %351 = dma.done %s344, 128
        $region48: #{_lambda_.22} parent=39 // pred_fallthru
          _
        %s352 = sand.u32 %s26, 1
        %s353 = scalar_lea.sflag [#allocation6], %s352
        %s354 = sand.u32 %s115, 1
        %s355 = smul.addr %s354, 8
        %s356 = scalar_lea.vmem [#allocation7], %s355
        // Predicated region
        $region49: #{_lambda_.22} parent=39 // pred_check
          %p357 = pneg %p128
        $region50: #{_lambda_.22} parent=39 // pred_check_branch
          %359 = sbr.rel (%p357) target = $region52
        $region51: #{_lambda_.22} parent=39 // pred_region
          %360 = dma.done %s353, 128
        $region52: #{_lambda_.22} parent=39 // pred_fallthru
          _
        // Predicated region
        $region53: #{_lambda_.22} parent=39 // pred_check
          %p361 = pneg %p154
        $region54: #{_lambda_.22} parent=39 // pred_check_branch
          %363 = sbr.rel (%p361) target = $region56
        $region55: #{_lambda_.22} parent=39 // pred_region
          %364 = dma.done [#allocation9], 128
        $region56: #{_lambda_.22} parent=39 // pred_fallthru
          _
        %s365 = sand.u32 %s26, 1
        %s366 = scalar_lea.sflag [#allocation3], %s365
        %s367 = sand.u32 %s167, 1
        %s368 = scalar_lea.vmem [#allocation10], %s367
        // Predicated region
        $region57: #{_lambda_.22} parent=39 // pred_check
          %p369 = pneg %p180
        $region58: #{_lambda_.22} parent=39 // pred_check_branch
          %371 = sbr.rel (%p369) target = $region60
        $region59: #{_lambda_.22} parent=39 // pred_region
          %372 = dma.done %s366, 16
        $region60: #{_lambda_.22} parent=39 // pred_fallthru
          _
        %s373 = sand.u32 %s26, 1
        %s374 = scalar_lea.sflag [#allocation3], %s373
        %s375 = sand.u32 %s57, 1
        %s376 = smul.addr %s375, 4
        %s377 = scalar_lea.vmem [#allocation2], %s376
        %p378 = pneg %p70
        %p379 = pneg %p67
        %s380 = sand.u32 %s26, 1
        %s381 = scalar_lea.sflag [#allocation6], %s380
        %s382 = sand.u32 %s85, 1
        %s383 = smul.addr %s382, 8
        %s384 = scalar_lea.vmem [#allocation5], %s383
        %p385 = pneg %p98
        %p386 = pneg %p95
        %s387 = sand.u32 %s26, 1
        %s388 = scalar_lea.sflag [#allocation6], %s387
        %s389 = sand.u32 %s115, 1
        %s390 = smul.addr %s389, 8
        %s391 = scalar_lea.vmem [#allocation7], %s390
        %p392 = pneg %p128
        %p393 = pneg %p125
        %p394 = pneg %p154
        %p395 = pneg %p151
        %s396 = sand.u32 %s26, 1
        %s397 = scalar_lea.sflag [#allocation3], %s396
        %s398 = sand.u32 %s167, 1
        %s399 = scalar_lea.vmem [#allocation10], %s398
        %p400 = pneg %p180
        %p401 = pneg %p177
        %p402 = pneg %p210
        %p403 = pneg %p207
        %s404 = sand.u32 %s197, 1
        %s405 = scalar_lea.sflag [#allocation4], %s404
        %s406 = sand.u32 %s197, 1
        %s407 = smul.addr %s406, 4
        %s408 = scalar_lea.vmem [#allocation11], %s407
        %s409 = sadd.s32 %s32, 4
        %v411 = vld [vmem:[%s338] sm:$0xf]
        %v412 = vld [vmem:[%s347] sm:$0xf]
        %v413 = vld [vmem:[%s347 + $0x4] sm:$0xf]
        %v414 = vld [vmem:[%s356] sm:$0xf]
        %v415 = vld [vmem:[%s356 + $0x4] sm:$0xf]
        %v416 = vld [vmem:[#allocation8] sm:$0xff]
        %v419 = vunpack.c.l.b16 %v412
        %v420 = vunpack.c.l.b16 %v413
        %v421 = vpack.c.b16 %v420, %v419
        %vm422 = vcmask 261120
        %v424 = vsel %vm422, %v411, 0
        %v427 = vsel %vm422, %v421, 0
        %429 = vmatprep.subr.bf16.mxu0 0
        %430 = vmatpush1.bf16.xpose.msra.mxu0 %v427
        %431 = vmatprep.subr.bf16.mxu0 0
        %432 = vmatpush1.bf16.xpose.msra.mxu0 0
        %433 = vmatprep.subr.bf16.mxu0 0
        %434 = vmatpush1.bf16.xpose.msra.mxu0 0
        %435 = vmatprep.subr.bf16.mxu0 0
        %436 = vmatpush1.bf16.xpose.msra.mxu0 0
        %437 = vmatprep.subr.bf16.mxu0 0
        %438 = vmatpush1.bf16.xpose.msra.mxu0 0
        %439 = vmatprep.subr.bf16.mxu0 0
        %440 = vmatpush1.bf16.xpose.msra.mxu0 0
        %441 = vmatprep.subr.bf16.mxu0 0
        %442 = vmatpush1.bf16.xpose.msra.mxu0 0
        %443 = vmatprep.subr.bf16.mxu0 0
        %444 = vmatpush1.bf16.xpose.msra.mxu0 0
        %445 = vmatprep.subr.bf16.mxu0 0
        %446 = vmatpush1.bf16.xpose.msra.mxu0 0
        %447 = vmatprep.subr.bf16.mxu0 0
        %448 = vmatpush1.bf16.xpose.msra.mxu0 0
        %449 = vmatprep.subr.bf16.mxu0 0
        %450 = vmatpush1.bf16.xpose.msra.mxu0 0
        %451 = vmatprep.subr.bf16.mxu0 0
        %452 = vmatpush1.bf16.xpose.msra.mxu0 0
        %453 = vmatprep.subr.bf16.mxu0 0
        %454 = vmatpush1.bf16.xpose.msra.mxu0 0
        %455 = vmatprep.subr.bf16.mxu0 0
        %456 = vmatpush1.bf16.xpose.msra.mxu0 0
        %457 = vmatprep.subr.bf16.mxu0 0
        %458 = vmatpush1.bf16.xpose.msra.mxu0 0
        %459 = vmatprep.subr.bf16.mxu0 0
        %460 = vmatpush1.bf16.xpose.msra.mxu0 0
        %461 = vmatprep.mubr.bf16.mxu0 0
        %462 = vmatmul.mubr.bf16.gmra.mrb[0].mxu0 %v424
        %v463 = vpop.f32.mrb[0].mxu0
        %v464 = vadd.f32 %v416, %v463
        %v465 = vpop.f32.mrb[0].mxu0
        %v466 = vpop.f32.mrb[0].mxu0
        %v467 = vpop.f32.mrb[0].mxu0
        %468 = vdwg.mxu0
        %v469 = vld [vmem:[%s368] sm:$0x1]
        %v471 = vlaneseq
        %v472 = vshrl.u32 %v471, 7
        %v473 = vsub.s32 0, %v472
        %v474 = vrot.slane %v469, %v473
        %v476 = vadd.f32 %v464, %v474
        %vm477 = vcmask 130048
        %v478 = vsel %vm477, %v476, -inf
        %479 = vmax.xlane.f32.xlu0 %v478
        %v480 = vpop.xlane.xlu0 %479
        %v481 = vsub.f32 %v476, %v480
        %v482 = vmul.f32 %v481, 1.442695
        %v483 = vpow.pop %v482
        %v484 = vsel %vm477, %v483, 0.0
        %485 = vadd.xlane.f32.xlu0 %v484
        %v486 = vpop.xlane.xlu0 %485
        %v487 = vrcp.pop %v486
        %v488 = vmul.f32 %v483, %v487
        %v489 = vpack.c.bf16 %v488, %v488
        %v492 = vunpack.c.l.b16 %v414
        %v493 = vunpack.c.l.b16 %v415
        %v494 = vpack.c.b16 %v493, %v492
        %v497 = vsel %vm477, %v489, 0
        %499 = vmatprep.subr.bf16.mxu0 0
        %500 = vmatpush1.bf16.msra.mxu0 %v494
        %501 = vmatprep.subr.bf16.mxu0 0
        %502 = vmatpush1.bf16.msra.mxu0 0
        %503 = vmatprep.subr.bf16.mxu0 0
        %504 = vmatpush1.bf16.msra.mxu0 0
        %505 = vmatprep.subr.bf16.mxu0 0
        %506 = vmatpush1.bf16.msra.mxu0 0
        %507 = vmatprep.subr.bf16.mxu0 0
        %508 = vmatpush1.bf16.msra.mxu0 0
        %509 = vmatprep.subr.bf16.mxu0 0
        %510 = vmatpush1.bf16.msra.mxu0 0
        %511 = vmatprep.subr.bf16.mxu0 0
        %512 = vmatpush1.bf16.msra.mxu0 0
        %513 = vmatprep.subr.bf16.mxu0 0
        %514 = vmatpush1.bf16.msra.mxu0 0
        %515 = vmatprep.subr.bf16.mxu0 0
        %516 = vmatpush1.bf16.msra.mxu0 0
        %517 = vmatprep.subr.bf16.mxu0 0
        %518 = vmatpush1.bf16.msra.mxu0 0
        %519 = vmatprep.subr.bf16.mxu0 0
        %520 = vmatpush1.bf16.msra.mxu0 0
        %521 = vmatprep.subr.bf16.mxu0 0
        %522 = vmatpush1.bf16.msra.mxu0 0
        %523 = vmatprep.subr.bf16.mxu0 0
        %524 = vmatpush1.bf16.msra.mxu0 0
        %525 = vmatprep.subr.bf16.mxu0 0
        %526 = vmatpush1.bf16.msra.mxu0 0
        %527 = vmatprep.subr.bf16.mxu0 0
        %528 = vmatpush1.bf16.msra.mxu0 0
        %529 = vmatprep.subr.bf16.mxu0 0
        %530 = vmatpush1.bf16.msra.mxu0 0
        %531 = vmatprep.mubr.bf16.mxu0 0
        %532 = vmatmul.mubr.bf16.gmra.mrb[0].mxu0 %v497
        %v533 = vpop.f32.mrb[0].mxu0
        %v534 = vadd.f32 0.0, %v533
        %v535 = vpop.f32.mrb[0].mxu0
        %v536 = vpop.f32.mrb[0].mxu0
        %v537 = vpop.f32.mrb[0].mxu0
        %538 = vdwg.mxu0
        %v539 = vpack.c.bf16 %v534, %v534
        %vm540 = vcmask 257024
        %541 = vst.msk [vmem:[%s408] sm:$0xf] %vm540, %v539
        %s542 = sand.u32 %s197, 1
        %s543 = scalar_lea.sflag [#allocation4], %s542
        %s544 = sand.u32 %s197, 1
        %s545 = smul.addr %s544, 4
        %s546 = scalar_lea.vmem [#allocation11], %s545
        // Predicated region
        $region61: #{_lambda_.22} parent=39 // pred_check
          %p547 = pneg %p207
        $region62: #{_lambda_.22} parent=39 // pred_check_branch
          %549 = sbr.rel (%p547) target = $region64
        $region63: #{_lambda_.22} parent=39 // pred_region
          %s551 = ssub.s32 64, 64
          %552 = vsyncadd %s543, %s551
          %s553 = sadd.s32 %s33, %s32
          %s554 = smul.addr %s31, 4
          %s555 = sadd.s32 %s553, %s554
          %s556 = smul.addr %s555, 64
          %s557 = scalar_lea.hbm %s5, %s556
          %s559 = sshll.u32 %s546, 4
          %s560 = int_to_ptr.vmem [resolvable:$true] %s559
          %562 = dma.vmem_to_hbm [thread:$0]  %s560, 64, %s557, %s543
        $region64: #{_lambda_.22} parent=39 // pred_fallthru
          _
      $region40: #{_lambda_.22} parent=5 // pred_fallthru
        _
      %p563 = scmp.le.s32.totalorder 2, %s21
      // Predicated region
      $region65: #{_lambda_.22} parent=5 // pred_check
        %p564 = pneg %p563
      $region66: #{_lambda_.22} parent=5 // pred_check_branch
        %566 = sbr.rel (%p564) target = $region68
      $region67: #{_lambda_.22} parent=5 // pred_region
        %s567 = ssub.s32 %s21, 2
        // Predicated region
        $region69: #{_lambda_.22} parent=67 // pred_check
          %p568 = pneg %p213
        $region70: #{_lambda_.22} parent=67 // pred_check_branch
          %570 = sbr.rel (%p568) target = $region72
        $region71: #{_lambda_.22} parent=67 // pred_region
          %s571 = sand.u32 %s198, 1
          %s572 = scalar_lea.sflag [#allocation4], %s571
          %s573 = sand.u32 %s198, 1
          %s574 = smul.addr %s573, 4
          %s575 = scalar_lea.vmem [#allocation11], %s574
          %576 = dma.done %s572, 64
        $region72: #{_lambda_.22} parent=67 // pred_fallthru
          _
      $region68: #{_lambda_.22} parent=5 // pred_fallthru
        _
    $region6: #{_lambda_.22} parent=1 // loop_footer
      %s25 = sadd.s32 1, %s21
    $region7: #{_lambda_.22} parent=1 // loop_footer_branch
      %20 = sbr.rel target = $region3
    $region8: #{_lambda_.22} parent=1 // loop_exit
      _
    %577 = vsyncpa [#allocation3], 1
    %s578 = scalar_lea.sflag [#allocation3], 1
    %579 = vsyncpa %s578, 1
    %580 = vsyncpa [#allocation6], 1
    %s581 = scalar_lea.sflag [#allocation6], 1
    %582 = vsyncpa %s581, 1
    %583 = vsyncpa [#allocation9], 1
    %584 = vsyncpa [#allocation4], 1
    %s585 = scalar_lea.sflag [#allocation4], 1
    %586 = vsyncpa %s585, 1

// kernel: _lambda_.33
$region0: #{_lambda_.33}
  #allocation0 [shape = 'u32[]', space=smem, size = 0x4, offset = 0x4, fixed_abs, tag = 'smem constant byte address 0x4 - core index']
  #allocation1 [shape = 'u32[144,128]{1,0:T(1,128)}', space=vmem, size = 0x12000, scoped, tag = 'internal scratch']
  %s0 = inlined_call_operand.hbm [shape: bf16[16,128], index: 0, kind: input, shape index: {}]
  %s1 = inlined_call_operand.hbm [shape: f32[1,128], index: 1, kind: input, shape index: {}]
  %s2 = inlined_call_operand.hbm [shape: f32[1,128], index: 2, kind: input, shape index: {}]
  %s3 = inlined_call_operand.hbm [shape: f32[16,128], index: 3, kind: output, shape index: {}]
  %s4 = sld [smem:[#allocation0]]
  $region34: #{_lambda_.33} parent=0
    _
  %s6 = ssub.s32 1, %s4
  %s7 = scalar_select 0, %s6, %s4
  $region1: #{_lambda_.33} parent=0
    #allocation2 [shape = 'u8[4096]{0}', space=vmem, size = 0x1000, scoped, tag = 'input window, operand 0, single buffered']
    #allocation3 [shape = 's32[1]{0}', space=sflag, size = 0x4, scoped, tag = 'scoped memory for _lambda_.33']
    #allocation4 [shape = 's32[1]{0}', space=sflag, size = 0x4, scoped, tag = 'scoped memory for _lambda_.33']
    #allocation5 [shape = 'u8[512]{0}', space=vmem, size = 0x400, scoped, tag = 'input window, operand 1, single buffered']
    #allocation6 [shape = 's32[1]{0}', space=sflag, size = 0x4, scoped, tag = 'scoped memory for _lambda_.33']
    #allocation7 [shape = 'u8[512]{0}', space=vmem, size = 0x400, scoped, tag = 'input window, operand 2, single buffered']
    #allocation8 [shape = 'u8[8192]{0}', space=vmem, size = 0x2000, scoped, tag = 'output window, operand 0, single buffered']
    %8 = vsyncpa [#allocation3], 0
    %9 = vsyncpa [#allocation6], 0
    %10 = vsyncpa [#allocation4], 0
    // Predicated region
    $region2: #{_lambda_.33} parent=1 // pred_check
      _
    $region3: #{_lambda_.33} parent=1 // pred_check_branch
      %12 = sbr.rel (0) target = $region5
    $region4: #{_lambda_.33} parent=1 // pred_region
      %s14 = ssub.s32 128, 128
      %15 = vsyncadd [#allocation3], %s14
      %s16 = sshll.u32 [#allocation2], 4
      %s17 = int_to_ptr.vmem [resolvable:$true] %s16
      %22 = dma.hbm_to_vmem [thread:$0]  %s0, 128, %s17, [#allocation3], 64, 64, 4
    $region5: #{_lambda_.33} parent=1 // pred_fallthru
      _
    // Predicated region
    $region6: #{_lambda_.33} parent=1 // pred_check
      _
    $region7: #{_lambda_.33} parent=1 // pred_check_branch
      %24 = sbr.rel (0) target = $region9
    $region8: #{_lambda_.33} parent=1 // pred_region
      %s26 = ssub.s32 16, 16
      %27 = vsyncadd [#allocation6], %s26
      %s29 = sshll.u32 [#allocation5], 4
      %s30 = int_to_ptr.vmem [resolvable:$true] %s29
      %32 = dma.hbm_to_vmem [thread:$0]  %s1, 16, %s30, [#allocation6]
    $region9: #{_lambda_.33} parent=1 // pred_fallthru
      _
    // Predicated region
    $region10: #{_lambda_.33} parent=1 // pred_check
      _
    $region11: #{_lambda_.33} parent=1 // pred_check_branch
      %34 = sbr.rel (0) target = $region13
    $region12: #{_lambda_.33} parent=1 // pred_region
      %s36 = ssub.s32 16, 16
      %37 = vsyncadd [#allocation6], %s36
      %s39 = sshll.u32 [#allocation7], 4
      %s40 = int_to_ptr.vmem [resolvable:$true] %s39
      %42 = dma.hbm_to_vmem [thread:$0]  %s2, 16, %s40, [#allocation6]
    $region13: #{_lambda_.33} parent=1 // pred_fallthru
      _
    // Predicated region
    $region14: #{_lambda_.33} parent=1 // pred_check
      _
    $region15: #{_lambda_.33} parent=1 // pred_check_branch
      %44 = sbr.rel (0) target = $region17
    $region16: #{_lambda_.33} parent=1 // pred_region
      %45 = dma.done [#allocation3], 128
    $region17: #{_lambda_.33} parent=1 // pred_fallthru
      _
    // Predicated region
    $region18: #{_lambda_.33} parent=1 // pred_check
      _
    $region19: #{_lambda_.33} parent=1 // pred_check_branch
      %47 = sbr.rel (0) target = $region21
    $region20: #{_lambda_.33} parent=1 // pred_region
      %48 = dma.done [#allocation6], 16
    $region21: #{_lambda_.33} parent=1 // pred_fallthru
      _
    // Predicated region
    $region22: #{_lambda_.33} parent=1 // pred_check
      _
    $region23: #{_lambda_.33} parent=1 // pred_check_branch
      %50 = sbr.rel (0) target = $region25
    $region24: #{_lambda_.33} parent=1 // pred_region
      %51 = dma.done [#allocation6], 16
    $region25: #{_lambda_.33} parent=1 // pred_fallthru
      _
    %v52 = vld [vmem:[#allocation2] sm:$0xf]
    %v53 = vld [vmem:[#allocation2 + $0x4] sm:$0xf]
    %v54 = vunpack.c.l.bf16 %v52
    %v55 = vunpack.c.l.bf16 %v53
    %56 = vadd.xlane.f32.xlu0 %v54
    %v57 = vpop.xlane.xlu0 %56
    %58 = vadd.xlane.f32.xlu0 %v55
    %v59 = vpop.xlane.xlu0 %58
    %v60 = vrcp.pop 128.0
    %v61 = vmul.f32 %v57, %v60
    %v62 = vmul.f32 %v59, %v60
    %v63 = vsub.f32 %v54, %v61
    %v64 = vsub.f32 %v55, %v62
    %v65 = vmul.f32 %v63, %v63
    %v66 = vmul.f32 %v64, %v64
    %67 = vadd.xlane.f32.xlu0 %v65
    %v68 = vpop.xlane.xlu0 %67
    %69 = vadd.xlane.f32.xlu0 %v66
    %v70 = vpop.xlane.xlu0 %69
    %v71 = vmul.f32 %v68, %v60
    %v72 = vmul.f32 %v70, %v60
    %v73 = vadd.f32 %v71, 1e-05
    %v74 = vadd.f32 %v72, 1e-05
    %v75 = vrsqrt.pop %v73
    %v76 = vrsqrt.pop %v74
    %v77 = vmul.f32 %v63, %v75
    %v78 = vmul.f32 %v64, %v76
    %v79 = vld [vmem:[#allocation5] sm:$0x1]
    %v81 = vlaneseq
    %v82 = vshrl.u32 %v81, 7
    %v83 = vsub.s32 0, %v82
    %v84 = vrot.slane %v79, %v83
    %v86 = vmul.f32 %v77, %v84
    %v87 = vmul.f32 %v78, %v84
    %v88 = vld [vmem:[#allocation7] sm:$0x1]
    %v90 = vlaneseq
    %v91 = vshrl.u32 %v90, 7
    %v92 = vsub.s32 0, %v91
    %v93 = vrot.slane %v88, %v92
    %v95 = vadd.f32 %v86, %v93
    %v96 = vadd.f32 %v87, %v93
    %97 = vst [vmem:[#allocation8] sm:$0xff] %v95
    %98 = vst [vmem:[#allocation8 + $0x8] sm:$0xff] %v96
    // Predicated region
    $region26: #{_lambda_.33} parent=1 // pred_check
      _
    $region27: #{_lambda_.33} parent=1 // pred_check_branch
      %100 = sbr.rel (0) target = $region29
    $region28: #{_lambda_.33} parent=1 // pred_region
      %s102 = ssub.s32 256, 256
      %103 = vsyncadd [#allocation4], %s102
      %s104 = sshll.u32 [#allocation8], 4
      %s105 = int_to_ptr.vmem [resolvable:$true] %s104
      %110 = dma.vmem_to_hbm [thread:$0]  %s105, 256, %s3, [#allocation4], 128, 128, 8
    $region29: #{_lambda_.33} parent=1 // pred_fallthru
      _
    // Predicated region
    $region30: #{_lambda_.33} parent=1 // pred_check
      _
    $region31: #{_lambda_.33} parent=1 // pred_check_branch
      %112 = sbr.rel (0) target = $region33
    $region32: #{_lambda_.33} parent=1 // pred_region
      %113 = dma.done [#allocation4], 256
    $region33: #{_lambda_.33} parent=1 // pred_fallthru
      _
    %114 = vsyncpa [#allocation3], 1
    %115 = vsyncpa [#allocation6], 1
    %116 = vsyncpa [#allocation4], 1

// kernel: _lambda_.24
$region0: #{_lambda_.24}
  #allocation0 [shape = 'u32[]', space=smem, size = 0x4, offset = 0x4, fixed_abs, tag = 'smem constant byte address 0x4 - core index']
  #allocation1 [shape = 'u32[144,128]{1,0:T(1,128)}', space=vmem, size = 0x12000, scoped, tag = 'internal scratch']
  #allocation2 [shape = 'f32[16,128]{1,0:T(8,128)}', space=vmem, size = 0x2000, scoped, tag = 'scratch operand']
  %s0 = inlined_call_operand.hbm [shape: bf16[16,128], index: 0, kind: input, shape index: {}]
  %s1 = inlined_call_operand.hbm [shape: bf16[128,256], index: 1, kind: input, shape index: {}]
  %s2 = inlined_call_operand.hbm [shape: f32[1,256], index: 2, kind: input, shape index: {}]
  %s3 = inlined_call_operand.hbm [shape: bf16[256,128], index: 3, kind: input, shape index: {}]
  %s4 = inlined_call_operand.hbm [shape: f32[1,128], index: 4, kind: input, shape index: {}, may-alias: {4,6}]
  %s5 = inlined_call_operand.hbm [shape: f32[1,128], index: 5, kind: input, shape index: {}]
  %s6 = inlined_call_operand.hbm [shape: f32[1,128], index: 6, kind: input, shape index: {}, may-alias: {4,6}]
  %s7 = inlined_call_operand.hbm [shape: bf16[16,128], index: 7, kind: output, shape index: {}]
  %s8 = sld [smem:[#allocation0]]
  $region74: #{_lambda_.24} parent=0
    _
  %s10 = ssub.s32 1, %s8
  %s11 = scalar_select 0, %s10, %s8
  $region1: #{_lambda_.24} parent=0
    #allocation3 [shape = 'u8[4096]{0}', space=vmem, size = 0x1000, scoped, tag = 'input window, operand 0, single buffered']
    #allocation4 [shape = 's32[1]{0}', space=sflag, size = 0x4, scoped, tag = 'scoped memory for _lambda_.24']
    #allocation5 [shape = 's32[1]{0}', space=sflag, size = 0x4, scoped, tag = 'scoped memory for _lambda_.24']
    #allocation6 [shape = 'u8[65536]{0}', space=vmem, size = 0x10000, scoped, tag = 'input window, operand 1, single buffered']
    #allocation7 [shape = 's32[1]{0}', space=sflag, size = 0x4, scoped, tag = 'scoped memory for _lambda_.24']
    #allocation8 [shape = 'u8[1024]{0}', space=vmem, size = 0x400, scoped, tag = 'input window, operand 2, single buffered']
    #allocation9 [shape = 'u8[65536]{0}', space=vmem, size = 0x10000, scoped, tag = 'input window, operand 3, single buffered']
    #allocation10 [shape = 's32[1]{0}', space=sflag, size = 0x4, scoped, tag = 'scoped memory for _lambda_.24']
    #allocation11 [shape = 'u8[512]{0}', space=vmem, size = 0x400, scoped, tag = 'input window, operand 4, single buffered']
    #allocation12 [shape = 'u8[512]{0}', space=vmem, size = 0x400, scoped, tag = 'input window, operand 5, single buffered']
    #allocation13 [shape = 's32[1]{0}', space=sflag, size = 0x4, scoped, tag = 'scoped memory for _lambda_.24']
    #allocation14 [shape = 'u8[512]{0}', space=vmem, size = 0x400, scoped, tag = 'input window, operand 6, single buffered']
    #allocation15 [shape = 'u8[4096]{0}', space=vmem, size = 0x1000, scoped, tag = 'output window, operand 0, single buffered']
    %12 = vsyncpa [#allocation4], 0
    %13 = vsyncpa [#allocation7], 0
    %14 = vsyncpa [#allocation10], 0
    %15 = vsyncpa [#allocation13], 0
    %16 = vsyncpa [#allocation5], 0
    // Predicated region
    $region2: #{_lambda_.24} parent=1 // pred_check
      _
    $region3: #{_lambda_.24} parent=1 // pred_check_branch
      %18 = sbr.rel (0) target = $region5
    $region4: #{_lambda_.24} parent=1 // pred_region
      %s20 = ssub.s32 128, 128
      %21 = vsyncadd [#allocation4], %s20
      %s22 = sshll.u32 [#allocation3], 4
      %s23 = int_to_ptr.vmem [resolvable:$true] %s22
      %28 = dma.hbm_to_vmem [thread:$0]  %s0, 128, %s23, [#allocation4], 64, 64, 4
    $region5: #{_lambda_.24} parent=1 // pred_fallthru
      _
    // Predicated region
    $region6: #{_lambda_.24} parent=1 // pred_check
      _
    $region7: #{_lambda_.24} parent=1 // pred_check_branch
      %30 = sbr.rel (0) target = $region9
    $region8: #{_lambda_.24} parent=1 // pred_region
      %s32 = ssub.s32 2048, 2048
      %33 = vsyncadd [#allocation7], %s32
      %s34 = sshll.u32 [#allocation6], 4
      %s35 = int_to_ptr.vmem [resolvable:$true] %s34
      %40 = dma.hbm_to_vmem [thread:$0]  %s1, 2048, %s35, [#allocation7], 128, 128, 8
    $region9: #{_lambda_.24} parent=1 // pred_fallthru
      _
    // Predicated region
    $region10: #{_lambda_.24} parent=1 // pred_check
      _
    $region11: #{_lambda_.24} parent=1 // pred_check_branch
      %42 = sbr.rel (0) target = $region13
    $region12: #{_lambda_.24} parent=1 // pred_region
      %s44 = ssub.s32 32, 32
      %45 = vsyncadd [#allocation7], %s44
      %s47 = sshll.u32 [#allocation8], 4
      %s48 = int_to_ptr.vmem [resolvable:$true] %s47
      %50 = dma.hbm_to_vmem [thread:$0]  %s2, 32, %s48, [#allocation7]
    $region13: #{_lambda_.24} parent=1 // pred_fallthru
      _
    // Predicated region
    $region14: #{_lambda_.24} parent=1 // pred_check
      _
    $region15: #{_lambda_.24} parent=1 // pred_check_branch
      %52 = sbr.rel (0) target = $region17
    $region16: #{_lambda_.24} parent=1 // pred_region
      %s54 = ssub.s32 2048, 2048
      %55 = vsyncadd [#allocation10], %s54
      %s56 = sshll.u32 [#allocation9], 4
      %s57 = int_to_ptr.vmem [resolvable:$true] %s56
      %62 = dma.hbm_to_vmem [thread:$0]  %s3, 2048, %s57, [#allocation10], 64, 64, 4
    $region17: #{_lambda_.24} parent=1 // pred_fallthru
      _
    // Predicated region
    $region18: #{_lambda_.24} parent=1 // pred_check
      _
    $region19: #{_lambda_.24} parent=1 // pred_check_branch
      %64 = sbr.rel (0) target = $region21
    $region20: #{_lambda_.24} parent=1 // pred_region
      %s66 = ssub.s32 16, 16
      %67 = vsyncadd [#allocation10], %s66
      %s69 = sshll.u32 [#allocation11], 4
      %s70 = int_to_ptr.vmem [resolvable:$true] %s69
      %72 = dma.hbm_to_vmem [thread:$0]  %s4, 16, %s70, [#allocation10]
    $region21: #{_lambda_.24} parent=1 // pred_fallthru
      _
    // Predicated region
    $region22: #{_lambda_.24} parent=1 // pred_check
      _
    $region23: #{_lambda_.24} parent=1 // pred_check_branch
      %74 = sbr.rel (0) target = $region25
    $region24: #{_lambda_.24} parent=1 // pred_region
      %s76 = ssub.s32 16, 16
      %77 = vsyncadd [#allocation13], %s76
      %s79 = sshll.u32 [#allocation12], 4
      %s80 = int_to_ptr.vmem [resolvable:$true] %s79
      %82 = dma.hbm_to_vmem [thread:$0]  %s5, 16, %s80, [#allocation13]
    $region25: #{_lambda_.24} parent=1 // pred_fallthru
      _
    // Predicated region
    $region26: #{_lambda_.24} parent=1 // pred_check
      _
    $region27: #{_lambda_.24} parent=1 // pred_check_branch
      %84 = sbr.rel (0) target = $region29
    $region28: #{_lambda_.24} parent=1 // pred_region
      %s86 = ssub.s32 16, 16
      %87 = vsyncadd [#allocation13], %s86
      %s89 = sshll.u32 [#allocation14], 4
      %s90 = int_to_ptr.vmem [resolvable:$true] %s89
      %92 = dma.hbm_to_vmem [thread:$0]  %s6, 16, %s90, [#allocation13]
    $region29: #{_lambda_.24} parent=1 // pred_fallthru
      _
    // Predicated region
    $region30: #{_lambda_.24} parent=1 // pred_check
      _
    $region31: #{_lambda_.24} parent=1 // pred_check_branch
      %94 = sbr.rel (0) target = $region33
    $region32: #{_lambda_.24} parent=1 // pred_region
      %95 = dma.done [#allocation4], 128
    $region33: #{_lambda_.24} parent=1 // pred_fallthru
      _
    // Predicated region
    $region34: #{_lambda_.24} parent=1 // pred_check
      _
    $region35: #{_lambda_.24} parent=1 // pred_check_branch
      %97 = sbr.rel (0) target = $region37
    $region36: #{_lambda_.24} parent=1 // pred_region
      %98 = dma.done [#allocation7], 2048
    $region37: #{_lambda_.24} parent=1 // pred_fallthru
      _
    // Predicated region
    $region38: #{_lambda_.24} parent=1 // pred_check
      _
    $region39: #{_lambda_.24} parent=1 // pred_check_branch
      %100 = sbr.rel (0) target = $region41
    $region40: #{_lambda_.24} parent=1 // pred_region
      %101 = dma.done [#allocation7], 32
    $region41: #{_lambda_.24} parent=1 // pred_fallthru
      _
    // Predicated region
    $region42: #{_lambda_.24} parent=1 // pred_check
      _
    $region43: #{_lambda_.24} parent=1 // pred_check_branch
      %103 = sbr.rel (0) target = $region45
    $region44: #{_lambda_.24} parent=1 // pred_region
      %104 = dma.done [#allocation10], 2048
    $region45: #{_lambda_.24} parent=1 // pred_fallthru
      _
    // Predicated region
    $region46: #{_lambda_.24} parent=1 // pred_check
      _
    $region47: #{_lambda_.24} parent=1 // pred_check_branch
      %106 = sbr.rel (0) target = $region49
    $region48: #{_lambda_.24} parent=1 // pred_region
      %107 = dma.done [#allocation10], 16
    $region49: #{_lambda_.24} parent=1 // pred_fallthru
      _
    // Predicated region
    $region50: #{_lambda_.24} parent=1 // pred_check
      _
    $region51: #{_lambda_.24} parent=1 // pred_check_branch
      %109 = sbr.rel (0) target = $region53
    $region52: #{_lambda_.24} parent=1 // pred_region
      %110 = dma.done [#allocation13], 16
    $region53: #{_lambda_.24} parent=1 // pred_fallthru
      _
    // Predicated region
    $region54: #{_lambda_.24} parent=1 // pred_check
      _
    $region55: #{_lambda_.24} parent=1 // pred_check_branch
      %112 = sbr.rel (0) target = $region57
    $region56: #{_lambda_.24} parent=1 // pred_region
      %113 = dma.done [#allocation13], 16
    $region57: #{_lambda_.24} parent=1 // pred_fallthru
      _
    %p115 = scmp.eq.s32.totalorder 0, 0
    // Predicated region
    $region58: #{_lambda_.24} parent=1 // pred_check
      %p116 = pneg %p115
    $region59: #{_lambda_.24} parent=1 // pred_check_branch
      %118 = sbr.rel (%p116) target = $region61
    $region60: #{_lambda_.24} parent=1 // pred_region
      %119 = vst [vmem:[#allocation2] sm:$0xff] 0.0
      %120 = vst [vmem:[#allocation2 + $0x8] sm:$0xff] 0.0
    $region61: #{_lambda_.24} parent=1 // pred_fallthru
      _
    %v121 = vld [vmem:[#allocation3] sm:$0xf]
    %v122 = vld [vmem:[#allocation3 + $0x4] sm:$0xf]
    %v123 = vld [vmem:[#allocation6] sm:$0xff]
    %v124 = vld [vmem:[#allocation6 + $0x8] sm:$0xff]
    %v125 = vld [vmem:[#allocation6 + $0x10] sm:$0xff]
    %v126 = vld [vmem:[#allocation6 + $0x18] sm:$0xff]
    %v127 = vld [vmem:[#allocation6 + $0x20] sm:$0xff]
    %v128 = vld [vmem:[#allocation6 + $0x28] sm:$0xff]
    %v129 = vld [vmem:[#allocation6 + $0x30] sm:$0xff]
    %v130 = vld [vmem:[#allocation6 + $0x38] sm:$0xff]
    %v131 = vld [vmem:[#allocation6 + $0x40] sm:$0xff]
    %v132 = vld [vmem:[#allocation6 + $0x48] sm:$0xff]
    %v133 = vld [vmem:[#allocation6 + $0x50] sm:$0xff]
    %v134 = vld [vmem:[#allocation6 + $0x58] sm:$0xff]
    %v135 = vld [vmem:[#allocation6 + $0x60] sm:$0xff]
    %v136 = vld [vmem:[#allocation6 + $0x68] sm:$0xff]
    %v137 = vld [vmem:[#allocation6 + $0x70] sm:$0xff]
    %v138 = vld [vmem:[#allocation6 + $0x78] sm:$0xff]
    %v139 = vld [vmem:[#allocation8] sm:$0x3]
    %v141 = vlaneseq
    %v142 = vshrl.u32 %v141, 7
    %v143 = vsub.s32 0, %v142
    %v144 = vrot.slane %v139, %v143
    %v145 = vlaneseq
    %v146 = vshrl.u32 %v145, 7
    %v147 = vsub.s32 1, %v146
    %v148 = vrot.slane %v139, %v147
    %v153 = vunpack.c.l.b16 %v121
    %v154 = vunpack.c.l.b16 %v122
    %v155 = vpack.c.b16 %v154, %v153
    %v173 = vunpack.c.l.b16 %v123
    %v174 = vunpack.c.h.b16 %v123
    %v175 = vunpack.c.l.b16 %v124
    %v176 = vunpack.c.h.b16 %v124
    %v177 = vunpack.c.l.b16 %v125
    %v178 = vunpack.c.h.b16 %v125
    %v179 = vunpack.c.l.b16 %v126
    %v180 = vunpack.c.h.b16 %v126
    %v181 = vunpack.c.l.b16 %v127
    %v182 = vunpack.c.h.b16 %v127
    %v183 = vunpack.c.l.b16 %v128
    %v184 = vunpack.c.h.b16 %v128
    %v185 = vunpack.c.l.b16 %v129
    %v186 = vunpack.c.h.b16 %v129
    %v187 = vunpack.c.l.b16 %v130
    %v188 = vunpack.c.h.b16 %v130
    %v189 = vunpack.c.l.b16 %v131
    %v190 = vunpack.c.h.b16 %v131
    %v191 = vunpack.c.l.b16 %v132
    %v192 = vunpack.c.h.b16 %v132
    %v193 = vunpack.c.l.b16 %v133
    %v194 = vunpack.c.h.b16 %v133
    %v195 = vunpack.c.l.b16 %v134
    %v196 = vunpack.c.h.b16 %v134
    %v197 = vunpack.c.l.b16 %v135
    %v198 = vunpack.c.h.b16 %v135
    %v199 = vunpack.c.l.b16 %v136
    %v200 = vunpack.c.h.b16 %v136
    %v201 = vunpack.c.l.b16 %v137
    %v202 = vunpack.c.h.b16 %v137
    %v203 = vunpack.c.l.b16 %v138
    %v204 = vunpack.c.h.b16 %v138
    %v205 = vpack.c.b16 %v175, %v173
    %v206 = vpack.c.b16 %v176, %v174
    %v207 = vpack.c.b16 %v179, %v177
    %v208 = vpack.c.b16 %v180, %v178
    %v209 = vpack.c.b16 %v183, %v181
    %v210 = vpack.c.b16 %v184, %v182
    %v211 = vpack.c.b16 %v187, %v185
    %v212 = vpack.c.b16 %v188, %v186
    %v213 = vpack.c.b16 %v191, %v189
    %v214 = vpack.c.b16 %v192, %v190
    %v215 = vpack.c.b16 %v195, %v193
    %v216 = vpack.c.b16 %v196, %v194
    %v217 = vpack.c.b16 %v199, %v197
    %v218 = vpack.c.b16 %v200, %v198
    %v219 = vpack.c.b16 %v203, %v201
    %v220 = vpack.c.b16 %v204, %v202
    %237 = vmatprep.subr.bf16.mxu0 %v206
    %238 = vmatpush1.bf16.msra.mxu0 %v205
    %239 = vmatprep.subr.bf16.mxu0 %v208
    %240 = vmatpush1.bf16.msra.mxu0 %v207
    %241 = vmatprep.subr.bf16.mxu0 %v210
    %242 = vmatpush1.bf16.msra.mxu0 %v209
    %243 = vmatprep.subr.bf16.mxu0 %v212
    %244 = vmatpush1.bf16.msra.mxu0 %v211
    %245 = vmatprep.subr.bf16.mxu0 %v214
    %246 = vmatpush1.bf16.msra.mxu0 %v213
    %247 = vmatprep.subr.bf16.mxu0 %v216
    %248 = vmatpush1.bf16.msra.mxu0 %v215
    %249 = vmatprep.subr.bf16.mxu0 %v218
    %250 = vmatpush1.bf16.msra.mxu0 %v217
    %251 = vmatprep.subr.bf16.mxu0 %v220
    %252 = vmatpush1.bf16.msra.mxu0 %v219
    %253 = vmatprep.subr.bf16.mxu0 0
    %254 = vmatpush1.bf16.msra.mxu0 0
    %255 = vmatprep.subr.bf16.mxu0 0
    %256 = vmatpush1.bf16.msra.mxu0 0
    %257 = vmatprep.subr.bf16.mxu0 0
    %258 = vmatpush1.bf16.msra.mxu0 0
    %259 = vmatprep.subr.bf16.mxu0 0
    %260 = vmatpush1.bf16.msra.mxu0 0
    %261 = vmatprep.subr.bf16.mxu0 0
    %262 = vmatpush1.bf16.msra.mxu0 0
    %263 = vmatprep.subr.bf16.mxu0 0
    %264 = vmatpush1.bf16.msra.mxu0 0
    %265 = vmatprep.subr.bf16.mxu0 0
    %266 = vmatpush1.bf16.msra.mxu0 0
    %267 = vmatprep.subr.bf16.mxu0 0
    %268 = vmatpush1.bf16.msra.mxu0 0
    %269 = vmatprep.mubr.bf16.mxu0 0
    %270 = vmatmul.mubr.bf16.gmra.mrb[0].mxu0 %v155
    %v271 = vpop.f32.mrb[0].mxu0
    %v272 = vadd.f32 %v144, %v271
    %v273 = vpop.f32.mrb[0].mxu0
    %v274 = vadd.f32 %v148, %v273
    %v275 = vpop.f32.mrb[0].mxu0
    %v276 = vadd.f32 %v144, %v275
    %v277 = vpop.f32.mrb[0].mxu0
    %v278 = vadd.f32 %v148, %v277
    %279 = vdwg.mxu0
    %v280 = vmax.f32 %v272, 0.0
    %v281 = vmax.f32 %v274, 0.0
    %v282 = vmax.f32 %v276, 0.0
    %v283 = vmax.f32 %v278, 0.0
    %v284 = vpack.c.bf16 %v282, %v280
    %v285 = vpack.c.bf16 %v283, %v281
    %v286 = vld [vmem:[#allocation2] sm:$0xff]
    %v287 = vld [vmem:[#allocation2 + $0x8] sm:$0xff]
    %v288 = vld [vmem:[#allocation9] sm:$0xf]
    %v289 = vld [vmem:[#allocation9 + $0x4] sm:$0xf]
    %v290 = vld [vmem:[#allocation9 + $0x8] sm:$0xf]
    %v291 = vld [vmem:[#allocation9 + $0xc] sm:$0xf]
    %v292 = vld [vmem:[#allocation9 + $0x10] sm:$0xf]
    %v293 = vld [vmem:[#allocation9 + $0x14] sm:$0xf]
    %v294 = vld [vmem:[#allocation9 + $0x18] sm:$0xf]
    %v295 = vld [vmem:[#allocation9 + $0x1c] sm:$0xf]
    %v296 = vld [vmem:[#allocation9 + $0x20] sm:$0xf]
    %v297 = vld [vmem:[#allocation9 + $0x24] sm:$0xf]
    %v298 = vld [vmem:[#allocation9 + $0x28] sm:$0xf]
    %v299 = vld [vmem:[#allocation9 + $0x2c] sm:$0xf]
    %v300 = vld [vmem:[#allocation9 + $0x30] sm:$0xf]
    %v301 = vld [vmem:[#allocation9 + $0x34] sm:$0xf]
    %v302 = vld [vmem:[#allocation9 + $0x38] sm:$0xf]
    %v303 = vld [vmem:[#allocation9 + $0x3c] sm:$0xf]
    %v304 = vld [vmem:[#allocation9 + $0x40] sm:$0xf]
    %v305 = vld [vmem:[#allocation9 + $0x44] sm:$0xf]
    %v306 = vld [vmem:[#allocation9 + $0x48] sm:$0xf]
    %v307 = vld [vmem:[#allocation9 + $0x4c] sm:$0xf]
    %v308 = vld [vmem:[#allocation9 + $0x50] sm:$0xf]
    %v309 = vld [vmem:[#allocation9 + $0x54] sm:$0xf]
    %v310 = vld [vmem:[#allocation9 + $0x58] sm:$0xf]
    %v311 = vld [vmem:[#allocation9 + $0x5c] sm:$0xf]
    %v312 = vld [vmem:[#allocation9 + $0x60] sm:$0xf]
    %v313 = vld [vmem:[#allocation9 + $0x64] sm:$0xf]
    %v314 = vld [vmem:[#allocation9 + $0x68] sm:$0xf]
    %v315 = vld [vmem:[#allocation9 + $0x6c] sm:$0xf]
    %v316 = vld [vmem:[#allocation9 + $0x70] sm:$0xf]
    %v317 = vld [vmem:[#allocation9 + $0x74] sm:$0xf]
    %v318 = vld [vmem:[#allocation9 + $0x78] sm:$0xf]
    %v319 = vld [vmem:[#allocation9 + $0x7c] sm:$0xf]
    %v352 = vunpack.c.l.b16 %v288
    %v353 = vunpack.c.l.b16 %v289
    %v354 = vunpack.c.l.b16 %v290
    %v355 = vunpack.c.l.b16 %v291
    %v356 = vunpack.c.l.b16 %v292
    %v357 = vunpack.c.l.b16 %v293
    %v358 = vunpack.c.l.b16 %v294
    %v359 = vunpack.c.l.b16 %v295
    %v360 = vunpack.c.l.b16 %v296
    %v361 = vunpack.c.l.b16 %v297
    %v362 = vunpack.c.l.b16 %v298
    %v363 = vunpack.c.l.b16 %v299
    %v364 = vunpack.c.l.b16 %v300
    %v365 = vunpack.c.l.b16 %v301
    %v366 = vunpack.c.l.b16 %v302
    %v367 = vunpack.c.l.b16 %v303
    %v368 = vunpack.c.l.b16 %v304
    %v369 = vunpack.c.l.b16 %v305
    %v370 = vunpack.c.l.b16 %v306
    %v371 = vunpack.c.l.b16 %v307
    %v372 = vunpack.c.l.b16 %v308
    %v373 = vunpack.c.l.b16 %v309
    %v374 = vunpack.c.l.b16 %v310
    %v375 = vunpack.c.l.b16 %v311
    %v376 = vunpack.c.l.b16 %v312
    %v377 = vunpack.c.l.b16 %v313
    %v378 = vunpack.c.l.b16 %v314
    %v379 = vunpack.c.l.b16 %v315
    %v380 = vunpack.c.l.b16 %v316
    %v381 = vunpack.c.l.b16 %v317
    %v382 = vunpack.c.l.b16 %v318
    %v383 = vunpack.c.l.b16 %v319
    %v384 = vpack.c.b16 %v353, %v352
    %v385 = vpack.c.b16 %v355, %v354
    %v386 = vpack.c.b16 %v357, %v356
    %v387 = vpack.c.b16 %v359, %v358
    %v388 = vpack.c.b16 %v361, %v360
    %v389 = vpack.c.b16 %v363, %v362
    %v390 = vpack.c.b16 %v365, %v364
    %v391 = vpack.c.b16 %v367, %v366
    %v392 = vpack.c.b16 %v369, %v368
    %v393 = vpack.c.b16 %v371, %v370
    %v394 = vpack.c.b16 %v373, %v372
    %v395 = vpack.c.b16 %v375, %v374
    %v396 = vpack.c.b16 %v377, %v376
    %v397 = vpack.c.b16 %v379, %v378
    %v398 = vpack.c.b16 %v381, %v380
    %v399 = vpack.c.b16 %v383, %v382
    %416 = vmatprep.subr.bf16.mxu0 0
    %417 = vmatpush1.bf16.msra.mxu0 %v384
    %418 = vmatprep.subr.bf16.mxu0 0
    %419 = vmatpush1.bf16.msra.mxu0 %v385
    %420 = vmatprep.subr.bf16.mxu0 0
    %421 = vmatpush1.bf16.msra.mxu0 %v386
    %422 = vmatprep.subr.bf16.mxu0 0
    %423 = vmatpush1.bf16.msra.mxu0 %v387
    %424 = vmatprep.subr.bf16.mxu0 0
    %425 = vmatpush1.bf16.msra.mxu0 %v388
    %426 = vmatprep.subr.bf16.mxu0 0
    %427 = vmatpush1.bf16.msra.mxu0 %v389
    %428 = vmatprep.subr.bf16.mxu0 0
    %429 = vmatpush1.bf16.msra.mxu0 %v390
    %430 = vmatprep.subr.bf16.mxu0 0
    %431 = vmatpush1.bf16.msra.mxu0 %v391
    %432 = vmatprep.subr.bf16.mxu0 0
    %433 = vmatpush1.bf16.msra.mxu0 %v392
    %434 = vmatprep.subr.bf16.mxu0 0
    %435 = vmatpush1.bf16.msra.mxu0 %v393
    %436 = vmatprep.subr.bf16.mxu0 0
    %437 = vmatpush1.bf16.msra.mxu0 %v394
    %438 = vmatprep.subr.bf16.mxu0 0
    %439 = vmatpush1.bf16.msra.mxu0 %v395
    %440 = vmatprep.subr.bf16.mxu0 0
    %441 = vmatpush1.bf16.msra.mxu0 %v396
    %442 = vmatprep.subr.bf16.mxu0 0
    %443 = vmatpush1.bf16.msra.mxu0 %v397
    %444 = vmatprep.subr.bf16.mxu0 0
    %445 = vmatpush1.bf16.msra.mxu0 %v398
    %446 = vmatprep.subr.bf16.mxu0 0
    %447 = vmatpush1.bf16.msra.mxu0 %v399
    %448 = vmatprep.mubr.bf16.mxu0 %v285
    %449 = vmatmul.mubr.bf16.gmra.mrb[0].mxu0 %v284
    %v450 = vpop.f32.mrb[0].mxu0
    %v451 = vadd.f32 0.0, %v450
    %v452 = vpop.f32.mrb[0].mxu0
    %v453 = vpop.f32.mrb[0].mxu0
    %v454 = vadd.f32 0.0, %v453
    %v455 = vpop.f32.mrb[0].mxu0
    %456 = vdwg.mxu0
    %v457 = vadd.f32 %v286, %v451
    %v458 = vadd.f32 %v287, %v454
    %459 = vst [vmem:[#allocation2] sm:$0xff] %v457
    %460 = vst [vmem:[#allocation2 + $0x8] sm:$0xff] %v458
    // Predicated region
    $region62: #{_lambda_.24} parent=1 // pred_check
      %p461 = pneg %p115
    $region63: #{_lambda_.24} parent=1 // pred_check_branch
      %463 = sbr.rel (%p461) target = $region65
    $region64: #{_lambda_.24} parent=1 // pred_region
      %v464 = vld [vmem:[#allocation2] sm:$0xff]
      %v465 = vld [vmem:[#allocation2 + $0x8] sm:$0xff]
      %v466 = vld [vmem:[#allocation11] sm:$0x1]
      %v468 = vlaneseq
      %v469 = vshrl.u32 %v468, 7
      %v470 = vsub.s32 0, %v469
      %v471 = vrot.slane %v466, %v470
      %v473 = vadd.f32 %v464, %v471
      %v474 = vadd.f32 %v465, %v471
      %v475 = vld [vmem:[#allocation3] sm:$0xf]
      %v476 = vld [vmem:[#allocation3 + $0x4] sm:$0xf]
      %v477 = vunpack.c.l.bf16 %v475
      %v478 = vunpack.c.l.bf16 %v476
      %v479 = vadd.f32 %v473, %v477
      %v480 = vadd.f32 %v474, %v478
      %481 = vadd.xlane.f32.xlu0 %v479
      %v482 = vpop.xlane.xlu0 %481
      %483 = vadd.xlane.f32.xlu0 %v480
      %v484 = vpop.xlane.xlu0 %483
      %v485 = vrcp.pop 128.0
      %v486 = vmul.f32 %v482, %v485
      %v487 = vmul.f32 %v484, %v485
      %v488 = vsub.f32 %v479, %v486
      %v489 = vsub.f32 %v480, %v487
      %v490 = vmul.f32 %v488, %v488
      %v491 = vmul.f32 %v489, %v489
      %492 = vadd.xlane.f32.xlu0 %v490
      %v493 = vpop.xlane.xlu0 %492
      %494 = vadd.xlane.f32.xlu0 %v491
      %v495 = vpop.xlane.xlu0 %494
      %v496 = vmul.f32 %v493, %v485
      %v497 = vmul.f32 %v495, %v485
      %v498 = vadd.f32 %v496, 1e-05
      %v499 = vadd.f32 %v497, 1e-05
      %v500 = vrsqrt.pop %v498
      %v501 = vrsqrt.pop %v499
      %v502 = vmul.f32 %v488, %v500
      %v503 = vmul.f32 %v489, %v501
      %v504 = vld [vmem:[#allocation12] sm:$0x1]
      %v506 = vlaneseq
      %v507 = vshrl.u32 %v506, 7
      %v508 = vsub.s32 0, %v507
      %v509 = vrot.slane %v504, %v508
      %v511 = vmul.f32 %v502, %v509
      %v512 = vmul.f32 %v503, %v509
      %v513 = vld [vmem:[#allocation14] sm:$0x1]
      %v515 = vlaneseq
      %v516 = vshrl.u32 %v515, 7
      %v517 = vsub.s32 0, %v516
      %v518 = vrot.slane %v513, %v517
      %v520 = vadd.f32 %v511, %v518
      %v521 = vadd.f32 %v512, %v518
      %v522 = vpack.c.bf16 %v521, %v520
      %v524 = vunpack.c.l.b16 %v522
      %v525 = vunpack.c.h.b16 %v522
      %v526 = vpack.c.b16 %v524, %v524
      %v527 = vpack.c.b16 %v525, %v525
      %530 = vst [vmem:[#allocation15] sm:$0xf] %v526
      %531 = vst [vmem:[#allocation15 + $0x4] sm:$0xf] %v527
    $region65: #{_lambda_.24} parent=1 // pred_fallthru
      _
    // Predicated region
    $region66: #{_lambda_.24} parent=1 // pred_check
      _
    $region67: #{_lambda_.24} parent=1 // pred_check_branch
      %533 = sbr.rel (0) target = $region69
    $region68: #{_lambda_.24} parent=1 // pred_region
      %s535 = ssub.s32 128, 128
      %536 = vsyncadd [#allocation5], %s535
      %s537 = sshll.u32 [#allocation15], 4
      %s538 = int_to_ptr.vmem [resolvable:$true] %s537
      %543 = dma.vmem_to_hbm [thread:$0]  %s538, 128, %s7, [#allocation5], 64, 64, 4
    $region69: #{_lambda_.24} parent=1 // pred_fallthru
      _
    // Predicated region
    $region70: #{_lambda_.24} parent=1 // pred_check
      _
    $region71: #{_lambda_.24} parent=1 // pred_check_branch
      %545 = sbr.rel (0) target = $region73
    $region72: #{_lambda_.24} parent=1 // pred_region
      %546 = dma.done [#allocation5], 128
    $region73: #{_lambda_.24} parent=1 // pred_fallthru
      _
    %547 = vsyncpa [#allocation4], 1
    %548 = vsyncpa [#allocation7], 1
    %549 = vsyncpa [#allocation10], 1
    %550 = vsyncpa [#allocation13], 1
    %551 = vsyncpa [#allocation5], 1

</llo_original>
